<compile_context>
chip_gen: v6e
topology: v6e:2x2x1
jax: 0.10.0
libtpu: 0.0.40
codegen_flags: <defaults>
</compile_context>

<pallas_src>
import functools

import jax
import jax.numpy as jnp
from jax import lax
from jax.experimental import pallas as pl
from jax.experimental.pallas import tpu as pltpu

SUBLANE = 8


# -----------------------------------------------------------------------------
# Fused decoder kernel: LSTM recurrence + fc1 + softmax(dim=1, masked pad rows).
#   x_ref   : (T, Bp, I)   embedded inputs (batch padded to Bp)
#   h0/c0   : (Bp, H)      initial LSTM state
#   wih_ref : (I, 4H) bf16 input->gates weights (transposed)
#   whh_ref : (H, 4H) bf16 hidden->gates weights (transposed)
#   bg_ref  : (1, 4H) f32  b_ih + b_hh
#   wfc_ref : (H, V)  f32  fc1 weight (transposed)
#   bfc_ref : (1, V)  f32  fc1 bias
#   out_ref : (T, Bp, V)   softmax(fc1(h_t)) over the batch axis (torch dim=1)
#   gx_sc   : (T, Bp, 4H)  scratch: hoisted x-projection gates
#   ys_sc   : (T, Bp, H)   scratch: per-step hidden outputs
# -----------------------------------------------------------------------------
def _decoder_kernel(x_ref, h0_ref, c0_ref, wih_ref, whh_ref, bg_ref,
                    wfc_ref, bfc_ref, out_ref, gx_sc, ys_sc, *, valid_b):
    T, Bp, I = x_ref.shape
    H = h0_ref.shape[-1]
    V = out_ref.shape[-1]

    # ---- hoisted input projection: one (T*Bp, I) @ (I, 4H) MXU matmul ------
    x_all = x_ref[...].reshape(T * Bp, I).astype(jnp.bfloat16)
    gx = (jnp.dot(x_all, wih_ref[...], preferred_element_type=jnp.float32)
          + bg_ref[...])
    gx_sc[...] = gx.reshape(T, Bp, 4 * H)

    whh = whh_ref[...]  # (H, 4H) bf16, hoisted out of the recurrence

    # ---- serial recurrence: per step only h @ W_hh + elementwise gates -----
    def step(t, carry):
        h, c = carry
        gates = gx_sc[t] + jnp.dot(h.astype(jnp.bfloat16), whh,
                                   preferred_element_type=jnp.float32)
        i_g = jax.nn.sigmoid(gates[:, 0 * H:1 * H])
        f_g = jax.nn.sigmoid(gates[:, 1 * H:2 * H])
        g_g = jnp.tanh(gates[:, 2 * H:3 * H])
        o_g = jax.nn.sigmoid(gates[:, 3 * H:4 * H])
        c_new = f_g * c + i_g * g_g
        h_new = o_g * jnp.tanh(c_new)
        ys_sc[t] = h_new
        return (h_new, c_new)

    lax.fori_loop(0, T, step, (h0_ref[...], c0_ref[...]), unroll=True)

    # ---- fused fc1 (one batched matmul) + softmax over the batch axis ------
    ys = ys_sc[...].reshape(T * Bp, H)
    logits = (jnp.dot(ys, wfc_ref[...], preferred_element_type=jnp.float32)
              + bfc_ref[...]).reshape(T, Bp, V)

    # torch.softmax(..., dim=1) == softmax over the batch axis; mask pad rows.
    batch_ids = jax.lax.broadcasted_iota(jnp.int32, (T, Bp, V), 1)
    valid = batch_ids < valid_b
    masked = jnp.where(valid, logits, jnp.float32(-1e30))
    m = jnp.max(masked, axis=1, keepdims=True)
    e = jnp.where(valid, jnp.exp(masked - m), jnp.float32(0.0))
    out_ref[...] = (e / jnp.sum(e, axis=1, keepdims=True)).astype(out_ref.dtype)


def decoder_pallas(emb, h0, c0, lstm_p, fc_w, fc_b):
    """emb: (T, B, I) f32, h0/c0: (B, H) f32. Returns softmax(fc1(lstm(emb)))."""
    T, B, I = emb.shape
    H = lstm_p["w_hh"].shape[1]          # w_hh: (4H, H)
    V = fc_w.shape[0]                    # fc_w: (V, H)
    Bp = ((B + SUBLANE - 1) // SUBLANE) * SUBLANE   # pad batch to 8 sublanes

    emb_p = jnp.pad(emb, ((0, 0), (0, Bp - B), (0, 0)))
    h0_p = jnp.pad(h0, ((0, Bp - B), (0, 0)))
    c0_p = jnp.pad(c0, ((0, Bp - B), (0, 0)))

    # Pre-transpose weights for row-major (rows, in) @ (in, out) MXU matmuls.
    # bf16 matmul operands (f32 accumulate) per the perf review.
    w_ih_t = jnp.asarray(lstm_p["w_ih"].T, jnp.bfloat16)           # (I, 4H)
    w_hh_t = jnp.asarray(lstm_p["w_hh"].T, jnp.bfloat16)           # (H, 4H)
    b_g = jnp.asarray((lstm_p["b_ih"] + lstm_p["b_hh"]).reshape(1, 4 * H),
                      jnp.float32)
    w_fc_t = jnp.asarray(fc_w.T, jnp.float32)                      # (H, V)
    b_fc = jnp.asarray(fc_b.reshape(1, V), jnp.float32)

    kernel = functools.partial(_decoder_kernel, valid_b=B)
    out_p = pl.pallas_call(
        kernel,
        out_shape=jax.ShapeDtypeStruct((T, Bp, V), jnp.float32),
        grid_spec=pltpu.PrefetchScalarGridSpec(
            num_scalar_prefetch=0,
            grid=(1,),
            in_specs=[
                pl.BlockSpec((T, Bp, I), lambda i: (0, 0, 0)),
                pl.BlockSpec((Bp, H), lambda i: (0, 0)),
                pl.BlockSpec((Bp, H), lambda i: (0, 0)),
                pl.BlockSpec((I, 4 * H), lambda i: (0, 0)),
                pl.BlockSpec((H, 4 * H), lambda i: (0, 0)),
                pl.BlockSpec((1, 4 * H), lambda i: (0, 0)),
                pl.BlockSpec((H, V), lambda i: (0, 0)),
                pl.BlockSpec((1, V), lambda i: (0, 0)),
            ],
            out_specs=pl.BlockSpec((T, Bp, V), lambda i: (0, 0, 0)),
            scratch_shapes=[
                pltpu.VMEM((T, Bp, 4 * H), jnp.float32),   # hoisted x-projection
                pltpu.VMEM((T, Bp, H), jnp.float32),       # per-step hidden outputs
            ],
        ),
        compiler_params=pltpu.CompilerParams(
            dimension_semantics=("arbitrary",)),
    )(emb_p, h0_p, c0_p, w_ih_t, w_hh_t, b_g, w_fc_t, b_fc)

    return out_p[:, :B, :]   # drop batch padding


# -----------------------------------------------------------------------------
# Parameter construction (deterministic, PyTorch-style init).
# -----------------------------------------------------------------------------
def init_decoder_params(key, vocab_len_de, embed_dim=256, hidden=256):
    k_emb, k1, k2, k3, k4, k5, k6 = jax.random.split(key, 7)
    bound = 1.0 / jnp.sqrt(hidden)
    return dict(
        embedding=jax.random.normal(k_emb, (vocab_len_de, embed_dim), jnp.float32),
        lstm=dict(
            w_ih=jax.random.uniform(k1, (4 * hidden, embed_dim), jnp.float32, -bound, bound),
            w_hh=jax.random.uniform(k2, (4 * hidden, hidden), jnp.float32, -bound, bound),
            b_ih=jax.random.uniform(k3, (4 * hidden,), jnp.float32, -bound, bound),
            b_hh=jax.random.uniform(k4, (4 * hidden,), jnp.float32, -bound, bound),
        ),
        fc_w=jax.random.uniform(k5, (vocab_len_de, hidden), jnp.float32, -bound, bound),
        fc_b=jax.random.uniform(k6, (vocab_len_de,), jnp.float32, -bound, bound),
    )


def decoder_forward(params, x_idx, state):
    """x_idx: (T, B) int32 tokens; state: (h, c) each (2, B, 256) from the encoder."""
    H = params["lstm"]["w_hh"].shape[1]
    # TODO(synk): embedding lookup (data-dependent row gather) kept as plain-JAX glue.
    emb = jnp.take(params["embedding"], x_idx, axis=0)        # (T, B, 256)
    # state[k].view(2, 1, -1, 256)[1]  ->  layer-1 state, shape (1, B, 256) -> (B, 256)
    h0 = state[0].reshape(2, 1, -1, H)[1, 0]
    c0 = state[1].reshape(2, 1, -1, H)[1, 0]
    return decoder_pallas(emb, h0, c0, params["lstm"], params["fc_w"], params["fc_b"])


# -----------------------------------------------------------------------------
# Pure-JAX f32 reference (same math as the PyTorch module) for a sanity check.
# -----------------------------------------------------------------------------
def _ref_forward(params, x_idx, state):
    H = params["lstm"]["w_hh"].shape[1]
    emb = jnp.take(params["embedding"], x_idx, axis=0)
    h = state[0].reshape(2, 1, -1, H)[1, 0]
    c = state[1].reshape(2, 1, -1, H)[1, 0]
    lp = params["lstm"]

    def step(carry, x_t):
        h, c = carry
        g = x_t @ lp["w_ih"].T + h @ lp["w_hh"].T + lp["b_ih"] + lp["b_hh"]
        i = jax.nn.sigmoid(g[:, 0 * H:1 * H])
        f = jax.nn.sigmoid(g[:, 1 * H:2 * H])
        gg = jnp.tanh(g[:, 2 * H:3 * H])
        o = jax.nn.sigmoid(g[:, 3 * H:4 * H])
        c = f * c + i * gg
        h = o * jnp.tanh(c)
        return (h, c), h

    _, ys = jax.lax.scan(step, (h, c), emb)                    # (T, B, H)
    logits = ys @ params["fc_w"].T + params["fc_b"]            # (T, B, V)
    return jax.nn.softmax(logits, axis=1)                      # torch dim=1 (batch)


if __name__ == "__main__":
    VOCAB_DE = 128          # lane-aligned vocab for the demo
    T, B, H = 8, 2, 256

    key = jax.random.PRNGKey(0)
    k_par, k_idx, k_h, k_c = jax.random.split(key, 4)

    params = init_decoder_params(k_par, VOCAB_DE)
    x_idx = jax.random.randint(k_idx, (T, B), 0, VOCAB_DE, dtype=jnp.int32)
    # Encoder-style final state: (h_n, c_n) each (num_layers=2, B, 256).
    enc_h = jnp.tanh(jax.random.normal(k_h, (2, B, H), jnp.float32))
    enc_c = jax.random.normal(k_c, (2, B, H), jnp.float32) * 0.5
    state = (enc_h, enc_c)

    out = jax.jit(decoder_forward)(params, x_idx, state)
    out = jax.block_until_ready(out)
    assert out.shape == (T, B, VOCAB_DE)

    # Numerical sanity check against the pure-JAX f32 reference
    # (kernel uses bf16 matmul operands with f32 accumulation -> 1e-2 tolerance).
    ref = _ref_forward(params, x_idx, state)
    assert jnp.allclose(out, ref, atol=1e-2, rtol=1e-2), float(jnp.max(jnp.abs(out - ref)))
    # softmax over dim=1 (batch axis, as written in the PyTorch module) sums to 1
    assert jnp.allclose(out.sum(axis=1), 1.0, atol=1e-3)

    print("KERNEL_OK")
</pallas_src>

<mosaic_0001>
module attributes {stable_mosaic.version = 11 : i64} {
  func.func @_decoder_kernel(%arg0: i32, %arg1: memref<8x8x256xf32, #tpu.memory_space<vmem>>, %arg2: memref<8x256xf32, #tpu.memory_space<vmem>>, %arg3: memref<8x256xf32, #tpu.memory_space<vmem>>, %arg4: memref<256x1024xbf16, #tpu.memory_space<vmem>>, %arg5: memref<256x1024xbf16, #tpu.memory_space<vmem>>, %arg6: memref<1x1024xf32, #tpu.memory_space<vmem>>, %arg7: memref<256x128xf32, #tpu.memory_space<vmem>>, %arg8: memref<1x128xf32, #tpu.memory_space<vmem>>, %arg9: memref<8x8x128xf32, #tpu.memory_space<vmem>>, %arg10: memref<8x8x1024xf32, #tpu.memory_space<vmem>>, %arg11: memref<8x8x256xf32, #tpu.memory_space<vmem>>) attributes {dimension_semantics = [#tpu.dimension_semantics<arbitrary>], iteration_bounds = array<i64: 1>, scalar_prefetch = 0 : i64, scratch_operands = 2 : i64, tpu.core_type = #tpu.core_type<tc>, window_params = [{pipeline_mode = #tpu.pipeline_mode<synchronous>, transform_indices = @transform_0, window_bounds = array<i64: 8, 8, 256>}, {pipeline_mode = #tpu.pipeline_mode<synchronous>, transform_indices = @transform_1, window_bounds = array<i64: 8, 256>}, {pipeline_mode = #tpu.pipeline_mode<synchronous>, transform_indices = @transform_2, window_bounds = array<i64: 8, 256>}, {pipeline_mode = #tpu.pipeline_mode<synchronous>, transform_indices = @transform_3, window_bounds = array<i64: 256, 1024>}, {pipeline_mode = #tpu.pipeline_mode<synchronous>, transform_indices = @transform_4, window_bounds = array<i64: 256, 1024>}, {pipeline_mode = #tpu.pipeline_mode<synchronous>, transform_indices = @transform_5, window_bounds = array<i64: 1, 1024>}, {pipeline_mode = #tpu.pipeline_mode<synchronous>, transform_indices = @transform_6, window_bounds = array<i64: 256, 128>}, {pipeline_mode = #tpu.pipeline_mode<synchronous>, transform_indices = @transform_7, window_bounds = array<i64: 1, 128>}, {pipeline_mode = #tpu.pipeline_mode<synchronous>, transform_indices = @transform_8, window_bounds = array<i64: 8, 8, 128>}]} {
    %c0 = arith.constant 0 : index
    %c0_0 = arith.constant 0 : index
    %c0_1 = arith.constant 0 : index
    %0 = vector.load %arg1[%c0, %c0_0, %c0_1] : memref<8x8x256xf32, #tpu.memory_space<vmem>>, vector<8x8x256xf32>
    %1 = vector.shape_cast %0 : vector<8x8x256xf32> to vector<64x256xf32>
    %2 = arith.truncf %1 : vector<64x256xf32> to vector<64x256xbf16>
    %c0_2 = arith.constant 0 : index
    %c0_3 = arith.constant 0 : index
    %3 = vector.load %arg4[%c0_2, %c0_3] : memref<256x1024xbf16, #tpu.memory_space<vmem>>, vector<256x1024xbf16>
    %cst = arith.constant dense<0.000000e+00> : vector<64x1024xf32>
    %4 = tpu.matmul %2, %3, %cst {dimension_numbers = #tpu.dot_dimension_numbers<[1], [0], [0], [1], [0, 0, 1, 1], [], []>} : vector<64x256xbf16>, vector<256x1024xbf16>, vector<64x1024xf32> -> vector<64x1024xf32>
    %c0_4 = arith.constant 0 : index
    %c0_5 = arith.constant 0 : index
    %5 = vector.load %arg6[%c0_4, %c0_5] : memref<1x1024xf32, #tpu.memory_space<vmem>>, vector<1x1024xf32>
    %6 = vector.broadcast %5 : vector<1x1024xf32> to vector<64x1024xf32>
    %7 = arith.addf %4, %6 : vector<64x1024xf32>
    %8 = vector.shape_cast %7 : vector<64x1024xf32> to vector<8x8x1024xf32>
    %c0_6 = arith.constant 0 : index
    %c0_7 = arith.constant 0 : index
    %c0_8 = arith.constant 0 : index
    %9 = vector.load %arg10[%c0_6, %c0_7, %c0_8] : memref<8x8x1024xf32, #tpu.memory_space<vmem>>, vector<8x8x1024xf32>
    tpu.vector_store %arg10[%c0_6, %c0_7, %c0_8], %8 {strides = array<i32>} : memref<8x8x1024xf32, #tpu.memory_space<vmem>>, vector<8x8x1024xf32>,
    %c0_9 = arith.constant 0 : index
    %c0_10 = arith.constant 0 : index
    %10 = vector.load %arg5[%c0_9, %c0_10] : memref<256x1024xbf16, #tpu.memory_space<vmem>>, vector<256x1024xbf16>
    %c0_11 = arith.constant 0 : index
    %c0_12 = arith.constant 0 : index
    %11 = vector.load %arg2[%c0_11, %c0_12] : memref<8x256xf32, #tpu.memory_space<vmem>>, vector<8x256xf32>
    %c0_13 = arith.constant 0 : index
    %c0_14 = arith.constant 0 : index
    %12 = vector.load %arg3[%c0_13, %c0_14] : memref<8x256xf32, #tpu.memory_space<vmem>>, vector<8x256xf32>
    %c0_i32 = arith.constant 0 : i32
    %13 = arith.index_cast %c0_i32 : i32 to index
    %c0_15 = arith.constant 0 : index
    %c0_16 = arith.constant 0 : index
    %14 = vector.load %arg10[%13, %c0_15, %c0_16] : memref<8x8x1024xf32, #tpu.memory_space<vmem>>, vector<1x8x1024xf32>
    %15 = vector.shape_cast %14 : vector<1x8x1024xf32> to vector<8x1024xf32>
    %16 = arith.truncf %11 : vector<8x256xf32> to vector<8x256xbf16>
    %cst_17 = arith.constant dense<0.000000e+00> : vector<8x1024xf32>
    %17 = tpu.matmul %16, %10, %cst_17 {dimension_numbers = #tpu.dot_dimension_numbers<[1], [0], [0], [1], [0, 0, 1, 1], [], []>} : vector<8x256xbf16>, vector<256x1024xbf16>, vector<8x1024xf32> -> vector<8x1024xf32>
    %18 = arith.addf %15, %17 : vector<8x1024xf32>
    %19 = vector.extract_strided_slice %18 {offsets = [0, 0], sizes = [8, 256], strides = [1, 1]} : vector<8x1024xf32> to vector<8x256xf32>
    %20 = arith.negf %19 : vector<8x256xf32>
    %21 = math.exp %20 : vector<8x256xf32>
    %cst_18 = arith.constant 1.000000e+00 : f32
    %22 = vector.broadcast %cst_18 : f32 to vector<8x256xf32>
    %23 = arith.addf %22, %21 : vector<8x256xf32>
    %24 = arith.divf %22, %23 : vector<8x256xf32>
    %25 = vector.extract_strided_slice %18 {offsets = [0, 256], sizes = [8, 256], strides = [1, 1]} : vector<8x1024xf32> to vector<8x256xf32>
    %26 = arith.negf %25 : vector<8x256xf32>
    %27 = math.exp %26 : vector<8x256xf32>
    %cst_19 = arith.constant 1.000000e+00 : f32
    %28 = vector.broadcast %cst_19 : f32 to vector<8x256xf32>
    %29 = arith.addf %28, %27 : vector<8x256xf32>
    %30 = arith.divf %28, %29 : vector<8x256xf32>
    %31 = vector.extract_strided_slice %18 {offsets = [0, 512], sizes = [8, 256], strides = [1, 1]} : vector<8x1024xf32> to vector<8x256xf32>
    %32 = math.tanh %31 : vector<8x256xf32>
    %33 = vector.extract_strided_slice %18 {offsets = [0, 768], sizes = [8, 256], strides = [1, 1]} : vector<8x1024xf32> to vector<8x256xf32>
    %34 = arith.negf %33 : vector<8x256xf32>
    %35 = math.exp %34 : vector<8x256xf32>
    %cst_20 = arith.constant 1.000000e+00 : f32
    %36 = vector.broadcast %cst_20 : f32 to vector<8x256xf32>
    %37 = arith.addf %36, %35 : vector<8x256xf32>
    %38 = arith.divf %36, %37 : vector<8x256xf32>
    %39 = arith.mulf %30, %12 : vector<8x256xf32>
    %40 = arith.mulf %24, %32 : vector<8x256xf32>
    %41 = arith.addf %39, %40 : vector<8x256xf32>
    %42 = math.tanh %41 : vector<8x256xf32>
    %43 = arith.mulf %38, %42 : vector<8x256xf32>
    %44 = arith.index_cast %c0_i32 : i32 to index
    %c0_21 = arith.constant 0 : index
    %c0_22 = arith.constant 0 : index
    %45 = vector.load %arg11[%44, %c0_21, %c0_22] : memref<8x8x256xf32, #tpu.memory_space<vmem>>, vector<1x8x256xf32>
    %46 = vector.shape_cast %45 : vector<1x8x256xf32> to vector<8x256xf32>
    %47 = vector.shape_cast %43 : vector<8x256xf32> to vector<1x8x256xf32>
    tpu.vector_store %arg11[%44, %c0_21, %c0_22], %47 {strides = array<i32>} : memref<8x8x256xf32, #tpu.memory_space<vmem>>, vector<1x8x256xf32>,
    %c1_i32 = arith.constant 1 : i32
    %48 = arith.index_cast %c1_i32 : i32 to index
    %c0_23 = arith.constant 0 : index
    %c0_24 = arith.constant 0 : index
    %49 = vector.load %arg10[%48, %c0_23, %c0_24] : memref<8x8x1024xf32, #tpu.memory_space<vmem>>, vector<1x8x1024xf32>
    %50 = vector.shape_cast %49 : vector<1x8x1024xf32> to vector<8x1024xf32>
    %51 = arith.truncf %43 : vector<8x256xf32> to vector<8x256xbf16>
    %cst_25 = arith.constant dense<0.000000e+00> : vector<8x1024xf32>
    %52 = tpu.matmul %51, %10, %cst_25 {dimension_numbers = #tpu.dot_dimension_numbers<[1], [0], [0], [1], [0, 0, 1, 1], [], []>} : vector<8x256xbf16>, vector<256x1024xbf16>, vector<8x1024xf32> -> vector<8x1024xf32>
    %53 = arith.addf %50, %52 : vector<8x1024xf32>
    %54 = vector.extract_strided_slice %53 {offsets = [0, 0], sizes = [8, 256], strides = [1, 1]} : vector<8x1024xf32> to vector<8x256xf32>
    %55 = arith.negf %54 : vector<8x256xf32>
    %56 = math.exp %55 : vector<8x256xf32>
    %cst_26 = arith.constant 1.000000e+00 : f32
    %57 = vector.broadcast %cst_26 : f32 to vector<8x256xf32>
    %58 = arith.addf %57, %56 : vector<8x256xf32>
    %59 = arith.divf %57, %58 : vector<8x256xf32>
    %60 = vector.extract_strided_slice %53 {offsets = [0, 256], sizes = [8, 256], strides = [1, 1]} : vector<8x1024xf32> to vector<8x256xf32>
    %61 = arith.negf %60 : vector<8x256xf32>
    %62 = math.exp %61 : vector<8x256xf32>
    %cst_27 = arith.constant 1.000000e+00 : f32
    %63 = vector.broadcast %cst_27 : f32 to vector<8x256xf32>
    %64 = arith.addf %63, %62 : vector<8x256xf32>
    %65 = arith.divf %63, %64 : vector<8x256xf32>
    %66 = vector.extract_strided_slice %53 {offsets = [0, 512], sizes = [8, 256], strides = [1, 1]} : vector<8x1024xf32> to vector<8x256xf32>
    %67 = math.tanh %66 : vector<8x256xf32>
    %68 = vector.extract_strided_slice %53 {offsets = [0, 768], sizes = [8, 256], strides = [1, 1]} : vector<8x1024xf32> to vector<8x256xf32>
    %69 = arith.negf %68 : vector<8x256xf32>
    %70 = math.exp %69 : vector<8x256xf32>
    %cst_28 = arith.constant 1.000000e+00 : f32
    %71 = vector.broadcast %cst_28 : f32 to vector<8x256xf32>
    %72 = arith.addf %71, %70 : vector<8x256xf32>
    %73 = arith.divf %71, %72 : vector<8x256xf32>
    %74 = arith.mulf %65, %41 : vector<8x256xf32>
    %75 = arith.mulf %59, %67 : vector<8x256xf32>
    %76 = arith.addf %74, %75 : vector<8x256xf32>
    %77 = math.tanh %76 : vector<8x256xf32>
    %78 = arith.mulf %73, %77 : vector<8x256xf32>
    %79 = arith.index_cast %c1_i32 : i32 to index
    %c0_29 = arith.constant 0 : index
    %c0_30 = arith.constant 0 : index
    %80 = vector.load %arg11[%79, %c0_29, %c0_30] : memref<8x8x256xf32, #tpu.memory_space<vmem>>, vector<1x8x256xf32>
    %81 = vector.shape_cast %80 : vector<1x8x256xf32> to vector<8x256xf32>
    %82 = vector.shape_cast %78 : vector<8x256xf32> to vector<1x8x256xf32>
    tpu.vector_store %arg11[%79, %c0_29, %c0_30], %82 {strides = array<i32>} : memref<8x8x256xf32, #tpu.memory_space<vmem>>, vector<1x8x256xf32>,
    %c2_i32 = arith.constant 2 : i32
    %83 = arith.index_cast %c2_i32 : i32 to index
    %c0_31 = arith.constant 0 : index
    %c0_32 = arith.constant 0 : index
    %84 = vector.load %arg10[%83, %c0_31, %c0_32] : memref<8x8x1024xf32, #tpu.memory_space<vmem>>, vector<1x8x1024xf32>
    %85 = vector.shape_cast %84 : vector<1x8x1024xf32> to vector<8x1024xf32>
    %86 = arith.truncf %78 : vector<8x256xf32> to vector<8x256xbf16>
    %cst_33 = arith.constant dense<0.000000e+00> : vector<8x1024xf32>
    %87 = tpu.matmul %86, %10, %cst_33 {dimension_numbers = #tpu.dot_dimension_numbers<[1], [0], [0], [1], [0, 0, 1, 1], [], []>} : vector<8x256xbf16>, vector<256x1024xbf16>, vector<8x1024xf32> -> vector<8x1024xf32>
    %88 = arith.addf %85, %87 : vector<8x1024xf32>
    %89 = vector.extract_strided_slice %88 {offsets = [0, 0], sizes = [8, 256], strides = [1, 1]} : vector<8x1024xf32> to vector<8x256xf32>
    %90 = arith.negf %89 : vector<8x256xf32>
    %91 = math.exp %90 : vector<8x256xf32>
    %cst_34 = arith.constant 1.000000e+00 : f32
    %92 = vector.broadcast %cst_34 : f32 to vector<8x256xf32>
    %93 = arith.addf %92, %91 : vector<8x256xf32>
    %94 = arith.divf %92, %93 : vector<8x256xf32>
    %95 = vector.extract_strided_slice %88 {offsets = [0, 256], sizes = [8, 256], strides = [1, 1]} : vector<8x1024xf32> to vector<8x256xf32>
    %96 = arith.negf %95 : vector<8x256xf32>
    %97 = math.exp %96 : vector<8x256xf32>
    %cst_35 = arith.constant 1.000000e+00 : f32
    %98 = vector.broadcast %cst_35 : f32 to vector<8x256xf32>
    %99 = arith.addf %98, %97 : vector<8x256xf32>
    %100 = arith.divf %98, %99 : vector<8x256xf32>
    %101 = vector.extract_strided_slice %88 {offsets = [0, 512], sizes = [8, 256], strides = [1, 1]} : vector<8x1024xf32> to vector<8x256xf32>
    %102 = math.tanh %101 : vector<8x256xf32>
    %103 = vector.extract_strided_slice %88 {offsets = [0, 768], sizes = [8, 256], strides = [1, 1]} : vector<8x1024xf32> to vector<8x256xf32>
    %104 = arith.negf %103 : vector<8x256xf32>
    %105 = math.exp %104 : vector<8x256xf32>
    %cst_36 = arith.constant 1.000000e+00 : f32
    %106 = vector.broadcast %cst_36 : f32 to vector<8x256xf32>
    %107 = arith.addf %106, %105 : vector<8x256xf32>
    %108 = arith.divf %106, %107 : vector<8x256xf32>
    %109 = arith.mulf %100, %76 : vector<8x256xf32>
    %110 = arith.mulf %94, %102 : vector<8x256xf32>
    %111 = arith.addf %109, %110 : vector<8x256xf32>
    %112 = math.tanh %111 : vector<8x256xf32>
    %113 = arith.mulf %108, %112 : vector<8x256xf32>
    %114 = arith.index_cast %c2_i32 : i32 to index
    %c0_37 = arith.constant 0 : index
    %c0_38 = arith.constant 0 : index
    %115 = vector.load %arg11[%114, %c0_37, %c0_38] : memref<8x8x256xf32, #tpu.memory_space<vmem>>, vector<1x8x256xf32>
    %116 = vector.shape_cast %115 : vector<1x8x256xf32> to vector<8x256xf32>
    %117 = vector.shape_cast %113 : vector<8x256xf32> to vector<1x8x256xf32>
    tpu.vector_store %arg11[%114, %c0_37, %c0_38], %117 {strides = array<i32>} : memref<8x8x256xf32, #tpu.memory_space<vmem>>, vector<1x8x256xf32>,
    %c3_i32 = arith.constant 3 : i32
    %118 = arith.index_cast %c3_i32 : i32 to index
    %c0_39 = arith.constant 0 : index
    %c0_40 = arith.constant 0 : index
    %119 = vector.load %arg10[%118, %c0_39, %c0_40] : memref<8x8x1024xf32, #tpu.memory_space<vmem>>, vector<1x8x1024xf32>
    %120 = vector.shape_cast %119 : vector<1x8x1024xf32> to vector<8x1024xf32>
    %121 = arith.truncf %113 : vector<8x256xf32> to vector<8x256xbf16>
    %cst_41 = arith.constant dense<0.000000e+00> : vector<8x1024xf32>
    %122 = tpu.matmul %121, %10, %cst_41 {dimension_numbers = #tpu.dot_dimension_numbers<[1], [0], [0], [1], [0, 0, 1, 1], [], []>} : vector<8x256xbf16>, vector<256x1024xbf16>, vector<8x1024xf32> -> vector<8x1024xf32>
    %123 = arith.addf %120, %122 : vector<8x1024xf32>
    %124 = vector.extract_strided_slice %123 {offsets = [0, 0], sizes = [8, 256], strides = [1, 1]} : vector<8x1024xf32> to vector<8x256xf32>
    %125 = arith.negf %124 : vector<8x256xf32>
    %126 = math.exp %125 : vector<8x256xf32>
    %cst_42 = arith.constant 1.000000e+00 : f32
    %127 = vector.broadcast %cst_42 : f32 to vector<8x256xf32>
    %128 = arith.addf %127, %126 : vector<8x256xf32>
    %129 = arith.divf %127, %128 : vector<8x256xf32>
    %130 = vector.extract_strided_slice %123 {offsets = [0, 256], sizes = [8, 256], strides = [1, 1]} : vector<8x1024xf32> to vector<8x256xf32>
    %131 = arith.negf %130 : vector<8x256xf32>
    %132 = math.exp %131 : vector<8x256xf32>
    %cst_43 = arith.constant 1.000000e+00 : f32
    %133 = vector.broadcast %cst_43 : f32 to vector<8x256xf32>
    %134 = arith.addf %133, %132 : vector<8x256xf32>
    %135 = arith.divf %133, %134 : vector<8x256xf32>
    %136 = vector.extract_strided_slice %123 {offsets = [0, 512], sizes = [8, 256], strides = [1, 1]} : vector<8x1024xf32> to vector<8x256xf32>
    %137 = math.tanh %136 : vector<8x256xf32>
    %138 = vector.extract_strided_slice %123 {offsets = [0, 768], sizes = [8, 256], strides = [1, 1]} : vector<8x1024xf32> to vector<8x256xf32>
    %139 = arith.negf %138 : vector<8x256xf32>
    %140 = math.exp %139 : vector<8x256xf32>
    %cst_44 = arith.constant 1.000000e+00 : f32
    %141 = vector.broadcast %cst_44 : f32 to vector<8x256xf32>
    %142 = arith.addf %141, %140 : vector<8x256xf32>
    %143 = arith.divf %141, %142 : vector<8x256xf32>
    %144 = arith.mulf %135, %111 : vector<8x256xf32>
    %145 = arith.mulf %129, %137 : vector<8x256xf32>
    %146 = arith.addf %144, %145 : vector<8x256xf32>
    %147 = math.tanh %146 : vector<8x256xf32>
    %148 = arith.mulf %143, %147 : vector<8x256xf32>
    %149 = arith.index_cast %c3_i32 : i32 to index
    %c0_45 = arith.constant 0 : index
    %c0_46 = arith.constant 0 : index
    %150 = vector.load %arg11[%149, %c0_45, %c0_46] : memref<8x8x256xf32, #tpu.memory_space<vmem>>, vector<1x8x256xf32>
    %151 = vector.shape_cast %150 : vector<1x8x256xf32> to vector<8x256xf32>
    %152 = vector.shape_cast %148 : vector<8x256xf32> to vector<1x8x256xf32>
    tpu.vector_store %arg11[%149, %c0_45, %c0_46], %152 {strides = array<i32>} : memref<8x8x256xf32, #tpu.memory_space<vmem>>, vector<1x8x256xf32>,
    %c4_i32 = arith.constant 4 : i32
    %153 = arith.index_cast %c4_i32 : i32 to index
    %c0_47 = arith.constant 0 : index
    %c0_48 = arith.constant 0 : index
    %154 = vector.load %arg10[%153, %c0_47, %c0_48] : memref<8x8x1024xf32, #tpu.memory_space<vmem>>, vector<1x8x1024xf32>
    %155 = vector.shape_cast %154 : vector<1x8x1024xf32> to vector<8x1024xf32>
    %156 = arith.truncf %148 : vector<8x256xf32> to vector<8x256xbf16>
    %cst_49 = arith.constant dense<0.000000e+00> : vector<8x1024xf32>
    %157 = tpu.matmul %156, %10, %cst_49 {dimension_numbers = #tpu.dot_dimension_numbers<[1], [0], [0], [1], [0, 0, 1, 1], [], []>} : vector<8x256xbf16>, vector<256x1024xbf16>, vector<8x1024xf32> -> vector<8x1024xf32>
    %158 = arith.addf %155, %157 : vector<8x1024xf32>
    %159 = vector.extract_strided_slice %158 {offsets = [0, 0], sizes = [8, 256], strides = [1, 1]} : vector<8x1024xf32> to vector<8x256xf32>
    %160 = arith.negf %159 : vector<8x256xf32>
    %161 = math.exp %160 : vector<8x256xf32>
    %cst_50 = arith.constant 1.000000e+00 : f32
    %162 = vector.broadcast %cst_50 : f32 to vector<8x256xf32>
    %163 = arith.addf %162, %161 : vector<8x256xf32>
    %164 = arith.divf %162, %163 : vector<8x256xf32>
    %165 = vector.extract_strided_slice %158 {offsets = [0, 256], sizes = [8, 256], strides = [1, 1]} : vector<8x1024xf32> to vector<8x256xf32>
    %166 = arith.negf %165 : vector<8x256xf32>
    %167 = math.exp %166 : vector<8x256xf32>
    %cst_51 = arith.constant 1.000000e+00 : f32
    %168 = vector.broadcast %cst_51 : f32 to vector<8x256xf32>
    %169 = arith.addf %168, %167 : vector<8x256xf32>
    %170 = arith.divf %168, %169 : vector<8x256xf32>
    %171 = vector.extract_strided_slice %158 {offsets = [0, 512], sizes = [8, 256], strides = [1, 1]} : vector<8x1024xf32> to vector<8x256xf32>
    %172 = math.tanh %171 : vector<8x256xf32>
    %173 = vector.extract_strided_slice %158 {offsets = [0, 768], sizes = [8, 256], strides = [1, 1]} : vector<8x1024xf32> to vector<8x256xf32>
    %174 = arith.negf %173 : vector<8x256xf32>
    %175 = math.exp %174 : vector<8x256xf32>
    %cst_52 = arith.constant 1.000000e+00 : f32
    %176 = vector.broadcast %cst_52 : f32 to vector<8x256xf32>
    %177 = arith.addf %176, %175 : vector<8x256xf32>
    %178 = arith.divf %176, %177 : vector<8x256xf32>
    %179 = arith.mulf %170, %146 : vector<8x256xf32>
    %180 = arith.mulf %164, %172 : vector<8x256xf32>
    %181 = arith.addf %179, %180 : vector<8x256xf32>
    %182 = math.tanh %181 : vector<8x256xf32>
    %183 = arith.mulf %178, %182 : vector<8x256xf32>
    %184 = arith.index_cast %c4_i32 : i32 to index
    %c0_53 = arith.constant 0 : index
    %c0_54 = arith.constant 0 : index
    %185 = vector.load %arg11[%184, %c0_53, %c0_54] : memref<8x8x256xf32, #tpu.memory_space<vmem>>, vector<1x8x256xf32>
    %186 = vector.shape_cast %185 : vector<1x8x256xf32> to vector<8x256xf32>
    %187 = vector.shape_cast %183 : vector<8x256xf32> to vector<1x8x256xf32>
    tpu.vector_store %arg11[%184, %c0_53, %c0_54], %187 {strides = array<i32>} : memref<8x8x256xf32, #tpu.memory_space<vmem>>, vector<1x8x256xf32>,
    %c5_i32 = arith.constant 5 : i32
    %188 = arith.index_cast %c5_i32 : i32 to index
    %c0_55 = arith.constant 0 : index
    %c0_56 = arith.constant 0 : index
    %189 = vector.load %arg10[%188, %c0_55, %c0_56] : memref<8x8x1024xf32, #tpu.memory_space<vmem>>, vector<1x8x1024xf32>
    %190 = vector.shape_cast %189 : vector<1x8x1024xf32> to vector<8x1024xf32>
    %191 = arith.truncf %183 : vector<8x256xf32> to vector<8x256xbf16>
    %cst_57 = arith.constant dense<0.000000e+00> : vector<8x1024xf32>
    %192 = tpu.matmul %191, %10, %cst_57 {dimension_numbers = #tpu.dot_dimension_numbers<[1], [0], [0], [1], [0, 0, 1, 1], [], []>} : vector<8x256xbf16>, vector<256x1024xbf16>, vector<8x1024xf32> -> vector<8x1024xf32>
    %193 = arith.addf %190, %192 : vector<8x1024xf32>
    %194 = vector.extract_strided_slice %193 {offsets = [0, 0], sizes = [8, 256], strides = [1, 1]} : vector<8x1024xf32> to vector<8x256xf32>
    %195 = arith.negf %194 : vector<8x256xf32>
    %196 = math.exp %195 : vector<8x256xf32>
    %cst_58 = arith.constant 1.000000e+00 : f32
    %197 = vector.broadcast %cst_58 : f32 to vector<8x256xf32>
    %198 = arith.addf %197, %196 : vector<8x256xf32>
    %199 = arith.divf %197, %198 : vector<8x256xf32>
    %200 = vector.extract_strided_slice %193 {offsets = [0, 256], sizes = [8, 256], strides = [1, 1]} : vector<8x1024xf32> to vector<8x256xf32>
    %201 = arith.negf %200 : vector<8x256xf32>
    %202 = math.exp %201 : vector<8x256xf32>
    %cst_59 = arith.constant 1.000000e+00 : f32
    %203 = vector.broadcast %cst_59 : f32 to vector<8x256xf32>
    %204 = arith.addf %203, %202 : vector<8x256xf32>
    %205 = arith.divf %203, %204 : vector<8x256xf32>
    %206 = vector.extract_strided_slice %193 {offsets = [0, 512], sizes = [8, 256], strides = [1, 1]} : vector<8x1024xf32> to vector<8x256xf32>
    %207 = math.tanh %206 : vector<8x256xf32>
    %208 = vector.extract_strided_slice %193 {offsets = [0, 768], sizes = [8, 256], strides = [1, 1]} : vector<8x1024xf32> to vector<8x256xf32>
    %209 = arith.negf %208 : vector<8x256xf32>
    %210 = math.exp %209 : vector<8x256xf32>
    %cst_60 = arith.constant 1.000000e+00 : f32
    %211 = vector.broadcast %cst_60 : f32 to vector<8x256xf32>
    %212 = arith.addf %211, %210 : vector<8x256xf32>
    %213 = arith.divf %211, %212 : vector<8x256xf32>
    %214 = arith.mulf %205, %181 : vector<8x256xf32>
    %215 = arith.mulf %199, %207 : vector<8x256xf32>
    %216 = arith.addf %214, %215 : vector<8x256xf32>
    %217 = math.tanh %216 : vector<8x256xf32>
    %218 = arith.mulf %213, %217 : vector<8x256xf32>
    %219 = arith.index_cast %c5_i32 : i32 to index
    %c0_61 = arith.constant 0 : index
    %c0_62 = arith.constant 0 : index
    %220 = vector.load %arg11[%219, %c0_61, %c0_62] : memref<8x8x256xf32, #tpu.memory_space<vmem>>, vector<1x8x256xf32>
    %221 = vector.shape_cast %220 : vector<1x8x256xf32> to vector<8x256xf32>
    %222 = vector.shape_cast %218 : vector<8x256xf32> to vector<1x8x256xf32>
    tpu.vector_store %arg11[%219, %c0_61, %c0_62], %222 {strides = array<i32>} : memref<8x8x256xf32, #tpu.memory_space<vmem>>, vector<1x8x256xf32>,
    %c6_i32 = arith.constant 6 : i32
    %223 = arith.index_cast %c6_i32 : i32 to index
    %c0_63 = arith.constant 0 : index
    %c0_64 = arith.constant 0 : index
    %224 = vector.load %arg10[%223, %c0_63, %c0_64] : memref<8x8x1024xf32, #tpu.memory_space<vmem>>, vector<1x8x1024xf32>
    %225 = vector.shape_cast %224 : vector<1x8x1024xf32> to vector<8x1024xf32>
    %226 = arith.truncf %218 : vector<8x256xf32> to vector<8x256xbf16>
    %cst_65 = arith.constant dense<0.000000e+00> : vector<8x1024xf32>
    %227 = tpu.matmul %226, %10, %cst_65 {dimension_numbers = #tpu.dot_dimension_numbers<[1], [0], [0], [1], [0, 0, 1, 1], [], []>} : vector<8x256xbf16>, vector<256x1024xbf16>, vector<8x1024xf32> -> vector<8x1024xf32>
    %228 = arith.addf %225, %227 : vector<8x1024xf32>
    %229 = vector.extract_strided_slice %228 {offsets = [0, 0], sizes = [8, 256], strides = [1, 1]} : vector<8x1024xf32> to vector<8x256xf32>
    %230 = arith.negf %229 : vector<8x256xf32>
    %231 = math.exp %230 : vector<8x256xf32>
    %cst_66 = arith.constant 1.000000e+00 : f32
    %232 = vector.broadcast %cst_66 : f32 to vector<8x256xf32>
    %233 = arith.addf %232, %231 : vector<8x256xf32>
    %234 = arith.divf %232, %233 : vector<8x256xf32>
    %235 = vector.extract_strided_slice %228 {offsets = [0, 256], sizes = [8, 256], strides = [1, 1]} : vector<8x1024xf32> to vector<8x256xf32>
    %236 = arith.negf %235 : vector<8x256xf32>
    %237 = math.exp %236 : vector<8x256xf32>
    %cst_67 = arith.constant 1.000000e+00 : f32
    %238 = vector.broadcast %cst_67 : f32 to vector<8x256xf32>
    %239 = arith.addf %238, %237 : vector<8x256xf32>
    %240 = arith.divf %238, %239 : vector<8x256xf32>
    %241 = vector.extract_strided_slice %228 {offsets = [0, 512], sizes = [8, 256], strides = [1, 1]} : vector<8x1024xf32> to vector<8x256xf32>
    %242 = math.tanh %241 : vector<8x256xf32>
    %243 = vector.extract_strided_slice %228 {offsets = [0, 768], sizes = [8, 256], strides = [1, 1]} : vector<8x1024xf32> to vector<8x256xf32>
    %244 = arith.negf %243 : vector<8x256xf32>
    %245 = math.exp %244 : vector<8x256xf32>
    %cst_68 = arith.constant 1.000000e+00 : f32
    %246 = vector.broadcast %cst_68 : f32 to vector<8x256xf32>
    %247 = arith.addf %246, %245 : vector<8x256xf32>
    %248 = arith.divf %246, %247 : vector<8x256xf32>
    %249 = arith.mulf %240, %216 : vector<8x256xf32>
    %250 = arith.mulf %234, %242 : vector<8x256xf32>
    %251 = arith.addf %249, %250 : vector<8x256xf32>
    %252 = math.tanh %251 : vector<8x256xf32>
    %253 = arith.mulf %248, %252 : vector<8x256xf32>
    %254 = arith.index_cast %c6_i32 : i32 to index
    %c0_69 = arith.constant 0 : index
    %c0_70 = arith.constant 0 : index
    %255 = vector.load %arg11[%254, %c0_69, %c0_70] : memref<8x8x256xf32, #tpu.memory_space<vmem>>, vector<1x8x256xf32>
    %256 = vector.shape_cast %255 : vector<1x8x256xf32> to vector<8x256xf32>
    %257 = vector.shape_cast %253 : vector<8x256xf32> to vector<1x8x256xf32>
    tpu.vector_store %arg11[%254, %c0_69, %c0_70], %257 {strides = array<i32>} : memref<8x8x256xf32, #tpu.memory_space<vmem>>, vector<1x8x256xf32>,
    %c7_i32 = arith.constant 7 : i32
    %258 = arith.index_cast %c7_i32 : i32 to index
    %c0_71 = arith.constant 0 : index
    %c0_72 = arith.constant 0 : index
    %259 = vector.load %arg10[%258, %c0_71, %c0_72] : memref<8x8x1024xf32, #tpu.memory_space<vmem>>, vector<1x8x1024xf32>
    %260 = vector.shape_cast %259 : vector<1x8x1024xf32> to vector<8x1024xf32>
    %261 = arith.truncf %253 : vector<8x256xf32> to vector<8x256xbf16>
    %cst_73 = arith.constant dense<0.000000e+00> : vector<8x1024xf32>
    %262 = tpu.matmul %261, %10, %cst_73 {dimension_numbers = #tpu.dot_dimension_numbers<[1], [0], [0], [1], [0, 0, 1, 1], [], []>} : vector<8x256xbf16>, vector<256x1024xbf16>, vector<8x1024xf32> -> vector<8x1024xf32>
    %263 = arith.addf %260, %262 : vector<8x1024xf32>
    %264 = vector.extract_strided_slice %263 {offsets = [0, 0], sizes = [8, 256], strides = [1, 1]} : vector<8x1024xf32> to vector<8x256xf32>
    %265 = arith.negf %264 : vector<8x256xf32>
    %266 = math.exp %265 : vector<8x256xf32>
    %cst_74 = arith.constant 1.000000e+00 : f32
    %267 = vector.broadcast %cst_74 : f32 to vector<8x256xf32>
    %268 = arith.addf %267, %266 : vector<8x256xf32>
    %269 = arith.divf %267, %268 : vector<8x256xf32>
    %270 = vector.extract_strided_slice %263 {offsets = [0, 256], sizes = [8, 256], strides = [1, 1]} : vector<8x1024xf32> to vector<8x256xf32>
    %271 = arith.negf %270 : vector<8x256xf32>
    %272 = math.exp %271 : vector<8x256xf32>
    %cst_75 = arith.constant 1.000000e+00 : f32
    %273 = vector.broadcast %cst_75 : f32 to vector<8x256xf32>
    %274 = arith.addf %273, %272 : vector<8x256xf32>
    %275 = arith.divf %273, %274 : vector<8x256xf32>
    %276 = vector.extract_strided_slice %263 {offsets = [0, 512], sizes = [8, 256], strides = [1, 1]} : vector<8x1024xf32> to vector<8x256xf32>
    %277 = math.tanh %276 : vector<8x256xf32>
    %278 = vector.extract_strided_slice %263 {offsets = [0, 768], sizes = [8, 256], strides = [1, 1]} : vector<8x1024xf32> to vector<8x256xf32>
    %279 = arith.negf %278 : vector<8x256xf32>
    %280 = math.exp %279 : vector<8x256xf32>
    %cst_76 = arith.constant 1.000000e+00 : f32
    %281 = vector.broadcast %cst_76 : f32 to vector<8x256xf32>
    %282 = arith.addf %281, %280 : vector<8x256xf32>
    %283 = arith.divf %281, %282 : vector<8x256xf32>
    %284 = arith.mulf %275, %251 : vector<8x256xf32>
    %285 = arith.mulf %269, %277 : vector<8x256xf32>
    %286 = arith.addf %284, %285 : vector<8x256xf32>
    %287 = math.tanh %286 : vector<8x256xf32>
    %288 = arith.mulf %283, %287 : vector<8x256xf32>
    %289 = arith.index_cast %c7_i32 : i32 to index
    %c0_77 = arith.constant 0 : index
    %c0_78 = arith.constant 0 : index
    %290 = vector.load %arg11[%289, %c0_77, %c0_78] : memref<8x8x256xf32, #tpu.memory_space<vmem>>, vector<1x8x256xf32>
    %291 = vector.shape_cast %290 : vector<1x8x256xf32> to vector<8x256xf32>
    %292 = vector.shape_cast %288 : vector<8x256xf32> to vector<1x8x256xf32>
    tpu.vector_store %arg11[%289, %c0_77, %c0_78], %292 {strides = array<i32>} : memref<8x8x256xf32, #tpu.memory_space<vmem>>, vector<1x8x256xf32>,
    %c8_i32 = arith.constant 8 : i32
    %c0_79 = arith.constant 0 : index
    %c0_80 = arith.constant 0 : index
    %c0_81 = arith.constant 0 : index
    %293 = vector.load %arg11[%c0_79, %c0_80, %c0_81] : memref<8x8x256xf32, #tpu.memory_space<vmem>>, vector<8x8x256xf32>
    %294 = vector.shape_cast %293 : vector<8x8x256xf32> to vector<64x256xf32>
    %c0_82 = arith.constant 0 : index
    %c0_83 = arith.constant 0 : index
    %295 = vector.load %arg7[%c0_82, %c0_83] : memref<256x128xf32, #tpu.memory_space<vmem>>, vector<256x128xf32>
    %cst_84 = arith.constant dense<0.000000e+00> : vector<64x128xf32>
    %296 = tpu.matmul %294, %295, %cst_84 {dimension_numbers = #tpu.dot_dimension_numbers<[1], [0], [0], [1], [0, 0, 1, 1], [], []>} : vector<64x256xf32>, vector<256x128xf32>, vector<64x128xf32> -> vector<64x128xf32>
    %c0_85 = arith.constant 0 : index
    %c0_86 = arith.constant 0 : index
    %297 = vector.load %arg8[%c0_85, %c0_86] : memref<1x128xf32, #tpu.memory_space<vmem>>, vector<1x128xf32>
    %298 = vector.broadcast %297 : vector<1x128xf32> to vector<64x128xf32>
    %299 = arith.addf %296, %298 : vector<64x128xf32>
    %300 = vector.shape_cast %299 : vector<64x128xf32> to vector<8x8x128xf32>
    %301 = tpu.iota {dimensions = array<i32: 1>} : vector<8x8x128xi32>
    %c2_i32_87 = arith.constant 2 : i32
    %302 = vector.broadcast %c2_i32_87 : i32 to vector<8x8x128xi32>
    %303 = arith.cmpi slt, %301, %302 : vector<8x8x128xi32>
    %cst_88 = arith.constant -1.000000e+30 : f32
    %304 = vector.broadcast %cst_88 : f32 to vector<8x8x128xf32>
    %305 = arith.select %303, %300, %304 : vector<8x8x128xi1>, vector<8x8x128xf32>
    %cst_89 = arith.constant dense<0xFF800000> : vector<8x128xf32>
    %306 = vector.multi_reduction <maximumf>, %305, %cst_89 [1] : vector<8x8x128xf32> to vector<8x128xf32>
    %307 = vector.shape_cast %306 : vector<8x128xf32> to vector<8x1x128xf32>
    %308 = vector.broadcast %307 : vector<8x1x128xf32> to vector<8x8x128xf32>
    %309 = arith.subf %305, %308 : vector<8x8x128xf32>
    %310 = math.exp %309 : vector<8x8x128xf32>
    %cst_90 = arith.constant 0.000000e+00 : f32
    %311 = vector.broadcast %cst_90 : f32 to vector<8x8x128xf32>
    %312 = arith.select %303, %310, %311 : vector<8x8x128xi1>, vector<8x8x128xf32>
    %cst_91 = arith.constant dense<0.000000e+00> : vector<8x128xf32>
    %313 = vector.multi_reduction <add>, %312, %cst_91 [1] : vector<8x8x128xf32> to vector<8x128xf32>
    %314 = vector.shape_cast %313 : vector<8x128xf32> to vector<8x1x128xf32>
    %315 = vector.broadcast %314 : vector<8x1x128xf32> to vector<8x8x128xf32>
    %316 = arith.divf %312, %315 : vector<8x8x128xf32>
    %c0_92 = arith.constant 0 : index
    %c0_93 = arith.constant 0 : index
    %c0_94 = arith.constant 0 : index
    %317 = vector.load %arg9[%c0_92, %c0_93, %c0_94] : memref<8x8x128xf32, #tpu.memory_space<vmem>>, vector<8x8x128xf32>
    tpu.vector_store %arg9[%c0_92, %c0_93, %c0_94], %316 {strides = array<i32>} : memref<8x8x128xf32, #tpu.memory_space<vmem>>, vector<8x8x128xf32>,
    return
  }
  func.func @transform_0(%arg0: i32) -> (i32, i32, i32) {
    %c0_i32 = arith.constant 0 : i32
    %c0_i32_0 = arith.constant 0 : i32
    %c0_i32_1 = arith.constant 0 : i32
    %c0_i32_2 = arith.constant 0 : i32
    return %c0_i32, %c0_i32_0, %c0_i32_1 : i32, i32, i32
  }
  func.func @transform_1(%arg0: i32) -> (i32, i32) {
    %c0_i32 = arith.constant 0 : i32
    %c0_i32_0 = arith.constant 0 : i32
    %c0_i32_1 = arith.constant 0 : i32
    return %c0_i32, %c0_i32_0 : i32, i32
  }
  func.func @transform_2(%arg0: i32) -> (i32, i32) {
    %c0_i32 = arith.constant 0 : i32
    %c0_i32_0 = arith.constant 0 : i32
    %c0_i32_1 = arith.constant 0 : i32
    return %c0_i32, %c0_i32_0 : i32, i32
  }
  func.func @transform_3(%arg0: i32) -> (i32, i32) {
    %c0_i32 = arith.constant 0 : i32
    %c0_i32_0 = arith.constant 0 : i32
    %c0_i32_1 = arith.constant 0 : i32
    return %c0_i32, %c0_i32_0 : i32, i32
  }
  func.func @transform_4(%arg0: i32) -> (i32, i32) {
    %c0_i32 = arith.constant 0 : i32
    %c0_i32_0 = arith.constant 0 : i32
    %c0_i32_1 = arith.constant 0 : i32
    return %c0_i32, %c0_i32_0 : i32, i32
  }
  func.func @transform_5(%arg0: i32) -> (i32, i32) {
    %c0_i32 = arith.constant 0 : i32
    %c0_i32_0 = arith.constant 0 : i32
    %c0_i32_1 = arith.constant 0 : i32
    return %c0_i32, %c0_i32_0 : i32, i32
  }
  func.func @transform_6(%arg0: i32) -> (i32, i32) {
    %c0_i32 = arith.constant 0 : i32
    %c0_i32_0 = arith.constant 0 : i32
    %c0_i32_1 = arith.constant 0 : i32
    return %c0_i32, %c0_i32_0 : i32, i32
  }
  func.func @transform_7(%arg0: i32) -> (i32, i32) {
    %c0_i32 = arith.constant 0 : i32
    %c0_i32_0 = arith.constant 0 : i32
    %c0_i32_1 = arith.constant 0 : i32
    return %c0_i32, %c0_i32_0 : i32, i32
  }
  func.func @transform_8(%arg0: i32) -> (i32, i32, i32) {
    %c0_i32 = arith.constant 0 : i32
    %c0_i32_0 = arith.constant 0 : i32
    %c0_i32_1 = arith.constant 0 : i32
    %c0_i32_2 = arith.constant 0 : i32
    return %c0_i32, %c0_i32_0, %c0_i32_1 : i32, i32, i32
  }
}

</mosaic_0001>

<llo_original>
// kernel: decoder_forward.1
$region0: #{decoder_forward.1}
  #allocation0 [shape = 'u32[]', space=smem, size = 0x4, offset = 0x4, fixed_abs, tag = 'smem constant byte address 0x4 - core index']
  #allocation1 [shape = 'u32[144,128]{1,0:T(1,128)}', space=vmem, size = 0x12000, scoped, tag = 'internal scratch']
  #allocation2 [shape = 'f32[8,8,1024]{2,1,0:T(8,128)}', space=vmem, size = 0x40000, scoped, tag = 'scratch operand']
  #allocation3 [shape = 'f32[8,8,256]{2,1,0:T(8,128)}', space=vmem, size = 0x10000, scoped, tag = 'scratch operand']
  %s0 = inlined_call_operand.vmem [shape: f32[8,8,256], index: 0, kind: input, shape index: {}]
  %s1 = inlined_call_operand.vmem [shape: f32[8,256], index: 1, kind: input, shape index: {}]
  %s2 = inlined_call_operand.vmem [shape: f32[8,256], index: 2, kind: input, shape index: {}]
  %s3 = inlined_call_operand.vmem [shape: bf16[256,1024], index: 3, kind: input, shape index: {}]
  %s4 = inlined_call_operand.vmem [shape: bf16[256,1024], index: 4, kind: input, shape index: {}]
  %s5 = inlined_call_operand.vmem [shape: f32[1,1024], index: 5, kind: input, shape index: {}]
  %s6 = inlined_call_operand.vmem [shape: f32[256,128], index: 6, kind: input, shape index: {}]
  %s7 = inlined_call_operand.vmem [shape: f32[1,128], index: 7, kind: input, shape index: {}]
  %s8 = inlined_call_operand.vmem [shape: f32[8,8,128], index: 8, kind: output, shape index: {}]
  %s9 = sld [smem:[#allocation0]]
  $region42: #{decoder_forward.1} parent=0
    _
  %s11 = ssub.s32 1, %s9
  %s12 = scalar_select 0, %s11, %s9
  // Predicated region
  $region2: #{decoder_forward.1} parent=0 // pred_check
    _
  $region3: #{decoder_forward.1} parent=0 // pred_check_branch
    %14 = sbr.rel (0) target = $region5
  $region4: #{decoder_forward.1} parent=0 // pred_region
    _
  $region5: #{decoder_forward.1} parent=0 // pred_fallthru
    _
  // Predicated region
  $region6: #{decoder_forward.1} parent=0 // pred_check
    _
  $region7: #{decoder_forward.1} parent=0 // pred_check_branch
    %16 = sbr.rel (0) target = $region9
  $region8: #{decoder_forward.1} parent=0 // pred_region
    _
  $region9: #{decoder_forward.1} parent=0 // pred_fallthru
    _
  // Predicated region
  $region10: #{decoder_forward.1} parent=0 // pred_check
    _
  $region11: #{decoder_forward.1} parent=0 // pred_check_branch
    %18 = sbr.rel (0) target = $region13
  $region12: #{decoder_forward.1} parent=0 // pred_region
    _
  $region13: #{decoder_forward.1} parent=0 // pred_fallthru
    _
  // Predicated region
  $region14: #{decoder_forward.1} parent=0 // pred_check
    _
  $region15: #{decoder_forward.1} parent=0 // pred_check_branch
    %20 = sbr.rel (0) target = $region17
  $region16: #{decoder_forward.1} parent=0 // pred_region
    _
  $region17: #{decoder_forward.1} parent=0 // pred_fallthru
    _
  // Predicated region
  $region18: #{decoder_forward.1} parent=0 // pred_check
    _
  $region19: #{decoder_forward.1} parent=0 // pred_check_branch
    %22 = sbr.rel (0) target = $region21
  $region20: #{decoder_forward.1} parent=0 // pred_region
    _
  $region21: #{decoder_forward.1} parent=0 // pred_fallthru
    _
  // Predicated region
  $region22: #{decoder_forward.1} parent=0 // pred_check
    _
  $region23: #{decoder_forward.1} parent=0 // pred_check_branch
    %24 = sbr.rel (0) target = $region25
  $region24: #{decoder_forward.1} parent=0 // pred_region
    _
  $region25: #{decoder_forward.1} parent=0 // pred_fallthru
    _
  // Predicated region
  $region26: #{decoder_forward.1} parent=0 // pred_check
    _
  $region27: #{decoder_forward.1} parent=0 // pred_check_branch
    %26 = sbr.rel (0) target = $region29
  $region28: #{decoder_forward.1} parent=0 // pred_region
    _
  $region29: #{decoder_forward.1} parent=0 // pred_fallthru
    _
  // Predicated region
  $region30: #{decoder_forward.1} parent=0 // pred_check
    _
  $region31: #{decoder_forward.1} parent=0 // pred_check_branch
    %28 = sbr.rel (0) target = $region33
  $region32: #{decoder_forward.1} parent=0 // pred_region
    _
  $region33: #{decoder_forward.1} parent=0 // pred_fallthru
    _
  %v29 = vld [vmem:[%s0] sm:$0xff]
  %v30 = vld [vmem:[%s0 + $0x8] sm:$0xff]
  %v31 = vld [vmem:[%s0 + $0x10] sm:$0xff]
  %v32 = vld [vmem:[%s0 + $0x18] sm:$0xff]
  %v33 = vld [vmem:[%s0 + $0x20] sm:$0xff]
  %v34 = vld [vmem:[%s0 + $0x28] sm:$0xff]
  %v35 = vld [vmem:[%s0 + $0x30] sm:$0xff]
  %v36 = vld [vmem:[%s0 + $0x38] sm:$0xff]
  %v37 = vld [vmem:[%s0 + $0x40] sm:$0xff]
  %v38 = vld [vmem:[%s0 + $0x48] sm:$0xff]
  %v39 = vld [vmem:[%s0 + $0x50] sm:$0xff]
  %v40 = vld [vmem:[%s0 + $0x58] sm:$0xff]
  %v41 = vld [vmem:[%s0 + $0x60] sm:$0xff]
  %v42 = vld [vmem:[%s0 + $0x68] sm:$0xff]
  %v43 = vld [vmem:[%s0 + $0x70] sm:$0xff]
  %v44 = vld [vmem:[%s0 + $0x78] sm:$0xff]
  %v45 = vpack.c.bf16 %v31, %v29
  %v46 = vpack.c.bf16 %v32, %v30
  %v47 = vpack.c.bf16 %v35, %v33
  %v48 = vpack.c.bf16 %v36, %v34
  %v49 = vpack.c.bf16 %v39, %v37
  %v50 = vpack.c.bf16 %v40, %v38
  %v51 = vpack.c.bf16 %v43, %v41
  %v52 = vpack.c.bf16 %v44, %v42
  %v53 = vld [vmem:[%s3] sm:$0xff]
  %v54 = vld [vmem:[%s3 + $0x8] sm:$0xff]
  %v55 = vld [vmem:[%s3 + $0x10] sm:$0xff]
  %v56 = vld [vmem:[%s3 + $0x18] sm:$0xff]
  %v57 = vld [vmem:[%s3 + $0x20] sm:$0xff]
  %v58 = vld [vmem:[%s3 + $0x28] sm:$0xff]
  %v59 = vld [vmem:[%s3 + $0x30] sm:$0xff]
  %v60 = vld [vmem:[%s3 + $0x38] sm:$0xff]
  %v61 = vld [vmem:[%s3 + $0x40] sm:$0xff]
  %v62 = vld [vmem:[%s3 + $0x48] sm:$0xff]
  %v63 = vld [vmem:[%s3 + $0x50] sm:$0xff]
  %v64 = vld [vmem:[%s3 + $0x58] sm:$0xff]
  %v65 = vld [vmem:[%s3 + $0x60] sm:$0xff]
  %v66 = vld [vmem:[%s3 + $0x68] sm:$0xff]
  %v67 = vld [vmem:[%s3 + $0x70] sm:$0xff]
  %v68 = vld [vmem:[%s3 + $0x78] sm:$0xff]
  %v69 = vld [vmem:[%s3 + $0x80] sm:$0xff]
  %v70 = vld [vmem:[%s3 + $0x88] sm:$0xff]
  %v71 = vld [vmem:[%s3 + $0x90] sm:$0xff]
  %v72 = vld [vmem:[%s3 + $0x98] sm:$0xff]
  %v73 = vld [vmem:[%s3 + $0xa0] sm:$0xff]
  %v74 = vld [vmem:[%s3 + $0xa8] sm:$0xff]
  %v75 = vld [vmem:[%s3 + $0xb0] sm:$0xff]
  %v76 = vld [vmem:[%s3 + $0xb8] sm:$0xff]
  %v77 = vld [vmem:[%s3 + $0xc0] sm:$0xff]
  %v78 = vld [vmem:[%s3 + $0xc8] sm:$0xff]
  %v79 = vld [vmem:[%s3 + $0xd0] sm:$0xff]
  %v80 = vld [vmem:[%s3 + $0xd8] sm:$0xff]
  %v81 = vld [vmem:[%s3 + $0xe0] sm:$0xff]
  %v82 = vld [vmem:[%s3 + $0xe8] sm:$0xff]
  %v83 = vld [vmem:[%s3 + $0xf0] sm:$0xff]
  %v84 = vld [vmem:[%s3 + $0xf8] sm:$0xff]
  %v85 = vld [vmem:[%s3 + $0x100] sm:$0xff]
  %v86 = vld [vmem:[%s3 + $0x108] sm:$0xff]
  %v87 = vld [vmem:[%s3 + $0x110] sm:$0xff]
  %v88 = vld [vmem:[%s3 + $0x118] sm:$0xff]
  %v89 = vld [vmem:[%s3 + $0x120] sm:$0xff]
  %v90 = vld [vmem:[%s3 + $0x128] sm:$0xff]
  %v91 = vld [vmem:[%s3 + $0x130] sm:$0xff]
  %v92 = vld [vmem:[%s3 + $0x138] sm:$0xff]
  %v93 = vld [vmem:[%s3 + $0x140] sm:$0xff]
  %v94 = vld [vmem:[%s3 + $0x148] sm:$0xff]
  %v95 = vld [vmem:[%s3 + $0x150] sm:$0xff]
  %v96 = vld [vmem:[%s3 + $0x158] sm:$0xff]
  %v97 = vld [vmem:[%s3 + $0x160] sm:$0xff]
  %v98 = vld [vmem:[%s3 + $0x168] sm:$0xff]
  %v99 = vld [vmem:[%s3 + $0x170] sm:$0xff]
  %v100 = vld [vmem:[%s3 + $0x178] sm:$0xff]
  %v101 = vld [vmem:[%s3 + $0x180] sm:$0xff]
  %v102 = vld [vmem:[%s3 + $0x188] sm:$0xff]
  %v103 = vld [vmem:[%s3 + $0x190] sm:$0xff]
  %v104 = vld [vmem:[%s3 + $0x198] sm:$0xff]
  %v105 = vld [vmem:[%s3 + $0x1a0] sm:$0xff]
  %v106 = vld [vmem:[%s3 + $0x1a8] sm:$0xff]
  %v107 = vld [vmem:[%s3 + $0x1b0] sm:$0xff]
  %v108 = vld [vmem:[%s3 + $0x1b8] sm:$0xff]
  %v109 = vld [vmem:[%s3 + $0x1c0] sm:$0xff]
  %v110 = vld [vmem:[%s3 + $0x1c8] sm:$0xff]
  %v111 = vld [vmem:[%s3 + $0x1d0] sm:$0xff]
  %v112 = vld [vmem:[%s3 + $0x1d8] sm:$0xff]
  %v113 = vld [vmem:[%s3 + $0x1e0] sm:$0xff]
  %v114 = vld [vmem:[%s3 + $0x1e8] sm:$0xff]
  %v115 = vld [vmem:[%s3 + $0x1f0] sm:$0xff]
  %v116 = vld [vmem:[%s3 + $0x1f8] sm:$0xff]
  %v117 = vld [vmem:[%s3 + $0x200] sm:$0xff]
  %v118 = vld [vmem:[%s3 + $0x208] sm:$0xff]
  %v119 = vld [vmem:[%s3 + $0x210] sm:$0xff]
  %v120 = vld [vmem:[%s3 + $0x218] sm:$0xff]
  %v121 = vld [vmem:[%s3 + $0x220] sm:$0xff]
  %v122 = vld [vmem:[%s3 + $0x228] sm:$0xff]
  %v123 = vld [vmem:[%s3 + $0x230] sm:$0xff]
  %v124 = vld [vmem:[%s3 + $0x238] sm:$0xff]
  %v125 = vld [vmem:[%s3 + $0x240] sm:$0xff]
  %v126 = vld [vmem:[%s3 + $0x248] sm:$0xff]
  %v127 = vld [vmem:[%s3 + $0x250] sm:$0xff]
  %v128 = vld [vmem:[%s3 + $0x258] sm:$0xff]
  %v129 = vld [vmem:[%s3 + $0x260] sm:$0xff]
  %v130 = vld [vmem:[%s3 + $0x268] sm:$0xff]
  %v131 = vld [vmem:[%s3 + $0x270] sm:$0xff]
  %v132 = vld [vmem:[%s3 + $0x278] sm:$0xff]
  %v133 = vld [vmem:[%s3 + $0x280] sm:$0xff]
  %v134 = vld [vmem:[%s3 + $0x288] sm:$0xff]
  %v135 = vld [vmem:[%s3 + $0x290] sm:$0xff]
  %v136 = vld [vmem:[%s3 + $0x298] sm:$0xff]
  %v137 = vld [vmem:[%s3 + $0x2a0] sm:$0xff]
  %v138 = vld [vmem:[%s3 + $0x2a8] sm:$0xff]
  %v139 = vld [vmem:[%s3 + $0x2b0] sm:$0xff]
  %v140 = vld [vmem:[%s3 + $0x2b8] sm:$0xff]
  %v141 = vld [vmem:[%s3 + $0x2c0] sm:$0xff]
  %v142 = vld [vmem:[%s3 + $0x2c8] sm:$0xff]
  %v143 = vld [vmem:[%s3 + $0x2d0] sm:$0xff]
  %v144 = vld [vmem:[%s3 + $0x2d8] sm:$0xff]
  %v145 = vld [vmem:[%s3 + $0x2e0] sm:$0xff]
  %v146 = vld [vmem:[%s3 + $0x2e8] sm:$0xff]
  %v147 = vld [vmem:[%s3 + $0x2f0] sm:$0xff]
  %v148 = vld [vmem:[%s3 + $0x2f8] sm:$0xff]
  %v149 = vld [vmem:[%s3 + $0x300] sm:$0xff]
  %v150 = vld [vmem:[%s3 + $0x308] sm:$0xff]
  %v151 = vld [vmem:[%s3 + $0x310] sm:$0xff]
  %v152 = vld [vmem:[%s3 + $0x318] sm:$0xff]
  %v153 = vld [vmem:[%s3 + $0x320] sm:$0xff]
  %v154 = vld [vmem:[%s3 + $0x328] sm:$0xff]
  %v155 = vld [vmem:[%s3 + $0x330] sm:$0xff]
  %v156 = vld [vmem:[%s3 + $0x338] sm:$0xff]
  %v157 = vld [vmem:[%s3 + $0x340] sm:$0xff]
  %v158 = vld [vmem:[%s3 + $0x348] sm:$0xff]
  %v159 = vld [vmem:[%s3 + $0x350] sm:$0xff]
  %v160 = vld [vmem:[%s3 + $0x358] sm:$0xff]
  %v161 = vld [vmem:[%s3 + $0x360] sm:$0xff]
  %v162 = vld [vmem:[%s3 + $0x368] sm:$0xff]
  %v163 = vld [vmem:[%s3 + $0x370] sm:$0xff]
  %v164 = vld [vmem:[%s3 + $0x378] sm:$0xff]
  %v165 = vld [vmem:[%s3 + $0x380] sm:$0xff]
  %v166 = vld [vmem:[%s3 + $0x388] sm:$0xff]
  %v167 = vld [vmem:[%s3 + $0x390] sm:$0xff]
  %v168 = vld [vmem:[%s3 + $0x398] sm:$0xff]
  %v169 = vld [vmem:[%s3 + $0x3a0] sm:$0xff]
  %v170 = vld [vmem:[%s3 + $0x3a8] sm:$0xff]
  %v171 = vld [vmem:[%s3 + $0x3b0] sm:$0xff]
  %v172 = vld [vmem:[%s3 + $0x3b8] sm:$0xff]
  %v173 = vld [vmem:[%s3 + $0x3c0] sm:$0xff]
  %v174 = vld [vmem:[%s3 + $0x3c8] sm:$0xff]
  %v175 = vld [vmem:[%s3 + $0x3d0] sm:$0xff]
  %v176 = vld [vmem:[%s3 + $0x3d8] sm:$0xff]
  %v177 = vld [vmem:[%s3 + $0x3e0] sm:$0xff]
  %v178 = vld [vmem:[%s3 + $0x3e8] sm:$0xff]
  %v179 = vld [vmem:[%s3 + $0x3f0] sm:$0xff]
  %v180 = vld [vmem:[%s3 + $0x3f8] sm:$0xff]
  %v181 = vld [vmem:[%s5] sm:$0xff]
  %v183 = vlaneseq
  %v184 = vshrl.u32 %v183, 7
  %v185 = vsub.s32 0, %v184
  %v186 = vrot.slane %v181, %v185
  %v187 = vlaneseq
  %v188 = vshrl.u32 %v187, 7
  %v189 = vsub.s32 1, %v188
  %v190 = vrot.slane %v181, %v189
  %v191 = vlaneseq
  %v192 = vshrl.u32 %v191, 7
  %v193 = vsub.s32 2, %v192
  %v194 = vrot.slane %v181, %v193
  %v195 = vlaneseq
  %v196 = vshrl.u32 %v195, 7
  %v197 = vsub.s32 3, %v196
  %v198 = vrot.slane %v181, %v197
  %v199 = vlaneseq
  %v200 = vshrl.u32 %v199, 7
  %v201 = vsub.s32 4, %v200
  %v202 = vrot.slane %v181, %v201
  %v203 = vlaneseq
  %v204 = vshrl.u32 %v203, 7
  %v205 = vsub.s32 5, %v204
  %v206 = vrot.slane %v181, %v205
  %v207 = vlaneseq
  %v208 = vshrl.u32 %v207, 7
  %v209 = vsub.s32 6, %v208
  %v210 = vrot.slane %v181, %v209
  %v211 = vlaneseq
  %v212 = vshrl.u32 %v211, 7
  %v213 = vsub.s32 7, %v212
  %v214 = vrot.slane %v181, %v213
  %v351 = vunpack.c.l.b16 %v53
  %v352 = vunpack.c.h.b16 %v53
  %v353 = vunpack.c.l.b16 %v54
  %v354 = vunpack.c.h.b16 %v54
  %v355 = vunpack.c.l.b16 %v55
  %v356 = vunpack.c.h.b16 %v55
  %v357 = vunpack.c.l.b16 %v56
  %v358 = vunpack.c.h.b16 %v56
  %v359 = vunpack.c.l.b16 %v57
  %v360 = vunpack.c.h.b16 %v57
  %v361 = vunpack.c.l.b16 %v58
  %v362 = vunpack.c.h.b16 %v58
  %v363 = vunpack.c.l.b16 %v59
  %v364 = vunpack.c.h.b16 %v59
  %v365 = vunpack.c.l.b16 %v60
  %v366 = vunpack.c.h.b16 %v60
  %v367 = vunpack.c.l.b16 %v61
  %v368 = vunpack.c.h.b16 %v61
  %v369 = vunpack.c.l.b16 %v62
  %v370 = vunpack.c.h.b16 %v62
  %v371 = vunpack.c.l.b16 %v63
  %v372 = vunpack.c.h.b16 %v63
  %v373 = vunpack.c.l.b16 %v64
  %v374 = vunpack.c.h.b16 %v64
  %v375 = vunpack.c.l.b16 %v65
  %v376 = vunpack.c.h.b16 %v65
  %v377 = vunpack.c.l.b16 %v66
  %v378 = vunpack.c.h.b16 %v66
  %v379 = vunpack.c.l.b16 %v67
  %v380 = vunpack.c.h.b16 %v67
  %v381 = vunpack.c.l.b16 %v68
  %v382 = vunpack.c.h.b16 %v68
  %v383 = vunpack.c.l.b16 %v69
  %v384 = vunpack.c.h.b16 %v69
  %v385 = vunpack.c.l.b16 %v70
  %v386 = vunpack.c.h.b16 %v70
  %v387 = vunpack.c.l.b16 %v71
  %v388 = vunpack.c.h.b16 %v71
  %v389 = vunpack.c.l.b16 %v72
  %v390 = vunpack.c.h.b16 %v72
  %v391 = vunpack.c.l.b16 %v73
  %v392 = vunpack.c.h.b16 %v73
  %v393 = vunpack.c.l.b16 %v74
  %v394 = vunpack.c.h.b16 %v74
  %v395 = vunpack.c.l.b16 %v75
  %v396 = vunpack.c.h.b16 %v75
  %v397 = vunpack.c.l.b16 %v76
  %v398 = vunpack.c.h.b16 %v76
  %v399 = vunpack.c.l.b16 %v77
  %v400 = vunpack.c.h.b16 %v77
  %v401 = vunpack.c.l.b16 %v78
  %v402 = vunpack.c.h.b16 %v78
  %v403 = vunpack.c.l.b16 %v79
  %v404 = vunpack.c.h.b16 %v79
  %v405 = vunpack.c.l.b16 %v80
  %v406 = vunpack.c.h.b16 %v80
  %v407 = vunpack.c.l.b16 %v81
  %v408 = vunpack.c.h.b16 %v81
  %v409 = vunpack.c.l.b16 %v82
  %v410 = vunpack.c.h.b16 %v82
  %v411 = vunpack.c.l.b16 %v83
  %v412 = vunpack.c.h.b16 %v83
  %v413 = vunpack.c.l.b16 %v84
  %v414 = vunpack.c.h.b16 %v84
  %v415 = vunpack.c.l.b16 %v85
  %v416 = vunpack.c.h.b16 %v85
  %v417 = vunpack.c.l.b16 %v86
  %v418 = vunpack.c.h.b16 %v86
  %v419 = vunpack.c.l.b16 %v87
  %v420 = vunpack.c.h.b16 %v87
  %v421 = vunpack.c.l.b16 %v88
  %v422 = vunpack.c.h.b16 %v88
  %v423 = vunpack.c.l.b16 %v89
  %v424 = vunpack.c.h.b16 %v89
  %v425 = vunpack.c.l.b16 %v90
  %v426 = vunpack.c.h.b16 %v90
  %v427 = vunpack.c.l.b16 %v91
  %v428 = vunpack.c.h.b16 %v91
  %v429 = vunpack.c.l.b16 %v92
  %v430 = vunpack.c.h.b16 %v92
  %v431 = vunpack.c.l.b16 %v93
  %v432 = vunpack.c.h.b16 %v93
  %v433 = vunpack.c.l.b16 %v94
  %v434 = vunpack.c.h.b16 %v94
  %v435 = vunpack.c.l.b16 %v95
  %v436 = vunpack.c.h.b16 %v95
  %v437 = vunpack.c.l.b16 %v96
  %v438 = vunpack.c.h.b16 %v96
  %v439 = vunpack.c.l.b16 %v97
  %v440 = vunpack.c.h.b16 %v97
  %v441 = vunpack.c.l.b16 %v98
  %v442 = vunpack.c.h.b16 %v98
  %v443 = vunpack.c.l.b16 %v99
  %v444 = vunpack.c.h.b16 %v99
  %v445 = vunpack.c.l.b16 %v100
  %v446 = vunpack.c.h.b16 %v100
  %v447 = vunpack.c.l.b16 %v101
  %v448 = vunpack.c.h.b16 %v101
  %v449 = vunpack.c.l.b16 %v102
  %v450 = vunpack.c.h.b16 %v102
  %v451 = vunpack.c.l.b16 %v103
  %v452 = vunpack.c.h.b16 %v103
  %v453 = vunpack.c.l.b16 %v104
  %v454 = vunpack.c.h.b16 %v104
  %v455 = vunpack.c.l.b16 %v105
  %v456 = vunpack.c.h.b16 %v105
  %v457 = vunpack.c.l.b16 %v106
  %v458 = vunpack.c.h.b16 %v106
  %v459 = vunpack.c.l.b16 %v107
  %v460 = vunpack.c.h.b16 %v107
  %v461 = vunpack.c.l.b16 %v108
  %v462 = vunpack.c.h.b16 %v108
  %v463 = vunpack.c.l.b16 %v109
  %v464 = vunpack.c.h.b16 %v109
  %v465 = vunpack.c.l.b16 %v110
  %v466 = vunpack.c.h.b16 %v110
  %v467 = vunpack.c.l.b16 %v111
  %v468 = vunpack.c.h.b16 %v111
  %v469 = vunpack.c.l.b16 %v112
  %v470 = vunpack.c.h.b16 %v112
  %v471 = vunpack.c.l.b16 %v113
  %v472 = vunpack.c.h.b16 %v113
  %v473 = vunpack.c.l.b16 %v114
  %v474 = vunpack.c.h.b16 %v114
  %v475 = vunpack.c.l.b16 %v115
  %v476 = vunpack.c.h.b16 %v115
  %v477 = vunpack.c.l.b16 %v116
  %v478 = vunpack.c.h.b16 %v116
  %v479 = vunpack.c.l.b16 %v117
  %v480 = vunpack.c.h.b16 %v117
  %v481 = vunpack.c.l.b16 %v118
  %v482 = vunpack.c.h.b16 %v118
  %v483 = vunpack.c.l.b16 %v119
  %v484 = vunpack.c.h.b16 %v119
  %v485 = vunpack.c.l.b16 %v120
  %v486 = vunpack.c.h.b16 %v120
  %v487 = vunpack.c.l.b16 %v121
  %v488 = vunpack.c.h.b16 %v121
  %v489 = vunpack.c.l.b16 %v122
  %v490 = vunpack.c.h.b16 %v122
  %v491 = vunpack.c.l.b16 %v123
  %v492 = vunpack.c.h.b16 %v123
  %v493 = vunpack.c.l.b16 %v124
  %v494 = vunpack.c.h.b16 %v124
  %v495 = vunpack.c.l.b16 %v125
  %v496 = vunpack.c.h.b16 %v125
  %v497 = vunpack.c.l.b16 %v126
  %v498 = vunpack.c.h.b16 %v126
  %v499 = vunpack.c.l.b16 %v127
  %v500 = vunpack.c.h.b16 %v127
  %v501 = vunpack.c.l.b16 %v128
  %v502 = vunpack.c.h.b16 %v128
  %v503 = vunpack.c.l.b16 %v129
  %v504 = vunpack.c.h.b16 %v129
  %v505 = vunpack.c.l.b16 %v130
  %v506 = vunpack.c.h.b16 %v130
  %v507 = vunpack.c.l.b16 %v131
  %v508 = vunpack.c.h.b16 %v131
  %v509 = vunpack.c.l.b16 %v132
  %v510 = vunpack.c.h.b16 %v132
  %v511 = vunpack.c.l.b16 %v133
  %v512 = vunpack.c.h.b16 %v133
  %v513 = vunpack.c.l.b16 %v134
  %v514 = vunpack.c.h.b16 %v134
  %v515 = vunpack.c.l.b16 %v135
  %v516 = vunpack.c.h.b16 %v135
  %v517 = vunpack.c.l.b16 %v136
  %v518 = vunpack.c.h.b16 %v136
  %v519 = vunpack.c.l.b16 %v137
  %v520 = vunpack.c.h.b16 %v137
  %v521 = vunpack.c.l.b16 %v138
  %v522 = vunpack.c.h.b16 %v138
  %v523 = vunpack.c.l.b16 %v139
  %v524 = vunpack.c.h.b16 %v139
  %v525 = vunpack.c.l.b16 %v140
  %v526 = vunpack.c.h.b16 %v140
  %v527 = vunpack.c.l.b16 %v141
  %v528 = vunpack.c.h.b16 %v141
  %v529 = vunpack.c.l.b16 %v142
  %v530 = vunpack.c.h.b16 %v142
  %v531 = vunpack.c.l.b16 %v143
  %v532 = vunpack.c.h.b16 %v143
  %v533 = vunpack.c.l.b16 %v144
  %v534 = vunpack.c.h.b16 %v144
  %v535 = vunpack.c.l.b16 %v145
  %v536 = vunpack.c.h.b16 %v145
  %v537 = vunpack.c.l.b16 %v146
  %v538 = vunpack.c.h.b16 %v146
  %v539 = vunpack.c.l.b16 %v147
  %v540 = vunpack.c.h.b16 %v147
  %v541 = vunpack.c.l.b16 %v148
  %v542 = vunpack.c.h.b16 %v148
  %v543 = vunpack.c.l.b16 %v149
  %v544 = vunpack.c.h.b16 %v149
  %v545 = vunpack.c.l.b16 %v150
  %v546 = vunpack.c.h.b16 %v150
  %v547 = vunpack.c.l.b16 %v151
  %v548 = vunpack.c.h.b16 %v151
  %v549 = vunpack.c.l.b16 %v152
  %v550 = vunpack.c.h.b16 %v152
  %v551 = vunpack.c.l.b16 %v153
  %v552 = vunpack.c.h.b16 %v153
  %v553 = vunpack.c.l.b16 %v154
  %v554 = vunpack.c.h.b16 %v154
  %v555 = vunpack.c.l.b16 %v155
  %v556 = vunpack.c.h.b16 %v155
  %v557 = vunpack.c.l.b16 %v156
  %v558 = vunpack.c.h.b16 %v156
  %v559 = vunpack.c.l.b16 %v157
  %v560 = vunpack.c.h.b16 %v157
  %v561 = vunpack.c.l.b16 %v158
  %v562 = vunpack.c.h.b16 %v158
  %v563 = vunpack.c.l.b16 %v159
  %v564 = vunpack.c.h.b16 %v159
  %v565 = vunpack.c.l.b16 %v160
  %v566 = vunpack.c.h.b16 %v160
  %v567 = vunpack.c.l.b16 %v161
  %v568 = vunpack.c.h.b16 %v161
  %v569 = vunpack.c.l.b16 %v162
  %v570 = vunpack.c.h.b16 %v162
  %v571 = vunpack.c.l.b16 %v163
  %v572 = vunpack.c.h.b16 %v163
  %v573 = vunpack.c.l.b16 %v164
  %v574 = vunpack.c.h.b16 %v164
  %v575 = vunpack.c.l.b16 %v165
  %v576 = vunpack.c.h.b16 %v165
  %v577 = vunpack.c.l.b16 %v166
  %v578 = vunpack.c.h.b16 %v166
  %v579 = vunpack.c.l.b16 %v167
  %v580 = vunpack.c.h.b16 %v167
  %v581 = vunpack.c.l.b16 %v168
  %v582 = vunpack.c.h.b16 %v168
  %v583 = vunpack.c.l.b16 %v169
  %v584 = vunpack.c.h.b16 %v169
  %v585 = vunpack.c.l.b16 %v170
  %v586 = vunpack.c.h.b16 %v170
  %v587 = vunpack.c.l.b16 %v171
  %v588 = vunpack.c.h.b16 %v171
  %v589 = vunpack.c.l.b16 %v172
  %v590 = vunpack.c.h.b16 %v172
  %v591 = vunpack.c.l.b16 %v173
  %v592 = vunpack.c.h.b16 %v173
  %v593 = vunpack.c.l.b16 %v174
  %v594 = vunpack.c.h.b16 %v174
  %v595 = vunpack.c.l.b16 %v175
  %v596 = vunpack.c.h.b16 %v175
  %v597 = vunpack.c.l.b16 %v176
  %v598 = vunpack.c.h.b16 %v176
  %v599 = vunpack.c.l.b16 %v177
  %v600 = vunpack.c.h.b16 %v177
  %v601 = vunpack.c.l.b16 %v178
  %v602 = vunpack.c.h.b16 %v178
  %v603 = vunpack.c.l.b16 %v179
  %v604 = vunpack.c.h.b16 %v179
  %v605 = vunpack.c.l.b16 %v180
  %v606 = vunpack.c.h.b16 %v180
  %v607 = vpack.c.b16 %v359, %v351
  %v608 = vpack.c.b16 %v360, %v352
  %v609 = vpack.c.b16 %v361, %v353
  %v610 = vpack.c.b16 %v362, %v354
  %v611 = vpack.c.b16 %v363, %v355
  %v612 = vpack.c.b16 %v364, %v356
  %v613 = vpack.c.b16 %v365, %v357
  %v614 = vpack.c.b16 %v366, %v358
  %v615 = vpack.c.b16 %v375, %v367
  %v616 = vpack.c.b16 %v376, %v368
  %v617 = vpack.c.b16 %v377, %v369
  %v618 = vpack.c.b16 %v378, %v370
  %v619 = vpack.c.b16 %v379, %v371
  %v620 = vpack.c.b16 %v380, %v372
  %v621 = vpack.c.b16 %v381, %v373
  %v622 = vpack.c.b16 %v382, %v374
  %v623 = vpack.c.b16 %v391, %v383
  %v624 = vpack.c.b16 %v392, %v384
  %v625 = vpack.c.b16 %v393, %v385
  %v626 = vpack.c.b16 %v394, %v386
  %v627 = vpack.c.b16 %v395, %v387
  %v628 = vpack.c.b16 %v396, %v388
  %v629 = vpack.c.b16 %v397, %v389
  %v630 = vpack.c.b16 %v398, %v390
  %v631 = vpack.c.b16 %v407, %v399
  %v632 = vpack.c.b16 %v408, %v400
  %v633 = vpack.c.b16 %v409, %v401
  %v634 = vpack.c.b16 %v410, %v402
  %v635 = vpack.c.b16 %v411, %v403
  %v636 = vpack.c.b16 %v412, %v404
  %v637 = vpack.c.b16 %v413, %v405
  %v638 = vpack.c.b16 %v414, %v406
  %v639 = vpack.c.b16 %v423, %v415
  %v640 = vpack.c.b16 %v424, %v416
  %v641 = vpack.c.b16 %v425, %v417
  %v642 = vpack.c.b16 %v426, %v418
  %v643 = vpack.c.b16 %v427, %v419
  %v644 = vpack.c.b16 %v428, %v420
  %v645 = vpack.c.b16 %v429, %v421
  %v646 = vpack.c.b16 %v430, %v422
  %v647 = vpack.c.b16 %v439, %v431
  %v648 = vpack.c.b16 %v440, %v432
  %v649 = vpack.c.b16 %v441, %v433
  %v650 = vpack.c.b16 %v442, %v434
  %v651 = vpack.c.b16 %v443, %v435
  %v652 = vpack.c.b16 %v444, %v436
  %v653 = vpack.c.b16 %v445, %v437
  %v654 = vpack.c.b16 %v446, %v438
  %v655 = vpack.c.b16 %v455, %v447
  %v656 = vpack.c.b16 %v456, %v448
  %v657 = vpack.c.b16 %v457, %v449
  %v658 = vpack.c.b16 %v458, %v450
  %v659 = vpack.c.b16 %v459, %v451
  %v660 = vpack.c.b16 %v460, %v452
  %v661 = vpack.c.b16 %v461, %v453
  %v662 = vpack.c.b16 %v462, %v454
  %v663 = vpack.c.b16 %v471, %v463
  %v664 = vpack.c.b16 %v472, %v464
  %v665 = vpack.c.b16 %v473, %v465
  %v666 = vpack.c.b16 %v474, %v466
  %v667 = vpack.c.b16 %v475, %v467
  %v668 = vpack.c.b16 %v476, %v468
  %v669 = vpack.c.b16 %v477, %v469
  %v670 = vpack.c.b16 %v478, %v470
  %v671 = vpack.c.b16 %v487, %v479
  %v672 = vpack.c.b16 %v488, %v480
  %v673 = vpack.c.b16 %v489, %v481
  %v674 = vpack.c.b16 %v490, %v482
  %v675 = vpack.c.b16 %v491, %v483
  %v676 = vpack.c.b16 %v492, %v484
  %v677 = vpack.c.b16 %v493, %v485
  %v678 = vpack.c.b16 %v494, %v486
  %v679 = vpack.c.b16 %v503, %v495
  %v680 = vpack.c.b16 %v504, %v496
  %v681 = vpack.c.b16 %v505, %v497
  %v682 = vpack.c.b16 %v506, %v498
  %v683 = vpack.c.b16 %v507, %v499
  %v684 = vpack.c.b16 %v508, %v500
  %v685 = vpack.c.b16 %v509, %v501
  %v686 = vpack.c.b16 %v510, %v502
  %v687 = vpack.c.b16 %v519, %v511
  %v688 = vpack.c.b16 %v520, %v512
  %v689 = vpack.c.b16 %v521, %v513
  %v690 = vpack.c.b16 %v522, %v514
  %v691 = vpack.c.b16 %v523, %v515
  %v692 = vpack.c.b16 %v524, %v516
  %v693 = vpack.c.b16 %v525, %v517
  %v694 = vpack.c.b16 %v526, %v518
  %v695 = vpack.c.b16 %v535, %v527
  %v696 = vpack.c.b16 %v536, %v528
  %v697 = vpack.c.b16 %v537, %v529
  %v698 = vpack.c.b16 %v538, %v530
  %v699 = vpack.c.b16 %v539, %v531
  %v700 = vpack.c.b16 %v540, %v532
  %v701 = vpack.c.b16 %v541, %v533
  %v702 = vpack.c.b16 %v542, %v534
  %v703 = vpack.c.b16 %v551, %v543
  %v704 = vpack.c.b16 %v552, %v544
  %v705 = vpack.c.b16 %v553, %v545
  %v706 = vpack.c.b16 %v554, %v546
  %v707 = vpack.c.b16 %v555, %v547
  %v708 = vpack.c.b16 %v556, %v548
  %v709 = vpack.c.b16 %v557, %v549
  %v710 = vpack.c.b16 %v558, %v550
  %v711 = vpack.c.b16 %v567, %v559
  %v712 = vpack.c.b16 %v568, %v560
  %v713 = vpack.c.b16 %v569, %v561
  %v714 = vpack.c.b16 %v570, %v562
  %v715 = vpack.c.b16 %v571, %v563
  %v716 = vpack.c.b16 %v572, %v564
  %v717 = vpack.c.b16 %v573, %v565
  %v718 = vpack.c.b16 %v574, %v566
  %v719 = vpack.c.b16 %v583, %v575
  %v720 = vpack.c.b16 %v584, %v576
  %v721 = vpack.c.b16 %v585, %v577
  %v722 = vpack.c.b16 %v586, %v578
  %v723 = vpack.c.b16 %v587, %v579
  %v724 = vpack.c.b16 %v588, %v580
  %v725 = vpack.c.b16 %v589, %v581
  %v726 = vpack.c.b16 %v590, %v582
  %v727 = vpack.c.b16 %v599, %v591
  %v728 = vpack.c.b16 %v600, %v592
  %v729 = vpack.c.b16 %v601, %v593
  %v730 = vpack.c.b16 %v602, %v594
  %v731 = vpack.c.b16 %v603, %v595
  %v732 = vpack.c.b16 %v604, %v596
  %v733 = vpack.c.b16 %v605, %v597
  %v734 = vpack.c.b16 %v606, %v598
  %863 = vmatprep.subr.bf16.mxu0 %v664
  %864 = vmatpush1.bf16.msra.mxu0 %v663
  %865 = vmatprep.subr.bf16.mxu0 %v656
  %866 = vmatpush1.bf16.msra.mxu0 %v655
  %867 = vmatprep.subr.bf16.mxu0 %v648
  %868 = vmatpush1.bf16.msra.mxu0 %v647
  %869 = vmatprep.subr.bf16.mxu0 %v640
  %870 = vmatpush1.bf16.msra.mxu0 %v639
  %871 = vmatprep.subr.bf16.mxu0 %v632
  %872 = vmatpush1.bf16.msra.mxu0 %v631
  %873 = vmatprep.subr.bf16.mxu0 %v624
  %874 = vmatpush1.bf16.msra.mxu0 %v623
  %875 = vmatprep.subr.bf16.mxu0 %v616
  %876 = vmatpush1.bf16.msra.mxu0 %v615
  %877 = vmatprep.subr.bf16.mxu0 %v608
  %878 = vmatpush1.bf16.msra.mxu0 %v607
  %879 = vmatprep.subr.bf16.mxu0 %v728
  %880 = vmatpush2.bf16.msra.mxu0 %v727
  %881 = vmatprep.subr.bf16.mxu0 %v720
  %882 = vmatpush2.bf16.msra.mxu0 %v719
  %883 = vmatprep.subr.bf16.mxu0 %v712
  %884 = vmatpush2.bf16.msra.mxu0 %v711
  %885 = vmatprep.subr.bf16.mxu0 %v704
  %886 = vmatpush2.bf16.msra.mxu0 %v703
  %887 = vmatprep.subr.bf16.mxu0 %v696
  %888 = vmatpush2.bf16.msra.mxu0 %v695
  %889 = vmatprep.subr.bf16.mxu0 %v688
  %890 = vmatpush2.bf16.msra.mxu0 %v687
  %891 = vmatprep.subr.bf16.mxu0 %v680
  %892 = vmatpush2.bf16.msra.mxu0 %v679
  %893 = vmatprep.subr.bf16.mxu0 %v672
  %894 = vmatpush2.bf16.msra.mxu0 %v671
  %895 = vmatprep.mubr.bf16.mxu0 %v46
  %896 = vmatmul.mubr.bf16.gmra.mxu0 %v45
  %v897 = vpop.f32.mrf.mxu0
  %v898 = vadd.f32 %v186, %v897
  %v899 = vpop.f32.mrf.mxu0
  %v900 = vadd.f32 %v190, %v899
  %v901 = vpop.f32.mrf.mxu0
  %v902 = vadd.f32 %v186, %v901
  %v903 = vpop.f32.mrf.mxu0
  %v904 = vadd.f32 %v190, %v903
  %905 = vmatprep.mubr.bf16.mxu0 %v48
  %906 = vmatmul.mubr.bf16.gmra.mxu0 %v47
  %v907 = vpop.f32.mrf.mxu0
  %v908 = vadd.f32 %v186, %v907
  %v909 = vpop.f32.mrf.mxu0
  %v910 = vadd.f32 %v190, %v909
  %v911 = vpop.f32.mrf.mxu0
  %v912 = vadd.f32 %v186, %v911
  %v913 = vpop.f32.mrf.mxu0
  %v914 = vadd.f32 %v190, %v913
  %915 = vmatprep.mubr.bf16.mxu0 %v50
  %916 = vmatmul.mubr.bf16.gmra.mxu0 %v49
  %v917 = vpop.f32.mrf.mxu0
  %v918 = vadd.f32 %v186, %v917
  %v919 = vpop.f32.mrf.mxu0
  %v920 = vadd.f32 %v190, %v919
  %v921 = vpop.f32.mrf.mxu0
  %v922 = vadd.f32 %v186, %v921
  %v923 = vpop.f32.mrf.mxu0
  %v924 = vadd.f32 %v190, %v923
  %925 = vmatprep.mubr.bf16.mxu0 %v52
  %926 = vmatmul.mubr.bf16.gmra.mxu0 %v51
  %v927 = vpop.f32.mrf.mxu0
  %v928 = vadd.f32 %v186, %v927
  %v929 = vpop.f32.mrf.mxu0
  %v930 = vadd.f32 %v190, %v929
  %v931 = vpop.f32.mrf.mxu0
  %v932 = vadd.f32 %v186, %v931
  %v933 = vpop.f32.mrf.mxu0
  %v934 = vadd.f32 %v190, %v933
  %935 = vdwg.mxu0
  %936 = vmatprep.subr.bf16.mxu0 %v666
  %937 = vmatpush1.bf16.msra.mxu0 %v665
  %938 = vmatprep.subr.bf16.mxu0 %v658
  %939 = vmatpush1.bf16.msra.mxu0 %v657
  %940 = vmatprep.subr.bf16.mxu0 %v650
  %941 = vmatpush1.bf16.msra.mxu0 %v649
  %942 = vmatprep.subr.bf16.mxu0 %v642
  %943 = vmatpush1.bf16.msra.mxu0 %v641
  %944 = vmatprep.subr.bf16.mxu0 %v634
  %945 = vmatpush1.bf16.msra.mxu0 %v633
  %946 = vmatprep.subr.bf16.mxu0 %v626
  %947 = vmatpush1.bf16.msra.mxu0 %v625
  %948 = vmatprep.subr.bf16.mxu0 %v618
  %949 = vmatpush1.bf16.msra.mxu0 %v617
  %950 = vmatprep.subr.bf16.mxu0 %v610
  %951 = vmatpush1.bf16.msra.mxu0 %v609
  %952 = vmatprep.subr.bf16.mxu0 %v730
  %953 = vmatpush2.bf16.msra.mxu0 %v729
  %954 = vmatprep.subr.bf16.mxu0 %v722
  %955 = vmatpush2.bf16.msra.mxu0 %v721
  %956 = vmatprep.subr.bf16.mxu0 %v714
  %957 = vmatpush2.bf16.msra.mxu0 %v713
  %958 = vmatprep.subr.bf16.mxu0 %v706
  %959 = vmatpush2.bf16.msra.mxu0 %v705
  %960 = vmatprep.subr.bf16.mxu0 %v698
  %961 = vmatpush2.bf16.msra.mxu0 %v697
  %962 = vmatprep.subr.bf16.mxu0 %v690
  %963 = vmatpush2.bf16.msra.mxu0 %v689
  %964 = vmatprep.subr.bf16.mxu0 %v682
  %965 = vmatpush2.bf16.msra.mxu0 %v681
  %966 = vmatprep.subr.bf16.mxu0 %v674
  %967 = vmatpush2.bf16.msra.mxu0 %v673
  %968 = vmatprep.mubr.bf16.mxu0 %v46
  %969 = vmatmul.mubr.bf16.gmra.mxu0 %v45
  %v970 = vpop.f32.mrf.mxu0
  %v971 = vadd.f32 %v194, %v970
  %v972 = vpop.f32.mrf.mxu0
  %v973 = vadd.f32 %v198, %v972
  %v974 = vpop.f32.mrf.mxu0
  %v975 = vadd.f32 %v194, %v974
  %v976 = vpop.f32.mrf.mxu0
  %v977 = vadd.f32 %v198, %v976
  %978 = vmatprep.mubr.bf16.mxu0 %v48
  %979 = vmatmul.mubr.bf16.gmra.mxu0 %v47
  %v980 = vpop.f32.mrf.mxu0
  %v981 = vadd.f32 %v194, %v980
  %v982 = vpop.f32.mrf.mxu0
  %v983 = vadd.f32 %v198, %v982
  %v984 = vpop.f32.mrf.mxu0
  %v985 = vadd.f32 %v194, %v984
  %v986 = vpop.f32.mrf.mxu0
  %v987 = vadd.f32 %v198, %v986
  %988 = vmatprep.mubr.bf16.mxu0 %v50
  %989 = vmatmul.mubr.bf16.gmra.mxu0 %v49
  %v990 = vpop.f32.mrf.mxu0
  %v991 = vadd.f32 %v194, %v990
  %v992 = vpop.f32.mrf.mxu0
  %v993 = vadd.f32 %v198, %v992
  %v994 = vpop.f32.mrf.mxu0
  %v995 = vadd.f32 %v194, %v994
  %v996 = vpop.f32.mrf.mxu0
  %v997 = vadd.f32 %v198, %v996
  %998 = vmatprep.mubr.bf16.mxu0 %v52
  %999 = vmatmul.mubr.bf16.gmra.mxu0 %v51
  %v1000 = vpop.f32.mrf.mxu0
  %v1001 = vadd.f32 %v194, %v1000
  %v1002 = vpop.f32.mrf.mxu0
  %v1003 = vadd.f32 %v198, %v1002
  %v1004 = vpop.f32.mrf.mxu0
  %v1005 = vadd.f32 %v194, %v1004
  %v1006 = vpop.f32.mrf.mxu0
  %v1007 = vadd.f32 %v198, %v1006
  %1008 = vdwg.mxu0
  %1009 = vmatprep.subr.bf16.mxu0 %v668
  %1010 = vmatpush1.bf16.msra.mxu0 %v667
  %1011 = vmatprep.subr.bf16.mxu0 %v660
  %1012 = vmatpush1.bf16.msra.mxu0 %v659
  %1013 = vmatprep.subr.bf16.mxu0 %v652
  %1014 = vmatpush1.bf16.msra.mxu0 %v651
  %1015 = vmatprep.subr.bf16.mxu0 %v644
  %1016 = vmatpush1.bf16.msra.mxu0 %v643
  %1017 = vmatprep.subr.bf16.mxu0 %v636
  %1018 = vmatpush1.bf16.msra.mxu0 %v635
  %1019 = vmatprep.subr.bf16.mxu0 %v628
  %1020 = vmatpush1.bf16.msra.mxu0 %v627
  %1021 = vmatprep.subr.bf16.mxu0 %v620
  %1022 = vmatpush1.bf16.msra.mxu0 %v619
  %1023 = vmatprep.subr.bf16.mxu0 %v612
  %1024 = vmatpush1.bf16.msra.mxu0 %v611
  %1025 = vmatprep.subr.bf16.mxu0 %v732
  %1026 = vmatpush2.bf16.msra.mxu0 %v731
  %1027 = vmatprep.subr.bf16.mxu0 %v724
  %1028 = vmatpush2.bf16.msra.mxu0 %v723
  %1029 = vmatprep.subr.bf16.mxu0 %v716
  %1030 = vmatpush2.bf16.msra.mxu0 %v715
  %1031 = vmatprep.subr.bf16.mxu0 %v708
  %1032 = vmatpush2.bf16.msra.mxu0 %v707
  %1033 = vmatprep.subr.bf16.mxu0 %v700
  %1034 = vmatpush2.bf16.msra.mxu0 %v699
  %1035 = vmatprep.subr.bf16.mxu0 %v692
  %1036 = vmatpush2.bf16.msra.mxu0 %v691
  %1037 = vmatprep.subr.bf16.mxu0 %v684
  %1038 = vmatpush2.bf16.msra.mxu0 %v683
  %1039 = vmatprep.subr.bf16.mxu0 %v676
  %1040 = vmatpush2.bf16.msra.mxu0 %v675
  %1041 = vmatprep.mubr.bf16.mxu0 %v46
  %1042 = vmatmul.mubr.bf16.gmra.mxu0 %v45
  %v1043 = vpop.f32.mrf.mxu0
  %v1044 = vadd.f32 %v202, %v1043
  %v1045 = vpop.f32.mrf.mxu0
  %v1046 = vadd.f32 %v206, %v1045
  %v1047 = vpop.f32.mrf.mxu0
  %v1048 = vadd.f32 %v202, %v1047
  %v1049 = vpop.f32.mrf.mxu0
  %v1050 = vadd.f32 %v206, %v1049
  %1051 = vmatprep.mubr.bf16.mxu0 %v48
  %1052 = vmatmul.mubr.bf16.gmra.mxu0 %v47
  %v1053 = vpop.f32.mrf.mxu0
  %v1054 = vadd.f32 %v202, %v1053
  %v1055 = vpop.f32.mrf.mxu0
  %v1056 = vadd.f32 %v206, %v1055
  %v1057 = vpop.f32.mrf.mxu0
  %v1058 = vadd.f32 %v202, %v1057
  %v1059 = vpop.f32.mrf.mxu0
  %v1060 = vadd.f32 %v206, %v1059
  %1061 = vmatprep.mubr.bf16.mxu0 %v50
  %1062 = vmatmul.mubr.bf16.gmra.mxu0 %v49
  %v1063 = vpop.f32.mrf.mxu0
  %v1064 = vadd.f32 %v202, %v1063
  %v1065 = vpop.f32.mrf.mxu0
  %v1066 = vadd.f32 %v206, %v1065
  %v1067 = vpop.f32.mrf.mxu0
  %v1068 = vadd.f32 %v202, %v1067
  %v1069 = vpop.f32.mrf.mxu0
  %v1070 = vadd.f32 %v206, %v1069
  %1071 = vmatprep.mubr.bf16.mxu0 %v52
  %1072 = vmatmul.mubr.bf16.gmra.mxu0 %v51
  %v1073 = vpop.f32.mrf.mxu0
  %v1074 = vadd.f32 %v202, %v1073
  %v1075 = vpop.f32.mrf.mxu0
  %v1076 = vadd.f32 %v206, %v1075
  %v1077 = vpop.f32.mrf.mxu0
  %v1078 = vadd.f32 %v202, %v1077
  %v1079 = vpop.f32.mrf.mxu0
  %v1080 = vadd.f32 %v206, %v1079
  %1081 = vdwg.mxu0
  %1082 = vmatprep.subr.bf16.mxu0 %v670
  %1083 = vmatpush1.bf16.msra.mxu0 %v669
  %1084 = vmatprep.subr.bf16.mxu0 %v662
  %1085 = vmatpush1.bf16.msra.mxu0 %v661
  %1086 = vmatprep.subr.bf16.mxu0 %v654
  %1087 = vmatpush1.bf16.msra.mxu0 %v653
  %1088 = vmatprep.subr.bf16.mxu0 %v646
  %1089 = vmatpush1.bf16.msra.mxu0 %v645
  %1090 = vmatprep.subr.bf16.mxu0 %v638
  %1091 = vmatpush1.bf16.msra.mxu0 %v637
  %1092 = vmatprep.subr.bf16.mxu0 %v630
  %1093 = vmatpush1.bf16.msra.mxu0 %v629
  %1094 = vmatprep.subr.bf16.mxu0 %v622
  %1095 = vmatpush1.bf16.msra.mxu0 %v621
  %1096 = vmatprep.subr.bf16.mxu0 %v614
  %1097 = vmatpush1.bf16.msra.mxu0 %v613
  %1098 = vmatprep.subr.bf16.mxu0 %v734
  %1099 = vmatpush2.bf16.msra.mxu0 %v733
  %1100 = vmatprep.subr.bf16.mxu0 %v726
  %1101 = vmatpush2.bf16.msra.mxu0 %v725
  %1102 = vmatprep.subr.bf16.mxu0 %v718
  %1103 = vmatpush2.bf16.msra.mxu0 %v717
  %1104 = vmatprep.subr.bf16.mxu0 %v710
  %1105 = vmatpush2.bf16.msra.mxu0 %v709
  %1106 = vmatprep.subr.bf16.mxu0 %v702
  %1107 = vmatpush2.bf16.msra.mxu0 %v701
  %1108 = vmatprep.subr.bf16.mxu0 %v694
  %1109 = vmatpush2.bf16.msra.mxu0 %v693
  %1110 = vmatprep.subr.bf16.mxu0 %v686
  %1111 = vmatpush2.bf16.msra.mxu0 %v685
  %1112 = vmatprep.subr.bf16.mxu0 %v678
  %1113 = vmatpush2.bf16.msra.mxu0 %v677
  %1114 = vmatprep.mubr.bf16.mxu0 %v46
  %1115 = vmatmul.mubr.bf16.gmra.mxu0 %v45
  %v1116 = vpop.f32.mrf.mxu0
  %v1117 = vadd.f32 %v210, %v1116
  %v1118 = vpop.f32.mrf.mxu0
  %v1119 = vadd.f32 %v214, %v1118
  %v1120 = vpop.f32.mrf.mxu0
  %v1121 = vadd.f32 %v210, %v1120
  %v1122 = vpop.f32.mrf.mxu0
  %v1123 = vadd.f32 %v214, %v1122
  %1124 = vmatprep.mubr.bf16.mxu0 %v48
  %1125 = vmatmul.mubr.bf16.gmra.mxu0 %v47
  %v1126 = vpop.f32.mrf.mxu0
  %v1127 = vadd.f32 %v210, %v1126
  %v1128 = vpop.f32.mrf.mxu0
  %v1129 = vadd.f32 %v214, %v1128
  %v1130 = vpop.f32.mrf.mxu0
  %v1131 = vadd.f32 %v210, %v1130
  %v1132 = vpop.f32.mrf.mxu0
  %v1133 = vadd.f32 %v214, %v1132
  %1134 = vmatprep.mubr.bf16.mxu0 %v50
  %1135 = vmatmul.mubr.bf16.gmra.mxu0 %v49
  %v1136 = vpop.f32.mrf.mxu0
  %v1137 = vadd.f32 %v210, %v1136
  %v1138 = vpop.f32.mrf.mxu0
  %v1139 = vadd.f32 %v214, %v1138
  %v1140 = vpop.f32.mrf.mxu0
  %v1141 = vadd.f32 %v210, %v1140
  %v1142 = vpop.f32.mrf.mxu0
  %v1143 = vadd.f32 %v214, %v1142
  %1144 = vmatprep.mubr.bf16.mxu0 %v52
  %1145 = vmatmul.mubr.bf16.gmra.mxu0 %v51
  %v1146 = vpop.f32.mrf.mxu0
  %v1147 = vadd.f32 %v210, %v1146
  %v1148 = vpop.f32.mrf.mxu0
  %v1149 = vadd.f32 %v214, %v1148
  %v1150 = vpop.f32.mrf.mxu0
  %v1151 = vadd.f32 %v210, %v1150
  %v1152 = vpop.f32.mrf.mxu0
  %v1153 = vadd.f32 %v214, %v1152
  %1154 = vdwg.mxu0
  %1155 = vst [vmem:[#allocation2] sm:$0xff] %v898
  %1156 = vst [vmem:[#allocation2 + $0x8] sm:$0xff] %v900
  %1157 = vst [vmem:[#allocation2 + $0x10] sm:$0xff] %v971
  %1158 = vst [vmem:[#allocation2 + $0x18] sm:$0xff] %v973
  %1159 = vst [vmem:[#allocation2 + $0x20] sm:$0xff] %v1044
  %1160 = vst [vmem:[#allocation2 + $0x28] sm:$0xff] %v1046
  %1161 = vst [vmem:[#allocation2 + $0x30] sm:$0xff] %v1117
  %1162 = vst [vmem:[#allocation2 + $0x38] sm:$0xff] %v1119
  %1163 = vst [vmem:[#allocation2 + $0x40] sm:$0xff] %v902
  %1164 = vst [vmem:[#allocation2 + $0x48] sm:$0xff] %v904
  %1165 = vst [vmem:[#allocation2 + $0x50] sm:$0xff] %v975
  %1166 = vst [vmem:[#allocation2 + $0x58] sm:$0xff] %v977
  %1167 = vst [vmem:[#allocation2 + $0x60] sm:$0xff] %v1048
  %1168 = vst [vmem:[#allocation2 + $0x68] sm:$0xff] %v1050
  %1169 = vst [vmem:[#allocation2 + $0x70] sm:$0xff] %v1121
  %1170 = vst [vmem:[#allocation2 + $0x78] sm:$0xff] %v1123
  %1171 = vst [vmem:[#allocation2 + $0x80] sm:$0xff] %v908
  %1172 = vst [vmem:[#allocation2 + $0x88] sm:$0xff] %v910
  %1173 = vst [vmem:[#allocation2 + $0x90] sm:$0xff] %v981
  %1174 = vst [vmem:[#allocation2 + $0x98] sm:$0xff] %v983
  %1175 = vst [vmem:[#allocation2 + $0xa0] sm:$0xff] %v1054
  %1176 = vst [vmem:[#allocation2 + $0xa8] sm:$0xff] %v1056
  %1177 = vst [vmem:[#allocation2 + $0xb0] sm:$0xff] %v1127
  %1178 = vst [vmem:[#allocation2 + $0xb8] sm:$0xff] %v1129
  %1179 = vst [vmem:[#allocation2 + $0xc0] sm:$0xff] %v912
  %1180 = vst [vmem:[#allocation2 + $0xc8] sm:$0xff] %v914
  %1181 = vst [vmem:[#allocation2 + $0xd0] sm:$0xff] %v985
  %1182 = vst [vmem:[#allocation2 + $0xd8] sm:$0xff] %v987
  %1183 = vst [vmem:[#allocation2 + $0xe0] sm:$0xff] %v1058
  %1184 = vst [vmem:[#allocation2 + $0xe8] sm:$0xff] %v1060
  %1185 = vst [vmem:[#allocation2 + $0xf0] sm:$0xff] %v1131
  %1186 = vst [vmem:[#allocation2 + $0xf8] sm:$0xff] %v1133
  %1187 = vst [vmem:[#allocation2 + $0x100] sm:$0xff] %v918
  %1188 = vst [vmem:[#allocation2 + $0x108] sm:$0xff] %v920
  %1189 = vst [vmem:[#allocation2 + $0x110] sm:$0xff] %v991
  %1190 = vst [vmem:[#allocation2 + $0x118] sm:$0xff] %v993
  %1191 = vst [vmem:[#allocation2 + $0x120] sm:$0xff] %v1064
  %1192 = vst [vmem:[#allocation2 + $0x128] sm:$0xff] %v1066
  %1193 = vst [vmem:[#allocation2 + $0x130] sm:$0xff] %v1137
  %1194 = vst [vmem:[#allocation2 + $0x138] sm:$0xff] %v1139
  %1195 = vst [vmem:[#allocation2 + $0x140] sm:$0xff] %v922
  %1196 = vst [vmem:[#allocation2 + $0x148] sm:$0xff] %v924
  %1197 = vst [vmem:[#allocation2 + $0x150] sm:$0xff] %v995
  %1198 = vst [vmem:[#allocation2 + $0x158] sm:$0xff] %v997
  %1199 = vst [vmem:[#allocation2 + $0x160] sm:$0xff] %v1068
  %1200 = vst [vmem:[#allocation2 + $0x168] sm:$0xff] %v1070
  %1201 = vst [vmem:[#allocation2 + $0x170] sm:$0xff] %v1141
  %1202 = vst [vmem:[#allocation2 + $0x178] sm:$0xff] %v1143
  %1203 = vst [vmem:[#allocation2 + $0x180] sm:$0xff] %v928
  %1204 = vst [vmem:[#allocation2 + $0x188] sm:$0xff] %v930
  %1205 = vst [vmem:[#allocation2 + $0x190] sm:$0xff] %v1001
  %1206 = vst [vmem:[#allocation2 + $0x198] sm:$0xff] %v1003
  %1207 = vst [vmem:[#allocation2 + $0x1a0] sm:$0xff] %v1074
  %1208 = vst [vmem:[#allocation2 + $0x1a8] sm:$0xff] %v1076
  %1209 = vst [vmem:[#allocation2 + $0x1b0] sm:$0xff] %v1147
  %1210 = vst [vmem:[#allocation2 + $0x1b8] sm:$0xff] %v1149
  %1211 = vst [vmem:[#allocation2 + $0x1c0] sm:$0xff] %v932
  %1212 = vst [vmem:[#allocation2 + $0x1c8] sm:$0xff] %v934
  %1213 = vst [vmem:[#allocation2 + $0x1d0] sm:$0xff] %v1005
  %1214 = vst [vmem:[#allocation2 + $0x1d8] sm:$0xff] %v1007
  %1215 = vst [vmem:[#allocation2 + $0x1e0] sm:$0xff] %v1078
  %1216 = vst [vmem:[#allocation2 + $0x1e8] sm:$0xff] %v1080
  %1217 = vst [vmem:[#allocation2 + $0x1f0] sm:$0xff] %v1151
  %1218 = vst [vmem:[#allocation2 + $0x1f8] sm:$0xff] %v1153
  %v1219 = vld [vmem:[%s4] sm:$0xff]
  %v1220 = vld [vmem:[%s4 + $0x8] sm:$0xff]
  %v1221 = vld [vmem:[%s4 + $0x10] sm:$0xff]
  %v1222 = vld [vmem:[%s4 + $0x18] sm:$0xff]
  %v1223 = vld [vmem:[%s4 + $0x20] sm:$0xff]
  %v1224 = vld [vmem:[%s4 + $0x28] sm:$0xff]
  %v1225 = vld [vmem:[%s4 + $0x30] sm:$0xff]
  %v1226 = vld [vmem:[%s4 + $0x38] sm:$0xff]
  %v1227 = vld [vmem:[%s4 + $0x40] sm:$0xff]
  %v1228 = vld [vmem:[%s4 + $0x48] sm:$0xff]
  %v1229 = vld [vmem:[%s4 + $0x50] sm:$0xff]
  %v1230 = vld [vmem:[%s4 + $0x58] sm:$0xff]
  %v1231 = vld [vmem:[%s4 + $0x60] sm:$0xff]
  %v1232 = vld [vmem:[%s4 + $0x68] sm:$0xff]
  %v1233 = vld [vmem:[%s4 + $0x70] sm:$0xff]
  %v1234 = vld [vmem:[%s4 + $0x78] sm:$0xff]
  %v1235 = vld [vmem:[%s4 + $0x80] sm:$0xff]
  %v1236 = vld [vmem:[%s4 + $0x88] sm:$0xff]
  %v1237 = vld [vmem:[%s4 + $0x90] sm:$0xff]
  %v1238 = vld [vmem:[%s4 + $0x98] sm:$0xff]
  %v1239 = vld [vmem:[%s4 + $0xa0] sm:$0xff]
  %v1240 = vld [vmem:[%s4 + $0xa8] sm:$0xff]
  %v1241 = vld [vmem:[%s4 + $0xb0] sm:$0xff]
  %v1242 = vld [vmem:[%s4 + $0xb8] sm:$0xff]
  %v1243 = vld [vmem:[%s4 + $0xc0] sm:$0xff]
  %v1244 = vld [vmem:[%s4 + $0xc8] sm:$0xff]
  %v1245 = vld [vmem:[%s4 + $0xd0] sm:$0xff]
  %v1246 = vld [vmem:[%s4 + $0xd8] sm:$0xff]
  %v1247 = vld [vmem:[%s4 + $0xe0] sm:$0xff]
  %v1248 = vld [vmem:[%s4 + $0xe8] sm:$0xff]
  %v1249 = vld [vmem:[%s4 + $0xf0] sm:$0xff]
  %v1250 = vld [vmem:[%s4 + $0xf8] sm:$0xff]
  %v1251 = vld [vmem:[%s4 + $0x100] sm:$0xff]
  %v1252 = vld [vmem:[%s4 + $0x108] sm:$0xff]
  %v1253 = vld [vmem:[%s4 + $0x110] sm:$0xff]
  %v1254 = vld [vmem:[%s4 + $0x118] sm:$0xff]
  %v1255 = vld [vmem:[%s4 + $0x120] sm:$0xff]
  %v1256 = vld [vmem:[%s4 + $0x128] sm:$0xff]
  %v1257 = vld [vmem:[%s4 + $0x130] sm:$0xff]
  %v1258 = vld [vmem:[%s4 + $0x138] sm:$0xff]
  %v1259 = vld [vmem:[%s4 + $0x140] sm:$0xff]
  %v1260 = vld [vmem:[%s4 + $0x148] sm:$0xff]
  %v1261 = vld [vmem:[%s4 + $0x150] sm:$0xff]
  %v1262 = vld [vmem:[%s4 + $0x158] sm:$0xff]
  %v1263 = vld [vmem:[%s4 + $0x160] sm:$0xff]
  %v1264 = vld [vmem:[%s4 + $0x168] sm:$0xff]
  %v1265 = vld [vmem:[%s4 + $0x170] sm:$0xff]
  %v1266 = vld [vmem:[%s4 + $0x178] sm:$0xff]
  %v1267 = vld [vmem:[%s4 + $0x180] sm:$0xff]
  %v1268 = vld [vmem:[%s4 + $0x188] sm:$0xff]
  %v1269 = vld [vmem:[%s4 + $0x190] sm:$0xff]
  %v1270 = vld [vmem:[%s4 + $0x198] sm:$0xff]
  %v1271 = vld [vmem:[%s4 + $0x1a0] sm:$0xff]
  %v1272 = vld [vmem:[%s4 + $0x1a8] sm:$0xff]
  %v1273 = vld [vmem:[%s4 + $0x1b0] sm:$0xff]
  %v1274 = vld [vmem:[%s4 + $0x1b8] sm:$0xff]
  %v1275 = vld [vmem:[%s4 + $0x1c0] sm:$0xff]
  %v1276 = vld [vmem:[%s4 + $0x1c8] sm:$0xff]
  %v1277 = vld [vmem:[%s4 + $0x1d0] sm:$0xff]
  %v1278 = vld [vmem:[%s4 + $0x1d8] sm:$0xff]
  %v1279 = vld [vmem:[%s4 + $0x1e0] sm:$0xff]
  %v1280 = vld [vmem:[%s4 + $0x1e8] sm:$0xff]
  %v1281 = vld [vmem:[%s4 + $0x1f0] sm:$0xff]
  %v1282 = vld [vmem:[%s4 + $0x1f8] sm:$0xff]
  %v1283 = vld [vmem:[%s4 + $0x200] sm:$0xff]
  %v1284 = vld [vmem:[%s4 + $0x208] sm:$0xff]
  %v1285 = vld [vmem:[%s4 + $0x210] sm:$0xff]
  %v1286 = vld [vmem:[%s4 + $0x218] sm:$0xff]
  %v1287 = vld [vmem:[%s4 + $0x220] sm:$0xff]
  %v1288 = vld [vmem:[%s4 + $0x228] sm:$0xff]
  %v1289 = vld [vmem:[%s4 + $0x230] sm:$0xff]
  %v1290 = vld [vmem:[%s4 + $0x238] sm:$0xff]
  %v1291 = vld [vmem:[%s4 + $0x240] sm:$0xff]
  %v1292 = vld [vmem:[%s4 + $0x248] sm:$0xff]
  %v1293 = vld [vmem:[%s4 + $0x250] sm:$0xff]
  %v1294 = vld [vmem:[%s4 + $0x258] sm:$0xff]
  %v1295 = vld [vmem:[%s4 + $0x260] sm:$0xff]
  %v1296 = vld [vmem:[%s4 + $0x268] sm:$0xff]
  %v1297 = vld [vmem:[%s4 + $0x270] sm:$0xff]
  %v1298 = vld [vmem:[%s4 + $0x278] sm:$0xff]
  %v1299 = vld [vmem:[%s4 + $0x280] sm:$0xff]
  %v1300 = vld [vmem:[%s4 + $0x288] sm:$0xff]
  %v1301 = vld [vmem:[%s4 + $0x290] sm:$0xff]
  %v1302 = vld [vmem:[%s4 + $0x298] sm:$0xff]
  %v1303 = vld [vmem:[%s4 + $0x2a0] sm:$0xff]
  %v1304 = vld [vmem:[%s4 + $0x2a8] sm:$0xff]
  %v1305 = vld [vmem:[%s4 + $0x2b0] sm:$0xff]
  %v1306 = vld [vmem:[%s4 + $0x2b8] sm:$0xff]
  %v1307 = vld [vmem:[%s4 + $0x2c0] sm:$0xff]
  %v1308 = vld [vmem:[%s4 + $0x2c8] sm:$0xff]
  %v1309 = vld [vmem:[%s4 + $0x2d0] sm:$0xff]
  %v1310 = vld [vmem:[%s4 + $0x2d8] sm:$0xff]
  %v1311 = vld [vmem:[%s4 + $0x2e0] sm:$0xff]
  %v1312 = vld [vmem:[%s4 + $0x2e8] sm:$0xff]
  %v1313 = vld [vmem:[%s4 + $0x2f0] sm:$0xff]
  %v1314 = vld [vmem:[%s4 + $0x2f8] sm:$0xff]
  %v1315 = vld [vmem:[%s4 + $0x300] sm:$0xff]
  %v1316 = vld [vmem:[%s4 + $0x308] sm:$0xff]
  %v1317 = vld [vmem:[%s4 + $0x310] sm:$0xff]
  %v1318 = vld [vmem:[%s4 + $0x318] sm:$0xff]
  %v1319 = vld [vmem:[%s4 + $0x320] sm:$0xff]
  %v1320 = vld [vmem:[%s4 + $0x328] sm:$0xff]
  %v1321 = vld [vmem:[%s4 + $0x330] sm:$0xff]
  %v1322 = vld [vmem:[%s4 + $0x338] sm:$0xff]
  %v1323 = vld [vmem:[%s4 + $0x340] sm:$0xff]
  %v1324 = vld [vmem:[%s4 + $0x348] sm:$0xff]
  %v1325 = vld [vmem:[%s4 + $0x350] sm:$0xff]
  %v1326 = vld [vmem:[%s4 + $0x358] sm:$0xff]
  %v1327 = vld [vmem:[%s4 + $0x360] sm:$0xff]
  %v1328 = vld [vmem:[%s4 + $0x368] sm:$0xff]
  %v1329 = vld [vmem:[%s4 + $0x370] sm:$0xff]
  %v1330 = vld [vmem:[%s4 + $0x378] sm:$0xff]
  %v1331 = vld [vmem:[%s4 + $0x380] sm:$0xff]
  %v1332 = vld [vmem:[%s4 + $0x388] sm:$0xff]
  %v1333 = vld [vmem:[%s4 + $0x390] sm:$0xff]
  %v1334 = vld [vmem:[%s4 + $0x398] sm:$0xff]
  %v1335 = vld [vmem:[%s4 + $0x3a0] sm:$0xff]
  %v1336 = vld [vmem:[%s4 + $0x3a8] sm:$0xff]
  %v1337 = vld [vmem:[%s4 + $0x3b0] sm:$0xff]
  %v1338 = vld [vmem:[%s4 + $0x3b8] sm:$0xff]
  %v1339 = vld [vmem:[%s4 + $0x3c0] sm:$0xff]
  %v1340 = vld [vmem:[%s4 + $0x3c8] sm:$0xff]
  %v1341 = vld [vmem:[%s4 + $0x3d0] sm:$0xff]
  %v1342 = vld [vmem:[%s4 + $0x3d8] sm:$0xff]
  %v1343 = vld [vmem:[%s4 + $0x3e0] sm:$0xff]
  %v1344 = vld [vmem:[%s4 + $0x3e8] sm:$0xff]
  %v1345 = vld [vmem:[%s4 + $0x3f0] sm:$0xff]
  %v1346 = vld [vmem:[%s4 + $0x3f8] sm:$0xff]
  %v1347 = vld [vmem:[%s1] sm:$0xff]
  %v1348 = vld [vmem:[%s1 + $0x8] sm:$0xff]
  %v1349 = vld [vmem:[%s2] sm:$0xff]
  %v1350 = vld [vmem:[%s2 + $0x8] sm:$0xff]
  %v1351 = vld [vmem:[#allocation2] sm:$0xff]
  %v1352 = vld [vmem:[#allocation2 + $0x8] sm:$0xff]
  %v1353 = vld [vmem:[#allocation2 + $0x10] sm:$0xff]
  %v1354 = vld [vmem:[#allocation2 + $0x18] sm:$0xff]
  %v1355 = vld [vmem:[#allocation2 + $0x20] sm:$0xff]
  %v1356 = vld [vmem:[#allocation2 + $0x28] sm:$0xff]
  %v1357 = vld [vmem:[#allocation2 + $0x30] sm:$0xff]
  %v1358 = vld [vmem:[#allocation2 + $0x38] sm:$0xff]
  %v1359 = vpack.c.bf16 %v1347, %v1347
  %v1360 = vpack.c.bf16 %v1348, %v1348
  %v1489 = vunpack.c.l.b16 %v1219
  %v1490 = vunpack.c.h.b16 %v1219
  %v1491 = vunpack.c.l.b16 %v1220
  %v1492 = vunpack.c.h.b16 %v1220
  %v1493 = vunpack.c.l.b16 %v1221
  %v1494 = vunpack.c.h.b16 %v1221
  %v1495 = vunpack.c.l.b16 %v1222
  %v1496 = vunpack.c.h.b16 %v1222
  %v1497 = vunpack.c.l.b16 %v1223
  %v1498 = vunpack.c.h.b16 %v1223
  %v1499 = vunpack.c.l.b16 %v1224
  %v1500 = vunpack.c.h.b16 %v1224
  %v1501 = vunpack.c.l.b16 %v1225
  %v1502 = vunpack.c.h.b16 %v1225
  %v1503 = vunpack.c.l.b16 %v1226
  %v1504 = vunpack.c.h.b16 %v1226
  %v1505 = vunpack.c.l.b16 %v1227
  %v1506 = vunpack.c.h.b16 %v1227
  %v1507 = vunpack.c.l.b16 %v1228
  %v1508 = vunpack.c.h.b16 %v1228
  %v1509 = vunpack.c.l.b16 %v1229
  %v1510 = vunpack.c.h.b16 %v1229
  %v1511 = vunpack.c.l.b16 %v1230
  %v1512 = vunpack.c.h.b16 %v1230
  %v1513 = vunpack.c.l.b16 %v1231
  %v1514 = vunpack.c.h.b16 %v1231
  %v1515 = vunpack.c.l.b16 %v1232
  %v1516 = vunpack.c.h.b16 %v1232
  %v1517 = vunpack.c.l.b16 %v1233
  %v1518 = vunpack.c.h.b16 %v1233
  %v1519 = vunpack.c.l.b16 %v1234
  %v1520 = vunpack.c.h.b16 %v1234
  %v1521 = vunpack.c.l.b16 %v1235
  %v1522 = vunpack.c.h.b16 %v1235
  %v1523 = vunpack.c.l.b16 %v1236
  %v1524 = vunpack.c.h.b16 %v1236
  %v1525 = vunpack.c.l.b16 %v1237
  %v1526 = vunpack.c.h.b16 %v1237
  %v1527 = vunpack.c.l.b16 %v1238
  %v1528 = vunpack.c.h.b16 %v1238
  %v1529 = vunpack.c.l.b16 %v1239
  %v1530 = vunpack.c.h.b16 %v1239
  %v1531 = vunpack.c.l.b16 %v1240
  %v1532 = vunpack.c.h.b16 %v1240
  %v1533 = vunpack.c.l.b16 %v1241
  %v1534 = vunpack.c.h.b16 %v1241
  %v1535 = vunpack.c.l.b16 %v1242
  %v1536 = vunpack.c.h.b16 %v1242
  %v1537 = vunpack.c.l.b16 %v1243
  %v1538 = vunpack.c.h.b16 %v1243
  %v1539 = vunpack.c.l.b16 %v1244
  %v1540 = vunpack.c.h.b16 %v1244
  %v1541 = vunpack.c.l.b16 %v1245
  %v1542 = vunpack.c.h.b16 %v1245
  %v1543 = vunpack.c.l.b16 %v1246
  %v1544 = vunpack.c.h.b16 %v1246
  %v1545 = vunpack.c.l.b16 %v1247
  %v1546 = vunpack.c.h.b16 %v1247
  %v1547 = vunpack.c.l.b16 %v1248
  %v1548 = vunpack.c.h.b16 %v1248
  %v1549 = vunpack.c.l.b16 %v1249
  %v1550 = vunpack.c.h.b16 %v1249
  %v1551 = vunpack.c.l.b16 %v1250
  %v1552 = vunpack.c.h.b16 %v1250
  %v1553 = vunpack.c.l.b16 %v1251
  %v1554 = vunpack.c.h.b16 %v1251
  %v1555 = vunpack.c.l.b16 %v1252
  %v1556 = vunpack.c.h.b16 %v1252
  %v1557 = vunpack.c.l.b16 %v1253
  %v1558 = vunpack.c.h.b16 %v1253
  %v1559 = vunpack.c.l.b16 %v1254
  %v1560 = vunpack.c.h.b16 %v1254
  %v1561 = vunpack.c.l.b16 %v1255
  %v1562 = vunpack.c.h.b16 %v1255
  %v1563 = vunpack.c.l.b16 %v1256
  %v1564 = vunpack.c.h.b16 %v1256
  %v1565 = vunpack.c.l.b16 %v1257
  %v1566 = vunpack.c.h.b16 %v1257
  %v1567 = vunpack.c.l.b16 %v1258
  %v1568 = vunpack.c.h.b16 %v1258
  %v1569 = vunpack.c.l.b16 %v1259
  %v1570 = vunpack.c.h.b16 %v1259
  %v1571 = vunpack.c.l.b16 %v1260
  %v1572 = vunpack.c.h.b16 %v1260
  %v1573 = vunpack.c.l.b16 %v1261
  %v1574 = vunpack.c.h.b16 %v1261
  %v1575 = vunpack.c.l.b16 %v1262
  %v1576 = vunpack.c.h.b16 %v1262
  %v1577 = vunpack.c.l.b16 %v1263
  %v1578 = vunpack.c.h.b16 %v1263
  %v1579 = vunpack.c.l.b16 %v1264
  %v1580 = vunpack.c.h.b16 %v1264
  %v1581 = vunpack.c.l.b16 %v1265
  %v1582 = vunpack.c.h.b16 %v1265
  %v1583 = vunpack.c.l.b16 %v1266
  %v1584 = vunpack.c.h.b16 %v1266
  %v1585 = vunpack.c.l.b16 %v1267
  %v1586 = vunpack.c.h.b16 %v1267
  %v1587 = vunpack.c.l.b16 %v1268
  %v1588 = vunpack.c.h.b16 %v1268
  %v1589 = vunpack.c.l.b16 %v1269
  %v1590 = vunpack.c.h.b16 %v1269
  %v1591 = vunpack.c.l.b16 %v1270
  %v1592 = vunpack.c.h.b16 %v1270
  %v1593 = vunpack.c.l.b16 %v1271
  %v1594 = vunpack.c.h.b16 %v1271
  %v1595 = vunpack.c.l.b16 %v1272
  %v1596 = vunpack.c.h.b16 %v1272
  %v1597 = vunpack.c.l.b16 %v1273
  %v1598 = vunpack.c.h.b16 %v1273
  %v1599 = vunpack.c.l.b16 %v1274
  %v1600 = vunpack.c.h.b16 %v1274
  %v1601 = vunpack.c.l.b16 %v1275
  %v1602 = vunpack.c.h.b16 %v1275
  %v1603 = vunpack.c.l.b16 %v1276
  %v1604 = vunpack.c.h.b16 %v1276
  %v1605 = vunpack.c.l.b16 %v1277
  %v1606 = vunpack.c.h.b16 %v1277
  %v1607 = vunpack.c.l.b16 %v1278
  %v1608 = vunpack.c.h.b16 %v1278
  %v1609 = vunpack.c.l.b16 %v1279
  %v1610 = vunpack.c.h.b16 %v1279
  %v1611 = vunpack.c.l.b16 %v1280
  %v1612 = vunpack.c.h.b16 %v1280
  %v1613 = vunpack.c.l.b16 %v1281
  %v1614 = vunpack.c.h.b16 %v1281
  %v1615 = vunpack.c.l.b16 %v1282
  %v1616 = vunpack.c.h.b16 %v1282
  %v1617 = vunpack.c.l.b16 %v1283
  %v1618 = vunpack.c.h.b16 %v1283
  %v1619 = vunpack.c.l.b16 %v1284
  %v1620 = vunpack.c.h.b16 %v1284
  %v1621 = vunpack.c.l.b16 %v1285
  %v1622 = vunpack.c.h.b16 %v1285
  %v1623 = vunpack.c.l.b16 %v1286
  %v1624 = vunpack.c.h.b16 %v1286
  %v1625 = vunpack.c.l.b16 %v1287
  %v1626 = vunpack.c.h.b16 %v1287
  %v1627 = vunpack.c.l.b16 %v1288
  %v1628 = vunpack.c.h.b16 %v1288
  %v1629 = vunpack.c.l.b16 %v1289
  %v1630 = vunpack.c.h.b16 %v1289
  %v1631 = vunpack.c.l.b16 %v1290
  %v1632 = vunpack.c.h.b16 %v1290
  %v1633 = vunpack.c.l.b16 %v1291
  %v1634 = vunpack.c.h.b16 %v1291
  %v1635 = vunpack.c.l.b16 %v1292
  %v1636 = vunpack.c.h.b16 %v1292
  %v1637 = vunpack.c.l.b16 %v1293
  %v1638 = vunpack.c.h.b16 %v1293
  %v1639 = vunpack.c.l.b16 %v1294
  %v1640 = vunpack.c.h.b16 %v1294
  %v1641 = vunpack.c.l.b16 %v1295
  %v1642 = vunpack.c.h.b16 %v1295
  %v1643 = vunpack.c.l.b16 %v1296
  %v1644 = vunpack.c.h.b16 %v1296
  %v1645 = vunpack.c.l.b16 %v1297
  %v1646 = vunpack.c.h.b16 %v1297
  %v1647 = vunpack.c.l.b16 %v1298
  %v1648 = vunpack.c.h.b16 %v1298
  %v1649 = vunpack.c.l.b16 %v1299
  %v1650 = vunpack.c.h.b16 %v1299
  %v1651 = vunpack.c.l.b16 %v1300
  %v1652 = vunpack.c.h.b16 %v1300
  %v1653 = vunpack.c.l.b16 %v1301
  %v1654 = vunpack.c.h.b16 %v1301
  %v1655 = vunpack.c.l.b16 %v1302
  %v1656 = vunpack.c.h.b16 %v1302
  %v1657 = vunpack.c.l.b16 %v1303
  %v1658 = vunpack.c.h.b16 %v1303
  %v1659 = vunpack.c.l.b16 %v1304
  %v1660 = vunpack.c.h.b16 %v1304
  %v1661 = vunpack.c.l.b16 %v1305
  %v1662 = vunpack.c.h.b16 %v1305
  %v1663 = vunpack.c.l.b16 %v1306
  %v1664 = vunpack.c.h.b16 %v1306
  %v1665 = vunpack.c.l.b16 %v1307
  %v1666 = vunpack.c.h.b16 %v1307
  %v1667 = vunpack.c.l.b16 %v1308
  %v1668 = vunpack.c.h.b16 %v1308
  %v1669 = vunpack.c.l.b16 %v1309
  %v1670 = vunpack.c.h.b16 %v1309
  %v1671 = vunpack.c.l.b16 %v1310
  %v1672 = vunpack.c.h.b16 %v1310
  %v1673 = vunpack.c.l.b16 %v1311
  %v1674 = vunpack.c.h.b16 %v1311
  %v1675 = vunpack.c.l.b16 %v1312
  %v1676 = vunpack.c.h.b16 %v1312
  %v1677 = vunpack.c.l.b16 %v1313
  %v1678 = vunpack.c.h.b16 %v1313
  %v1679 = vunpack.c.l.b16 %v1314
  %v1680 = vunpack.c.h.b16 %v1314
  %v1681 = vunpack.c.l.b16 %v1315
  %v1682 = vunpack.c.h.b16 %v1315
  %v1683 = vunpack.c.l.b16 %v1316
  %v1684 = vunpack.c.h.b16 %v1316
  %v1685 = vunpack.c.l.b16 %v1317
  %v1686 = vunpack.c.h.b16 %v1317
  %v1687 = vunpack.c.l.b16 %v1318
  %v1688 = vunpack.c.h.b16 %v1318
  %v1689 = vunpack.c.l.b16 %v1319
  %v1690 = vunpack.c.h.b16 %v1319
  %v1691 = vunpack.c.l.b16 %v1320
  %v1692 = vunpack.c.h.b16 %v1320
  %v1693 = vunpack.c.l.b16 %v1321
  %v1694 = vunpack.c.h.b16 %v1321
  %v1695 = vunpack.c.l.b16 %v1322
  %v1696 = vunpack.c.h.b16 %v1322
  %v1697 = vunpack.c.l.b16 %v1323
  %v1698 = vunpack.c.h.b16 %v1323
  %v1699 = vunpack.c.l.b16 %v1324
  %v1700 = vunpack.c.h.b16 %v1324
  %v1701 = vunpack.c.l.b16 %v1325
  %v1702 = vunpack.c.h.b16 %v1325
  %v1703 = vunpack.c.l.b16 %v1326
  %v1704 = vunpack.c.h.b16 %v1326
  %v1705 = vunpack.c.l.b16 %v1327
  %v1706 = vunpack.c.h.b16 %v1327
  %v1707 = vunpack.c.l.b16 %v1328
  %v1708 = vunpack.c.h.b16 %v1328
  %v1709 = vunpack.c.l.b16 %v1329
  %v1710 = vunpack.c.h.b16 %v1329
  %v1711 = vunpack.c.l.b16 %v1330
  %v1712 = vunpack.c.h.b16 %v1330
  %v1713 = vunpack.c.l.b16 %v1331
  %v1714 = vunpack.c.h.b16 %v1331
  %v1715 = vunpack.c.l.b16 %v1332
  %v1716 = vunpack.c.h.b16 %v1332
  %v1717 = vunpack.c.l.b16 %v1333
  %v1718 = vunpack.c.h.b16 %v1333
  %v1719 = vunpack.c.l.b16 %v1334
  %v1720 = vunpack.c.h.b16 %v1334
  %v1721 = vunpack.c.l.b16 %v1335
  %v1722 = vunpack.c.h.b16 %v1335
  %v1723 = vunpack.c.l.b16 %v1336
  %v1724 = vunpack.c.h.b16 %v1336
  %v1725 = vunpack.c.l.b16 %v1337
  %v1726 = vunpack.c.h.b16 %v1337
  %v1727 = vunpack.c.l.b16 %v1338
  %v1728 = vunpack.c.h.b16 %v1338
  %v1729 = vunpack.c.l.b16 %v1339
  %v1730 = vunpack.c.h.b16 %v1339
  %v1731 = vunpack.c.l.b16 %v1340
  %v1732 = vunpack.c.h.b16 %v1340
  %v1733 = vunpack.c.l.b16 %v1341
  %v1734 = vunpack.c.h.b16 %v1341
  %v1735 = vunpack.c.l.b16 %v1342
  %v1736 = vunpack.c.h.b16 %v1342
  %v1737 = vunpack.c.l.b16 %v1343
  %v1738 = vunpack.c.h.b16 %v1343
  %v1739 = vunpack.c.l.b16 %v1344
  %v1740 = vunpack.c.h.b16 %v1344
  %v1741 = vunpack.c.l.b16 %v1345
  %v1742 = vunpack.c.h.b16 %v1345
  %v1743 = vunpack.c.l.b16 %v1346
  %v1744 = vunpack.c.h.b16 %v1346
  %v1745 = vpack.c.b16 %v1497, %v1489
  %v1746 = vpack.c.b16 %v1498, %v1490
  %v1747 = vpack.c.b16 %v1499, %v1491
  %v1748 = vpack.c.b16 %v1500, %v1492
  %v1749 = vpack.c.b16 %v1501, %v1493
  %v1750 = vpack.c.b16 %v1502, %v1494
  %v1751 = vpack.c.b16 %v1503, %v1495
  %v1752 = vpack.c.b16 %v1504, %v1496
  %v1753 = vpack.c.b16 %v1513, %v1505
  %v1754 = vpack.c.b16 %v1514, %v1506
  %v1755 = vpack.c.b16 %v1515, %v1507
  %v1756 = vpack.c.b16 %v1516, %v1508
  %v1757 = vpack.c.b16 %v1517, %v1509
  %v1758 = vpack.c.b16 %v1518, %v1510
  %v1759 = vpack.c.b16 %v1519, %v1511
  %v1760 = vpack.c.b16 %v1520, %v1512
  %v1761 = vpack.c.b16 %v1529, %v1521
  %v1762 = vpack.c.b16 %v1530, %v1522
  %v1763 = vpack.c.b16 %v1531, %v1523
  %v1764 = vpack.c.b16 %v1532, %v1524
  %v1765 = vpack.c.b16 %v1533, %v1525
  %v1766 = vpack.c.b16 %v1534, %v1526
  %v1767 = vpack.c.b16 %v1535, %v1527
  %v1768 = vpack.c.b16 %v1536, %v1528
  %v1769 = vpack.c.b16 %v1545, %v1537
  %v1770 = vpack.c.b16 %v1546, %v1538
  %v1771 = vpack.c.b16 %v1547, %v1539
  %v1772 = vpack.c.b16 %v1548, %v1540
  %v1773 = vpack.c.b16 %v1549, %v1541
  %v1774 = vpack.c.b16 %v1550, %v1542
  %v1775 = vpack.c.b16 %v1551, %v1543
  %v1776 = vpack.c.b16 %v1552, %v1544
  %v1777 = vpack.c.b16 %v1561, %v1553
  %v1778 = vpack.c.b16 %v1562, %v1554
  %v1779 = vpack.c.b16 %v1563, %v1555
  %v1780 = vpack.c.b16 %v1564, %v1556
  %v1781 = vpack.c.b16 %v1565, %v1557
  %v1782 = vpack.c.b16 %v1566, %v1558
  %v1783 = vpack.c.b16 %v1567, %v1559
  %v1784 = vpack.c.b16 %v1568, %v1560
  %v1785 = vpack.c.b16 %v1577, %v1569
  %v1786 = vpack.c.b16 %v1578, %v1570
  %v1787 = vpack.c.b16 %v1579, %v1571
  %v1788 = vpack.c.b16 %v1580, %v1572
  %v1789 = vpack.c.b16 %v1581, %v1573
  %v1790 = vpack.c.b16 %v1582, %v1574
  %v1791 = vpack.c.b16 %v1583, %v1575
  %v1792 = vpack.c.b16 %v1584, %v1576
  %v1793 = vpack.c.b16 %v1593, %v1585
  %v1794 = vpack.c.b16 %v1594, %v1586
  %v1795 = vpack.c.b16 %v1595, %v1587
  %v1796 = vpack.c.b16 %v1596, %v1588
  %v1797 = vpack.c.b16 %v1597, %v1589
  %v1798 = vpack.c.b16 %v1598, %v1590
  %v1799 = vpack.c.b16 %v1599, %v1591
  %v1800 = vpack.c.b16 %v1600, %v1592
  %v1801 = vpack.c.b16 %v1609, %v1601
  %v1802 = vpack.c.b16 %v1610, %v1602
  %v1803 = vpack.c.b16 %v1611, %v1603
  %v1804 = vpack.c.b16 %v1612, %v1604
  %v1805 = vpack.c.b16 %v1613, %v1605
  %v1806 = vpack.c.b16 %v1614, %v1606
  %v1807 = vpack.c.b16 %v1615, %v1607
  %v1808 = vpack.c.b16 %v1616, %v1608
  %v1809 = vpack.c.b16 %v1625, %v1617
  %v1810 = vpack.c.b16 %v1626, %v1618
  %v1811 = vpack.c.b16 %v1627, %v1619
  %v1812 = vpack.c.b16 %v1628, %v1620
  %v1813 = vpack.c.b16 %v1629, %v1621
  %v1814 = vpack.c.b16 %v1630, %v1622
  %v1815 = vpack.c.b16 %v1631, %v1623
  %v1816 = vpack.c.b16 %v1632, %v1624
  %v1817 = vpack.c.b16 %v1641, %v1633
  %v1818 = vpack.c.b16 %v1642, %v1634
  %v1819 = vpack.c.b16 %v1643, %v1635
  %v1820 = vpack.c.b16 %v1644, %v1636
  %v1821 = vpack.c.b16 %v1645, %v1637
  %v1822 = vpack.c.b16 %v1646, %v1638
  %v1823 = vpack.c.b16 %v1647, %v1639
  %v1824 = vpack.c.b16 %v1648, %v1640
  %v1825 = vpack.c.b16 %v1657, %v1649
  %v1826 = vpack.c.b16 %v1658, %v1650
  %v1827 = vpack.c.b16 %v1659, %v1651
  %v1828 = vpack.c.b16 %v1660, %v1652
  %v1829 = vpack.c.b16 %v1661, %v1653
  %v1830 = vpack.c.b16 %v1662, %v1654
  %v1831 = vpack.c.b16 %v1663, %v1655
  %v1832 = vpack.c.b16 %v1664, %v1656
  %v1833 = vpack.c.b16 %v1673, %v1665
  %v1834 = vpack.c.b16 %v1674, %v1666
  %v1835 = vpack.c.b16 %v1675, %v1667
  %v1836 = vpack.c.b16 %v1676, %v1668
  %v1837 = vpack.c.b16 %v1677, %v1669
  %v1838 = vpack.c.b16 %v1678, %v1670
  %v1839 = vpack.c.b16 %v1679, %v1671
  %v1840 = vpack.c.b16 %v1680, %v1672
  %v1841 = vpack.c.b16 %v1689, %v1681
  %v1842 = vpack.c.b16 %v1690, %v1682
  %v1843 = vpack.c.b16 %v1691, %v1683
  %v1844 = vpack.c.b16 %v1692, %v1684
  %v1845 = vpack.c.b16 %v1693, %v1685
  %v1846 = vpack.c.b16 %v1694, %v1686
  %v1847 = vpack.c.b16 %v1695, %v1687
  %v1848 = vpack.c.b16 %v1696, %v1688
  %v1849 = vpack.c.b16 %v1705, %v1697
  %v1850 = vpack.c.b16 %v1706, %v1698
  %v1851 = vpack.c.b16 %v1707, %v1699
  %v1852 = vpack.c.b16 %v1708, %v1700
  %v1853 = vpack.c.b16 %v1709, %v1701
  %v1854 = vpack.c.b16 %v1710, %v1702
  %v1855 = vpack.c.b16 %v1711, %v1703
  %v1856 = vpack.c.b16 %v1712, %v1704
  %v1857 = vpack.c.b16 %v1721, %v1713
  %v1858 = vpack.c.b16 %v1722, %v1714
  %v1859 = vpack.c.b16 %v1723, %v1715
  %v1860 = vpack.c.b16 %v1724, %v1716
  %v1861 = vpack.c.b16 %v1725, %v1717
  %v1862 = vpack.c.b16 %v1726, %v1718
  %v1863 = vpack.c.b16 %v1727, %v1719
  %v1864 = vpack.c.b16 %v1728, %v1720
  %v1865 = vpack.c.b16 %v1737, %v1729
  %v1866 = vpack.c.b16 %v1738, %v1730
  %v1867 = vpack.c.b16 %v1739, %v1731
  %v1868 = vpack.c.b16 %v1740, %v1732
  %v1869 = vpack.c.b16 %v1741, %v1733
  %v1870 = vpack.c.b16 %v1742, %v1734
  %v1871 = vpack.c.b16 %v1743, %v1735
  %v1872 = vpack.c.b16 %v1744, %v1736
  %2001 = vmatprep.subr.bf16.mxu0 %v1802
  %2002 = vmatpush1.bf16.msra.mxu0 %v1801
  %2003 = vmatprep.subr.bf16.mxu0 %v1794
  %2004 = vmatpush1.bf16.msra.mxu0 %v1793
  %2005 = vmatprep.subr.bf16.mxu0 %v1786
  %2006 = vmatpush1.bf16.msra.mxu0 %v1785
  %2007 = vmatprep.subr.bf16.mxu0 %v1778
  %2008 = vmatpush1.bf16.msra.mxu0 %v1777
  %2009 = vmatprep.subr.bf16.mxu0 %v1770
  %2010 = vmatpush1.bf16.msra.mxu0 %v1769
  %2011 = vmatprep.subr.bf16.mxu0 %v1762
  %2012 = vmatpush1.bf16.msra.mxu0 %v1761
  %2013 = vmatprep.subr.bf16.mxu0 %v1754
  %2014 = vmatpush1.bf16.msra.mxu0 %v1753
  %2015 = vmatprep.subr.bf16.mxu0 %v1746
  %2016 = vmatpush1.bf16.msra.mxu0 %v1745
  %2017 = vmatprep.subr.bf16.mxu0 %v1866
  %2018 = vmatpush2.bf16.msra.mxu0 %v1865
  %2019 = vmatprep.subr.bf16.mxu0 %v1858
  %2020 = vmatpush2.bf16.msra.mxu0 %v1857
  %2021 = vmatprep.subr.bf16.mxu0 %v1850
  %2022 = vmatpush2.bf16.msra.mxu0 %v1849
  %2023 = vmatprep.subr.bf16.mxu0 %v1842
  %2024 = vmatpush2.bf16.msra.mxu0 %v1841
  %2025 = vmatprep.subr.bf16.mxu0 %v1834
  %2026 = vmatpush2.bf16.msra.mxu0 %v1833
  %2027 = vmatprep.subr.bf16.mxu0 %v1826
  %2028 = vmatpush2.bf16.msra.mxu0 %v1825
  %2029 = vmatprep.subr.bf16.mxu0 %v1818
  %2030 = vmatpush2.bf16.msra.mxu0 %v1817
  %2031 = vmatprep.subr.bf16.mxu0 %v1810
  %2032 = vmatpush2.bf16.msra.mxu0 %v1809
  %2033 = vmatprep.mubr.bf16.mxu0 %v1360
  %2034 = vmatmul.mubr.bf16.gmra.mxu0 %v1359
  %v2035 = vpop.f32.mrf.mxu0
  %v2036 = vadd.f32 0.0, %v2035
  %v2037 = vpop.f32.mrf.mxu0
  %v2038 = vadd.f32 0.0, %v2037
  %v2039 = vpop.f32.mrf.mxu0
  %v2040 = vpop.f32.mrf.mxu0
  %2041 = vdwg.mxu0
  %2042 = vmatprep.subr.bf16.mxu0 %v1804
  %2043 = vmatpush1.bf16.msra.mxu0 %v1803
  %2044 = vmatprep.subr.bf16.mxu0 %v1796
  %2045 = vmatpush1.bf16.msra.mxu0 %v1795
  %2046 = vmatprep.subr.bf16.mxu0 %v1788
  %2047 = vmatpush1.bf16.msra.mxu0 %v1787
  %2048 = vmatprep.subr.bf16.mxu0 %v1780
  %2049 = vmatpush1.bf16.msra.mxu0 %v1779
  %2050 = vmatprep.subr.bf16.mxu0 %v1772
  %2051 = vmatpush1.bf16.msra.mxu0 %v1771
  %2052 = vmatprep.subr.bf16.mxu0 %v1764
  %2053 = vmatpush1.bf16.msra.mxu0 %v1763
  %2054 = vmatprep.subr.bf16.mxu0 %v1756
  %2055 = vmatpush1.bf16.msra.mxu0 %v1755
  %2056 = vmatprep.subr.bf16.mxu0 %v1748
  %2057 = vmatpush1.bf16.msra.mxu0 %v1747
  %2058 = vmatprep.subr.bf16.mxu0 %v1868
  %2059 = vmatpush2.bf16.msra.mxu0 %v1867
  %2060 = vmatprep.subr.bf16.mxu0 %v1860
  %2061 = vmatpush2.bf16.msra.mxu0 %v1859
  %2062 = vmatprep.subr.bf16.mxu0 %v1852
  %2063 = vmatpush2.bf16.msra.mxu0 %v1851
  %2064 = vmatprep.subr.bf16.mxu0 %v1844
  %2065 = vmatpush2.bf16.msra.mxu0 %v1843
  %2066 = vmatprep.subr.bf16.mxu0 %v1836
  %2067 = vmatpush2.bf16.msra.mxu0 %v1835
  %2068 = vmatprep.subr.bf16.mxu0 %v1828
  %2069 = vmatpush2.bf16.msra.mxu0 %v1827
  %2070 = vmatprep.subr.bf16.mxu0 %v1820
  %2071 = vmatpush2.bf16.msra.mxu0 %v1819
  %2072 = vmatprep.subr.bf16.mxu0 %v1812
  %2073 = vmatpush2.bf16.msra.mxu0 %v1811
  %2074 = vmatprep.mubr.bf16.mxu0 %v1360
  %2075 = vmatmul.mubr.bf16.gmra.mxu0 %v1359
  %v2076 = vpop.f32.mrf.mxu0
  %v2077 = vadd.f32 0.0, %v2076
  %v2078 = vpop.f32.mrf.mxu0
  %v2079 = vadd.f32 0.0, %v2078
  %v2080 = vpop.f32.mrf.mxu0
  %v2081 = vpop.f32.mrf.mxu0
  %2082 = vdwg.mxu0
  %2083 = vmatprep.subr.bf16.mxu0 %v1806
  %2084 = vmatpush1.bf16.msra.mxu0 %v1805
  %2085 = vmatprep.subr.bf16.mxu0 %v1798
  %2086 = vmatpush1.bf16.msra.mxu0 %v1797
  %2087 = vmatprep.subr.bf16.mxu0 %v1790
  %2088 = vmatpush1.bf16.msra.mxu0 %v1789
  %2089 = vmatprep.subr.bf16.mxu0 %v1782
  %2090 = vmatpush1.bf16.msra.mxu0 %v1781
  %2091 = vmatprep.subr.bf16.mxu0 %v1774
  %2092 = vmatpush1.bf16.msra.mxu0 %v1773
  %2093 = vmatprep.subr.bf16.mxu0 %v1766
  %2094 = vmatpush1.bf16.msra.mxu0 %v1765
  %2095 = vmatprep.subr.bf16.mxu0 %v1758
  %2096 = vmatpush1.bf16.msra.mxu0 %v1757
  %2097 = vmatprep.subr.bf16.mxu0 %v1750
  %2098 = vmatpush1.bf16.msra.mxu0 %v1749
  %2099 = vmatprep.subr.bf16.mxu0 %v1870
  %2100 = vmatpush2.bf16.msra.mxu0 %v1869
  %2101 = vmatprep.subr.bf16.mxu0 %v1862
  %2102 = vmatpush2.bf16.msra.mxu0 %v1861
  %2103 = vmatprep.subr.bf16.mxu0 %v1854
  %2104 = vmatpush2.bf16.msra.mxu0 %v1853
  %2105 = vmatprep.subr.bf16.mxu0 %v1846
  %2106 = vmatpush2.bf16.msra.mxu0 %v1845
  %2107 = vmatprep.subr.bf16.mxu0 %v1838
  %2108 = vmatpush2.bf16.msra.mxu0 %v1837
  %2109 = vmatprep.subr.bf16.mxu0 %v1830
  %2110 = vmatpush2.bf16.msra.mxu0 %v1829
  %2111 = vmatprep.subr.bf16.mxu0 %v1822
  %2112 = vmatpush2.bf16.msra.mxu0 %v1821
  %2113 = vmatprep.subr.bf16.mxu0 %v1814
  %2114 = vmatpush2.bf16.msra.mxu0 %v1813
  %2115 = vmatprep.mubr.bf16.mxu0 %v1360
  %2116 = vmatmul.mubr.bf16.gmra.mxu0 %v1359
  %v2117 = vpop.f32.mrf.mxu0
  %v2118 = vadd.f32 0.0, %v2117
  %v2119 = vpop.f32.mrf.mxu0
  %v2120 = vadd.f32 0.0, %v2119
  %v2121 = vpop.f32.mrf.mxu0
  %v2122 = vpop.f32.mrf.mxu0
  %2123 = vdwg.mxu0
  %2124 = vmatprep.subr.bf16.mxu0 %v1808
  %2125 = vmatpush1.bf16.msra.mxu0 %v1807
  %2126 = vmatprep.subr.bf16.mxu0 %v1800
  %2127 = vmatpush1.bf16.msra.mxu0 %v1799
  %2128 = vmatprep.subr.bf16.mxu0 %v1792
  %2129 = vmatpush1.bf16.msra.mxu0 %v1791
  %2130 = vmatprep.subr.bf16.mxu0 %v1784
  %2131 = vmatpush1.bf16.msra.mxu0 %v1783
  %2132 = vmatprep.subr.bf16.mxu0 %v1776
  %2133 = vmatpush1.bf16.msra.mxu0 %v1775
  %2134 = vmatprep.subr.bf16.mxu0 %v1768
  %2135 = vmatpush1.bf16.msra.mxu0 %v1767
  %2136 = vmatprep.subr.bf16.mxu0 %v1760
  %2137 = vmatpush1.bf16.msra.mxu0 %v1759
  %2138 = vmatprep.subr.bf16.mxu0 %v1752
  %2139 = vmatpush1.bf16.msra.mxu0 %v1751
  %2140 = vmatprep.subr.bf16.mxu0 %v1872
  %2141 = vmatpush2.bf16.msra.mxu0 %v1871
  %2142 = vmatprep.subr.bf16.mxu0 %v1864
  %2143 = vmatpush2.bf16.msra.mxu0 %v1863
  %2144 = vmatprep.subr.bf16.mxu0 %v1856
  %2145 = vmatpush2.bf16.msra.mxu0 %v1855
  %2146 = vmatprep.subr.bf16.mxu0 %v1848
  %2147 = vmatpush2.bf16.msra.mxu0 %v1847
  %2148 = vmatprep.subr.bf16.mxu0 %v1840
  %2149 = vmatpush2.bf16.msra.mxu0 %v1839
  %2150 = vmatprep.subr.bf16.mxu0 %v1832
  %2151 = vmatpush2.bf16.msra.mxu0 %v1831
  %2152 = vmatprep.subr.bf16.mxu0 %v1824
  %2153 = vmatpush2.bf16.msra.mxu0 %v1823
  %2154 = vmatprep.subr.bf16.mxu0 %v1816
  %2155 = vmatpush2.bf16.msra.mxu0 %v1815
  %2156 = vmatprep.mubr.bf16.mxu0 %v1360
  %2157 = vmatmul.mubr.bf16.gmra.mxu0 %v1359
  %v2158 = vpop.f32.mrf.mxu0
  %v2159 = vadd.f32 0.0, %v2158
  %v2160 = vpop.f32.mrf.mxu0
  %v2161 = vadd.f32 0.0, %v2160
  %v2162 = vpop.f32.mrf.mxu0
  %v2163 = vpop.f32.mrf.mxu0
  %2164 = vdwg.mxu0
  %v2165 = vadd.f32 %v1351, %v2036
  %v2166 = vadd.f32 %v1352, %v2038
  %v2167 = vadd.f32 %v1353, %v2077
  %v2168 = vadd.f32 %v1354, %v2079
  %v2169 = vadd.f32 %v1355, %v2118
  %v2170 = vadd.f32 %v1356, %v2120
  %v2171 = vadd.f32 %v1357, %v2159
  %v2172 = vadd.f32 %v1358, %v2161
  %v2173 = vxor.u32 %v2165, 2147483648
  %v2174 = vxor.u32 %v2166, 2147483648
  %v2175 = vmul.f32 %v2173, 1.442695
  %v2176 = vpow.pop %v2175
  %v2177 = vmul.f32 %v2174, 1.442695
  %v2178 = vpow.pop %v2177
  %v2179 = vadd.f32 %v2176, 1.0
  %v2180 = vadd.f32 %v2178, 1.0
  %v2181 = vrcp.pop %v2179
  %v2182 = vmul.f32 1.0, %v2181
  %v2183 = vrcp.pop %v2180
  %v2184 = vmul.f32 1.0, %v2183
  %v2185 = vxor.u32 %v2167, 2147483648
  %v2186 = vxor.u32 %v2168, 2147483648
  %v2187 = vmul.f32 %v2185, 1.442695
  %v2188 = vpow.pop %v2187
  %v2189 = vmul.f32 %v2186, 1.442695
  %v2190 = vpow.pop %v2189
  %v2191 = vadd.f32 %v2188, 1.0
  %v2192 = vadd.f32 %v2190, 1.0
  %v2193 = vrcp.pop %v2191
  %v2194 = vmul.f32 1.0, %v2193
  %v2195 = vrcp.pop %v2192
  %v2196 = vmul.f32 1.0, %v2195
  %v2197 = vtanh.pop %v2169
  %v2198 = vtanh.pop %v2170
  %v2199 = vxor.u32 %v2171, 2147483648
  %v2200 = vxor.u32 %v2172, 2147483648
  %v2201 = vmul.f32 %v2199, 1.442695
  %v2202 = vpow.pop %v2201
  %v2203 = vmul.f32 %v2200, 1.442695
  %v2204 = vpow.pop %v2203
  %v2205 = vadd.f32 %v2202, 1.0
  %v2206 = vadd.f32 %v2204, 1.0
  %v2207 = vrcp.pop %v2205
  %v2208 = vmul.f32 1.0, %v2207
  %v2209 = vrcp.pop %v2206
  %v2210 = vmul.f32 1.0, %v2209
  %v2211 = vmul.f32 %v2194, %v1349
  %v2212 = vmul.f32 %v2196, %v1350
  %v2213 = vmul.f32 %v2182, %v2197
  %v2214 = vmul.f32 %v2184, %v2198
  %v2215 = vadd.f32 %v2211, %v2213
  %v2216 = vadd.f32 %v2212, %v2214
  %v2217 = vtanh.pop %v2215
  %v2218 = vtanh.pop %v2216
  %v2219 = vmul.f32 %v2208, %v2217
  %v2220 = vmul.f32 %v2210, %v2218
  %2221 = vst [vmem:[#allocation3] sm:$0xff] %v2219
  %2222 = vst [vmem:[#allocation3 + $0x8] sm:$0xff] %v2220
  %s2223 = scalar_lea.vmem [#allocation2], 64
  %v2224 = vld [vmem:[%s2223] sm:$0xff]
  %v2225 = vld [vmem:[%s2223 + $0x8] sm:$0xff]
  %v2226 = vld [vmem:[%s2223 + $0x10] sm:$0xff]
  %v2227 = vld [vmem:[%s2223 + $0x18] sm:$0xff]
  %v2228 = vld [vmem:[%s2223 + $0x20] sm:$0xff]
  %v2229 = vld [vmem:[%s2223 + $0x28] sm:$0xff]
  %v2230 = vld [vmem:[%s2223 + $0x30] sm:$0xff]
  %v2231 = vld [vmem:[%s2223 + $0x38] sm:$0xff]
  %v2232 = vpack.c.bf16 %v2219, %v2219
  %v2233 = vpack.c.bf16 %v2220, %v2220
  %2234 = vmatprep.subr.bf16.mxu0 %v1802
  %2235 = vmatpush1.bf16.msra.mxu0 %v1801
  %2236 = vmatprep.subr.bf16.mxu0 %v1794
  %2237 = vmatpush1.bf16.msra.mxu0 %v1793
  %2238 = vmatprep.subr.bf16.mxu0 %v1786
  %2239 = vmatpush1.bf16.msra.mxu0 %v1785
  %2240 = vmatprep.subr.bf16.mxu0 %v1778
  %2241 = vmatpush1.bf16.msra.mxu0 %v1777
  %2242 = vmatprep.subr.bf16.mxu0 %v1770
  %2243 = vmatpush1.bf16.msra.mxu0 %v1769
  %2244 = vmatprep.subr.bf16.mxu0 %v1762
  %2245 = vmatpush1.bf16.msra.mxu0 %v1761
  %2246 = vmatprep.subr.bf16.mxu0 %v1754
  %2247 = vmatpush1.bf16.msra.mxu0 %v1753
  %2248 = vmatprep.subr.bf16.mxu0 %v1746
  %2249 = vmatpush1.bf16.msra.mxu0 %v1745
  %2250 = vmatprep.subr.bf16.mxu0 %v1866
  %2251 = vmatpush2.bf16.msra.mxu0 %v1865
  %2252 = vmatprep.subr.bf16.mxu0 %v1858
  %2253 = vmatpush2.bf16.msra.mxu0 %v1857
  %2254 = vmatprep.subr.bf16.mxu0 %v1850
  %2255 = vmatpush2.bf16.msra.mxu0 %v1849
  %2256 = vmatprep.subr.bf16.mxu0 %v1842
  %2257 = vmatpush2.bf16.msra.mxu0 %v1841
  %2258 = vmatprep.subr.bf16.mxu0 %v1834
  %2259 = vmatpush2.bf16.msra.mxu0 %v1833
  %2260 = vmatprep.subr.bf16.mxu0 %v1826
  %2261 = vmatpush2.bf16.msra.mxu0 %v1825
  %2262 = vmatprep.subr.bf16.mxu0 %v1818
  %2263 = vmatpush2.bf16.msra.mxu0 %v1817
  %2264 = vmatprep.subr.bf16.mxu0 %v1810
  %2265 = vmatpush2.bf16.msra.mxu0 %v1809
  %2266 = vmatprep.mubr.bf16.mxu0 %v2233
  %2267 = vmatmul.mubr.bf16.gmra.mxu0 %v2232
  %v2268 = vpop.f32.mrf.mxu0
  %v2269 = vadd.f32 0.0, %v2268
  %v2270 = vpop.f32.mrf.mxu0
  %v2271 = vadd.f32 0.0, %v2270
  %v2272 = vpop.f32.mrf.mxu0
  %v2273 = vpop.f32.mrf.mxu0
  %2274 = vdwg.mxu0
  %2275 = vmatprep.subr.bf16.mxu0 %v1804
  %2276 = vmatpush1.bf16.msra.mxu0 %v1803
  %2277 = vmatprep.subr.bf16.mxu0 %v1796
  %2278 = vmatpush1.bf16.msra.mxu0 %v1795
  %2279 = vmatprep.subr.bf16.mxu0 %v1788
  %2280 = vmatpush1.bf16.msra.mxu0 %v1787
  %2281 = vmatprep.subr.bf16.mxu0 %v1780
  %2282 = vmatpush1.bf16.msra.mxu0 %v1779
  %2283 = vmatprep.subr.bf16.mxu0 %v1772
  %2284 = vmatpush1.bf16.msra.mxu0 %v1771
  %2285 = vmatprep.subr.bf16.mxu0 %v1764
  %2286 = vmatpush1.bf16.msra.mxu0 %v1763
  %2287 = vmatprep.subr.bf16.mxu0 %v1756
  %2288 = vmatpush1.bf16.msra.mxu0 %v1755
  %2289 = vmatprep.subr.bf16.mxu0 %v1748
  %2290 = vmatpush1.bf16.msra.mxu0 %v1747
  %2291 = vmatprep.subr.bf16.mxu0 %v1868
  %2292 = vmatpush2.bf16.msra.mxu0 %v1867
  %2293 = vmatprep.subr.bf16.mxu0 %v1860
  %2294 = vmatpush2.bf16.msra.mxu0 %v1859
  %2295 = vmatprep.subr.bf16.mxu0 %v1852
  %2296 = vmatpush2.bf16.msra.mxu0 %v1851
  %2297 = vmatprep.subr.bf16.mxu0 %v1844
  %2298 = vmatpush2.bf16.msra.mxu0 %v1843
  %2299 = vmatprep.subr.bf16.mxu0 %v1836
  %2300 = vmatpush2.bf16.msra.mxu0 %v1835
  %2301 = vmatprep.subr.bf16.mxu0 %v1828
  %2302 = vmatpush2.bf16.msra.mxu0 %v1827
  %2303 = vmatprep.subr.bf16.mxu0 %v1820
  %2304 = vmatpush2.bf16.msra.mxu0 %v1819
  %2305 = vmatprep.subr.bf16.mxu0 %v1812
  %2306 = vmatpush2.bf16.msra.mxu0 %v1811
  %2307 = vmatprep.mubr.bf16.mxu0 %v2233
  %2308 = vmatmul.mubr.bf16.gmra.mxu0 %v2232
  %v2309 = vpop.f32.mrf.mxu0
  %v2310 = vadd.f32 0.0, %v2309
  %v2311 = vpop.f32.mrf.mxu0
  %v2312 = vadd.f32 0.0, %v2311
  %v2313 = vpop.f32.mrf.mxu0
  %v2314 = vpop.f32.mrf.mxu0
  %2315 = vdwg.mxu0
  %2316 = vmatprep.subr.bf16.mxu0 %v1806
  %2317 = vmatpush1.bf16.msra.mxu0 %v1805
  %2318 = vmatprep.subr.bf16.mxu0 %v1798
  %2319 = vmatpush1.bf16.msra.mxu0 %v1797
  %2320 = vmatprep.subr.bf16.mxu0 %v1790
  %2321 = vmatpush1.bf16.msra.mxu0 %v1789
  %2322 = vmatprep.subr.bf16.mxu0 %v1782
  %2323 = vmatpush1.bf16.msra.mxu0 %v1781
  %2324 = vmatprep.subr.bf16.mxu0 %v1774
  %2325 = vmatpush1.bf16.msra.mxu0 %v1773
  %2326 = vmatprep.subr.bf16.mxu0 %v1766
  %2327 = vmatpush1.bf16.msra.mxu0 %v1765
  %2328 = vmatprep.subr.bf16.mxu0 %v1758
  %2329 = vmatpush1.bf16.msra.mxu0 %v1757
  %2330 = vmatprep.subr.bf16.mxu0 %v1750
  %2331 = vmatpush1.bf16.msra.mxu0 %v1749
  %2332 = vmatprep.subr.bf16.mxu0 %v1870
  %2333 = vmatpush2.bf16.msra.mxu0 %v1869
  %2334 = vmatprep.subr.bf16.mxu0 %v1862
  %2335 = vmatpush2.bf16.msra.mxu0 %v1861
  %2336 = vmatprep.subr.bf16.mxu0 %v1854
  %2337 = vmatpush2.bf16.msra.mxu0 %v1853
  %2338 = vmatprep.subr.bf16.mxu0 %v1846
  %2339 = vmatpush2.bf16.msra.mxu0 %v1845
  %2340 = vmatprep.subr.bf16.mxu0 %v1838
  %2341 = vmatpush2.bf16.msra.mxu0 %v1837
  %2342 = vmatprep.subr.bf16.mxu0 %v1830
  %2343 = vmatpush2.bf16.msra.mxu0 %v1829
  %2344 = vmatprep.subr.bf16.mxu0 %v1822
  %2345 = vmatpush2.bf16.msra.mxu0 %v1821
  %2346 = vmatprep.subr.bf16.mxu0 %v1814
  %2347 = vmatpush2.bf16.msra.mxu0 %v1813
  %2348 = vmatprep.mubr.bf16.mxu0 %v2233
  %2349 = vmatmul.mubr.bf16.gmra.mxu0 %v2232
  %v2350 = vpop.f32.mrf.mxu0
  %v2351 = vadd.f32 0.0, %v2350
  %v2352 = vpop.f32.mrf.mxu0
  %v2353 = vadd.f32 0.0, %v2352
  %v2354 = vpop.f32.mrf.mxu0
  %v2355 = vpop.f32.mrf.mxu0
  %2356 = vdwg.mxu0
  %2357 = vmatprep.subr.bf16.mxu0 %v1808
  %2358 = vmatpush1.bf16.msra.mxu0 %v1807
  %2359 = vmatprep.subr.bf16.mxu0 %v1800
  %2360 = vmatpush1.bf16.msra.mxu0 %v1799
  %2361 = vmatprep.subr.bf16.mxu0 %v1792
  %2362 = vmatpush1.bf16.msra.mxu0 %v1791
  %2363 = vmatprep.subr.bf16.mxu0 %v1784
  %2364 = vmatpush1.bf16.msra.mxu0 %v1783
  %2365 = vmatprep.subr.bf16.mxu0 %v1776
  %2366 = vmatpush1.bf16.msra.mxu0 %v1775
  %2367 = vmatprep.subr.bf16.mxu0 %v1768
  %2368 = vmatpush1.bf16.msra.mxu0 %v1767
  %2369 = vmatprep.subr.bf16.mxu0 %v1760
  %2370 = vmatpush1.bf16.msra.mxu0 %v1759
  %2371 = vmatprep.subr.bf16.mxu0 %v1752
  %2372 = vmatpush1.bf16.msra.mxu0 %v1751
  %2373 = vmatprep.subr.bf16.mxu0 %v1872
  %2374 = vmatpush2.bf16.msra.mxu0 %v1871
  %2375 = vmatprep.subr.bf16.mxu0 %v1864
  %2376 = vmatpush2.bf16.msra.mxu0 %v1863
  %2377 = vmatprep.subr.bf16.mxu0 %v1856
  %2378 = vmatpush2.bf16.msra.mxu0 %v1855
  %2379 = vmatprep.subr.bf16.mxu0 %v1848
  %2380 = vmatpush2.bf16.msra.mxu0 %v1847
  %2381 = vmatprep.subr.bf16.mxu0 %v1840
  %2382 = vmatpush2.bf16.msra.mxu0 %v1839
  %2383 = vmatprep.subr.bf16.mxu0 %v1832
  %2384 = vmatpush2.bf16.msra.mxu0 %v1831
  %2385 = vmatprep.subr.bf16.mxu0 %v1824
  %2386 = vmatpush2.bf16.msra.mxu0 %v1823
  %2387 = vmatprep.subr.bf16.mxu0 %v1816
  %2388 = vmatpush2.bf16.msra.mxu0 %v1815
  %2389 = vmatprep.mubr.bf16.mxu0 %v2233
  %2390 = vmatmul.mubr.bf16.gmra.mxu0 %v2232
  %v2391 = vpop.f32.mrf.mxu0
  %v2392 = vadd.f32 0.0, %v2391
  %v2393 = vpop.f32.mrf.mxu0
  %v2394 = vadd.f32 0.0, %v2393
  %v2395 = vpop.f32.mrf.mxu0
  %v2396 = vpop.f32.mrf.mxu0
  %2397 = vdwg.mxu0
  %v2398 = vadd.f32 %v2224, %v2269
  %v2399 = vadd.f32 %v2225, %v2271
  %v2400 = vadd.f32 %v2226, %v2310
  %v2401 = vadd.f32 %v2227, %v2312
  %v2402 = vadd.f32 %v2228, %v2351
  %v2403 = vadd.f32 %v2229, %v2353
  %v2404 = vadd.f32 %v2230, %v2392
  %v2405 = vadd.f32 %v2231, %v2394
  %v2406 = vxor.u32 %v2398, 2147483648
  %v2407 = vxor.u32 %v2399, 2147483648
  %v2408 = vmul.f32 %v2406, 1.442695
  %v2409 = vpow.pop %v2408
  %v2410 = vmul.f32 %v2407, 1.442695
  %v2411 = vpow.pop %v2410
  %v2412 = vadd.f32 %v2409, 1.0
  %v2413 = vadd.f32 %v2411, 1.0
  %v2414 = vrcp.pop %v2412
  %v2415 = vmul.f32 1.0, %v2414
  %v2416 = vrcp.pop %v2413
  %v2417 = vmul.f32 1.0, %v2416
  %v2418 = vxor.u32 %v2400, 2147483648
  %v2419 = vxor.u32 %v2401, 2147483648
  %v2420 = vmul.f32 %v2418, 1.442695
  %v2421 = vpow.pop %v2420
  %v2422 = vmul.f32 %v2419, 1.442695
  %v2423 = vpow.pop %v2422
  %v2424 = vadd.f32 %v2421, 1.0
  %v2425 = vadd.f32 %v2423, 1.0
  %v2426 = vrcp.pop %v2424
  %v2427 = vmul.f32 1.0, %v2426
  %v2428 = vrcp.pop %v2425
  %v2429 = vmul.f32 1.0, %v2428
  %v2430 = vtanh.pop %v2402
  %v2431 = vtanh.pop %v2403
  %v2432 = vxor.u32 %v2404, 2147483648
  %v2433 = vxor.u32 %v2405, 2147483648
  %v2434 = vmul.f32 %v2432, 1.442695
  %v2435 = vpow.pop %v2434
  %v2436 = vmul.f32 %v2433, 1.442695
  %v2437 = vpow.pop %v2436
  %v2438 = vadd.f32 %v2435, 1.0
  %v2439 = vadd.f32 %v2437, 1.0
  %v2440 = vrcp.pop %v2438
  %v2441 = vmul.f32 1.0, %v2440
  %v2442 = vrcp.pop %v2439
  %v2443 = vmul.f32 1.0, %v2442
  %v2444 = vmul.f32 %v2427, %v2215
  %v2445 = vmul.f32 %v2429, %v2216
  %v2446 = vmul.f32 %v2415, %v2430
  %v2447 = vmul.f32 %v2417, %v2431
  %v2448 = vadd.f32 %v2444, %v2446
  %v2449 = vadd.f32 %v2445, %v2447
  %v2450 = vtanh.pop %v2448
  %v2451 = vtanh.pop %v2449
  %v2452 = vmul.f32 %v2441, %v2450
  %v2453 = vmul.f32 %v2443, %v2451
  %s2454 = scalar_lea.vmem [#allocation3], 16
  %2455 = vst [vmem:[%s2454] sm:$0xff] %v2452
  %2456 = vst [vmem:[%s2454 + $0x8] sm:$0xff] %v2453
  %s2457 = scalar_lea.vmem [#allocation2], 128
  %v2458 = vld [vmem:[%s2457] sm:$0xff]
  %v2459 = vld [vmem:[%s2457 + $0x8] sm:$0xff]
  %v2460 = vld [vmem:[%s2457 + $0x10] sm:$0xff]
  %v2461 = vld [vmem:[%s2457 + $0x18] sm:$0xff]
  %v2462 = vld [vmem:[%s2457 + $0x20] sm:$0xff]
  %v2463 = vld [vmem:[%s2457 + $0x28] sm:$0xff]
  %v2464 = vld [vmem:[%s2457 + $0x30] sm:$0xff]
  %v2465 = vld [vmem:[%s2457 + $0x38] sm:$0xff]
  %v2466 = vpack.c.bf16 %v2452, %v2452
  %v2467 = vpack.c.bf16 %v2453, %v2453
  %2468 = vmatprep.subr.bf16.mxu0 %v1802
  %2469 = vmatpush1.bf16.msra.mxu0 %v1801
  %2470 = vmatprep.subr.bf16.mxu0 %v1794
  %2471 = vmatpush1.bf16.msra.mxu0 %v1793
  %2472 = vmatprep.subr.bf16.mxu0 %v1786
  %2473 = vmatpush1.bf16.msra.mxu0 %v1785
  %2474 = vmatprep.subr.bf16.mxu0 %v1778
  %2475 = vmatpush1.bf16.msra.mxu0 %v1777
  %2476 = vmatprep.subr.bf16.mxu0 %v1770
  %2477 = vmatpush1.bf16.msra.mxu0 %v1769
  %2478 = vmatprep.subr.bf16.mxu0 %v1762
  %2479 = vmatpush1.bf16.msra.mxu0 %v1761
  %2480 = vmatprep.subr.bf16.mxu0 %v1754
  %2481 = vmatpush1.bf16.msra.mxu0 %v1753
  %2482 = vmatprep.subr.bf16.mxu0 %v1746
  %2483 = vmatpush1.bf16.msra.mxu0 %v1745
  %2484 = vmatprep.subr.bf16.mxu0 %v1866
  %2485 = vmatpush2.bf16.msra.mxu0 %v1865
  %2486 = vmatprep.subr.bf16.mxu0 %v1858
  %2487 = vmatpush2.bf16.msra.mxu0 %v1857
  %2488 = vmatprep.subr.bf16.mxu0 %v1850
  %2489 = vmatpush2.bf16.msra.mxu0 %v1849
  %2490 = vmatprep.subr.bf16.mxu0 %v1842
  %2491 = vmatpush2.bf16.msra.mxu0 %v1841
  %2492 = vmatprep.subr.bf16.mxu0 %v1834
  %2493 = vmatpush2.bf16.msra.mxu0 %v1833
  %2494 = vmatprep.subr.bf16.mxu0 %v1826
  %2495 = vmatpush2.bf16.msra.mxu0 %v1825
  %2496 = vmatprep.subr.bf16.mxu0 %v1818
  %2497 = vmatpush2.bf16.msra.mxu0 %v1817
  %2498 = vmatprep.subr.bf16.mxu0 %v1810
  %2499 = vmatpush2.bf16.msra.mxu0 %v1809
  %2500 = vmatprep.mubr.bf16.mxu0 %v2467
  %2501 = vmatmul.mubr.bf16.gmra.mxu0 %v2466
  %v2502 = vpop.f32.mrf.mxu0
  %v2503 = vadd.f32 0.0, %v2502
  %v2504 = vpop.f32.mrf.mxu0
  %v2505 = vadd.f32 0.0, %v2504
  %v2506 = vpop.f32.mrf.mxu0
  %v2507 = vpop.f32.mrf.mxu0
  %2508 = vdwg.mxu0
  %2509 = vmatprep.subr.bf16.mxu0 %v1804
  %2510 = vmatpush1.bf16.msra.mxu0 %v1803
  %2511 = vmatprep.subr.bf16.mxu0 %v1796
  %2512 = vmatpush1.bf16.msra.mxu0 %v1795
  %2513 = vmatprep.subr.bf16.mxu0 %v1788
  %2514 = vmatpush1.bf16.msra.mxu0 %v1787
  %2515 = vmatprep.subr.bf16.mxu0 %v1780
  %2516 = vmatpush1.bf16.msra.mxu0 %v1779
  %2517 = vmatprep.subr.bf16.mxu0 %v1772
  %2518 = vmatpush1.bf16.msra.mxu0 %v1771
  %2519 = vmatprep.subr.bf16.mxu0 %v1764
  %2520 = vmatpush1.bf16.msra.mxu0 %v1763
  %2521 = vmatprep.subr.bf16.mxu0 %v1756
  %2522 = vmatpush1.bf16.msra.mxu0 %v1755
  %2523 = vmatprep.subr.bf16.mxu0 %v1748
  %2524 = vmatpush1.bf16.msra.mxu0 %v1747
  %2525 = vmatprep.subr.bf16.mxu0 %v1868
  %2526 = vmatpush2.bf16.msra.mxu0 %v1867
  %2527 = vmatprep.subr.bf16.mxu0 %v1860
  %2528 = vmatpush2.bf16.msra.mxu0 %v1859
  %2529 = vmatprep.subr.bf16.mxu0 %v1852
  %2530 = vmatpush2.bf16.msra.mxu0 %v1851
  %2531 = vmatprep.subr.bf16.mxu0 %v1844
  %2532 = vmatpush2.bf16.msra.mxu0 %v1843
  %2533 = vmatprep.subr.bf16.mxu0 %v1836
  %2534 = vmatpush2.bf16.msra.mxu0 %v1835
  %2535 = vmatprep.subr.bf16.mxu0 %v1828
  %2536 = vmatpush2.bf16.msra.mxu0 %v1827
  %2537 = vmatprep.subr.bf16.mxu0 %v1820
  %2538 = vmatpush2.bf16.msra.mxu0 %v1819
  %2539 = vmatprep.subr.bf16.mxu0 %v1812
  %2540 = vmatpush2.bf16.msra.mxu0 %v1811
  %2541 = vmatprep.mubr.bf16.mxu0 %v2467
  %2542 = vmatmul.mubr.bf16.gmra.mxu0 %v2466
  %v2543 = vpop.f32.mrf.mxu0
  %v2544 = vadd.f32 0.0, %v2543
  %v2545 = vpop.f32.mrf.mxu0
  %v2546 = vadd.f32 0.0, %v2545
  %v2547 = vpop.f32.mrf.mxu0
  %v2548 = vpop.f32.mrf.mxu0
  %2549 = vdwg.mxu0
  %2550 = vmatprep.subr.bf16.mxu0 %v1806
  %2551 = vmatpush1.bf16.msra.mxu0 %v1805
  %2552 = vmatprep.subr.bf16.mxu0 %v1798
  %2553 = vmatpush1.bf16.msra.mxu0 %v1797
  %2554 = vmatprep.subr.bf16.mxu0 %v1790
  %2555 = vmatpush1.bf16.msra.mxu0 %v1789
  %2556 = vmatprep.subr.bf16.mxu0 %v1782
  %2557 = vmatpush1.bf16.msra.mxu0 %v1781
  %2558 = vmatprep.subr.bf16.mxu0 %v1774
  %2559 = vmatpush1.bf16.msra.mxu0 %v1773
  %2560 = vmatprep.subr.bf16.mxu0 %v1766
  %2561 = vmatpush1.bf16.msra.mxu0 %v1765
  %2562 = vmatprep.subr.bf16.mxu0 %v1758
  %2563 = vmatpush1.bf16.msra.mxu0 %v1757
  %2564 = vmatprep.subr.bf16.mxu0 %v1750
  %2565 = vmatpush1.bf16.msra.mxu0 %v1749
  %2566 = vmatprep.subr.bf16.mxu0 %v1870
  %2567 = vmatpush2.bf16.msra.mxu0 %v1869
  %2568 = vmatprep.subr.bf16.mxu0 %v1862
  %2569 = vmatpush2.bf16.msra.mxu0 %v1861
  %2570 = vmatprep.subr.bf16.mxu0 %v1854
  %2571 = vmatpush2.bf16.msra.mxu0 %v1853
  %2572 = vmatprep.subr.bf16.mxu0 %v1846
  %2573 = vmatpush2.bf16.msra.mxu0 %v1845
  %2574 = vmatprep.subr.bf16.mxu0 %v1838
  %2575 = vmatpush2.bf16.msra.mxu0 %v1837
  %2576 = vmatprep.subr.bf16.mxu0 %v1830
  %2577 = vmatpush2.bf16.msra.mxu0 %v1829
  %2578 = vmatprep.subr.bf16.mxu0 %v1822
  %2579 = vmatpush2.bf16.msra.mxu0 %v1821
  %2580 = vmatprep.subr.bf16.mxu0 %v1814
  %2581 = vmatpush2.bf16.msra.mxu0 %v1813
  %2582 = vmatprep.mubr.bf16.mxu0 %v2467
  %2583 = vmatmul.mubr.bf16.gmra.mxu0 %v2466
  %v2584 = vpop.f32.mrf.mxu0
  %v2585 = vadd.f32 0.0, %v2584
  %v2586 = vpop.f32.mrf.mxu0
  %v2587 = vadd.f32 0.0, %v2586
  %v2588 = vpop.f32.mrf.mxu0
  %v2589 = vpop.f32.mrf.mxu0
  %2590 = vdwg.mxu0
  %2591 = vmatprep.subr.bf16.mxu0 %v1808
  %2592 = vmatpush1.bf16.msra.mxu0 %v1807
  %2593 = vmatprep.subr.bf16.mxu0 %v1800
  %2594 = vmatpush1.bf16.msra.mxu0 %v1799
  %2595 = vmatprep.subr.bf16.mxu0 %v1792
  %2596 = vmatpush1.bf16.msra.mxu0 %v1791
  %2597 = vmatprep.subr.bf16.mxu0 %v1784
  %2598 = vmatpush1.bf16.msra.mxu0 %v1783
  %2599 = vmatprep.subr.bf16.mxu0 %v1776
  %2600 = vmatpush1.bf16.msra.mxu0 %v1775
  %2601 = vmatprep.subr.bf16.mxu0 %v1768
  %2602 = vmatpush1.bf16.msra.mxu0 %v1767
  %2603 = vmatprep.subr.bf16.mxu0 %v1760
  %2604 = vmatpush1.bf16.msra.mxu0 %v1759
  %2605 = vmatprep.subr.bf16.mxu0 %v1752
  %2606 = vmatpush1.bf16.msra.mxu0 %v1751
  %2607 = vmatprep.subr.bf16.mxu0 %v1872
  %2608 = vmatpush2.bf16.msra.mxu0 %v1871
  %2609 = vmatprep.subr.bf16.mxu0 %v1864
  %2610 = vmatpush2.bf16.msra.mxu0 %v1863
  %2611 = vmatprep.subr.bf16.mxu0 %v1856
  %2612 = vmatpush2.bf16.msra.mxu0 %v1855
  %2613 = vmatprep.subr.bf16.mxu0 %v1848
  %2614 = vmatpush2.bf16.msra.mxu0 %v1847
  %2615 = vmatprep.subr.bf16.mxu0 %v1840
  %2616 = vmatpush2.bf16.msra.mxu0 %v1839
  %2617 = vmatprep.subr.bf16.mxu0 %v1832
  %2618 = vmatpush2.bf16.msra.mxu0 %v1831
  %2619 = vmatprep.subr.bf16.mxu0 %v1824
  %2620 = vmatpush2.bf16.msra.mxu0 %v1823
  %2621 = vmatprep.subr.bf16.mxu0 %v1816
  %2622 = vmatpush2.bf16.msra.mxu0 %v1815
  %2623 = vmatprep.mubr.bf16.mxu0 %v2467
  %2624 = vmatmul.mubr.bf16.gmra.mxu0 %v2466
  %v2625 = vpop.f32.mrf.mxu0
  %v2626 = vadd.f32 0.0, %v2625
  %v2627 = vpop.f32.mrf.mxu0
  %v2628 = vadd.f32 0.0, %v2627
  %v2629 = vpop.f32.mrf.mxu0
  %v2630 = vpop.f32.mrf.mxu0
  %2631 = vdwg.mxu0
  %v2632 = vadd.f32 %v2458, %v2503
  %v2633 = vadd.f32 %v2459, %v2505
  %v2634 = vadd.f32 %v2460, %v2544
  %v2635 = vadd.f32 %v2461, %v2546
  %v2636 = vadd.f32 %v2462, %v2585
  %v2637 = vadd.f32 %v2463, %v2587
  %v2638 = vadd.f32 %v2464, %v2626
  %v2639 = vadd.f32 %v2465, %v2628
  %v2640 = vxor.u32 %v2632, 2147483648
  %v2641 = vxor.u32 %v2633, 2147483648
  %v2642 = vmul.f32 %v2640, 1.442695
  %v2643 = vpow.pop %v2642
  %v2644 = vmul.f32 %v2641, 1.442695
  %v2645 = vpow.pop %v2644
  %v2646 = vadd.f32 %v2643, 1.0
  %v2647 = vadd.f32 %v2645, 1.0
  %v2648 = vrcp.pop %v2646
  %v2649 = vmul.f32 1.0, %v2648
  %v2650 = vrcp.pop %v2647
  %v2651 = vmul.f32 1.0, %v2650
  %v2652 = vxor.u32 %v2634, 2147483648
  %v2653 = vxor.u32 %v2635, 2147483648
  %v2654 = vmul.f32 %v2652, 1.442695
  %v2655 = vpow.pop %v2654
  %v2656 = vmul.f32 %v2653, 1.442695
  %v2657 = vpow.pop %v2656
  %v2658 = vadd.f32 %v2655, 1.0
  %v2659 = vadd.f32 %v2657, 1.0
  %v2660 = vrcp.pop %v2658
  %v2661 = vmul.f32 1.0, %v2660
  %v2662 = vrcp.pop %v2659
  %v2663 = vmul.f32 1.0, %v2662
  %v2664 = vtanh.pop %v2636
  %v2665 = vtanh.pop %v2637
  %v2666 = vxor.u32 %v2638, 2147483648
  %v2667 = vxor.u32 %v2639, 2147483648
  %v2668 = vmul.f32 %v2666, 1.442695
  %v2669 = vpow.pop %v2668
  %v2670 = vmul.f32 %v2667, 1.442695
  %v2671 = vpow.pop %v2670
  %v2672 = vadd.f32 %v2669, 1.0
  %v2673 = vadd.f32 %v2671, 1.0
  %v2674 = vrcp.pop %v2672
  %v2675 = vmul.f32 1.0, %v2674
  %v2676 = vrcp.pop %v2673
  %v2677 = vmul.f32 1.0, %v2676
  %v2678 = vmul.f32 %v2661, %v2448
  %v2679 = vmul.f32 %v2663, %v2449
  %v2680 = vmul.f32 %v2649, %v2664
  %v2681 = vmul.f32 %v2651, %v2665
  %v2682 = vadd.f32 %v2678, %v2680
  %v2683 = vadd.f32 %v2679, %v2681
  %v2684 = vtanh.pop %v2682
  %v2685 = vtanh.pop %v2683
  %v2686 = vmul.f32 %v2675, %v2684
  %v2687 = vmul.f32 %v2677, %v2685
  %s2688 = scalar_lea.vmem [#allocation3], 32
  %2689 = vst [vmem:[%s2688] sm:$0xff] %v2686
  %2690 = vst [vmem:[%s2688 + $0x8] sm:$0xff] %v2687
  %s2691 = scalar_lea.vmem [#allocation2], 192
  %v2692 = vld [vmem:[%s2691] sm:$0xff]
  %v2693 = vld [vmem:[%s2691 + $0x8] sm:$0xff]
  %v2694 = vld [vmem:[%s2691 + $0x10] sm:$0xff]
  %v2695 = vld [vmem:[%s2691 + $0x18] sm:$0xff]
  %v2696 = vld [vmem:[%s2691 + $0x20] sm:$0xff]
  %v2697 = vld [vmem:[%s2691 + $0x28] sm:$0xff]
  %v2698 = vld [vmem:[%s2691 + $0x30] sm:$0xff]
  %v2699 = vld [vmem:[%s2691 + $0x38] sm:$0xff]
  %v2700 = vpack.c.bf16 %v2686, %v2686
  %v2701 = vpack.c.bf16 %v2687, %v2687
  %2702 = vmatprep.subr.bf16.mxu0 %v1802
  %2703 = vmatpush1.bf16.msra.mxu0 %v1801
  %2704 = vmatprep.subr.bf16.mxu0 %v1794
  %2705 = vmatpush1.bf16.msra.mxu0 %v1793
  %2706 = vmatprep.subr.bf16.mxu0 %v1786
  %2707 = vmatpush1.bf16.msra.mxu0 %v1785
  %2708 = vmatprep.subr.bf16.mxu0 %v1778
  %2709 = vmatpush1.bf16.msra.mxu0 %v1777
  %2710 = vmatprep.subr.bf16.mxu0 %v1770
  %2711 = vmatpush1.bf16.msra.mxu0 %v1769
  %2712 = vmatprep.subr.bf16.mxu0 %v1762
  %2713 = vmatpush1.bf16.msra.mxu0 %v1761
  %2714 = vmatprep.subr.bf16.mxu0 %v1754
  %2715 = vmatpush1.bf16.msra.mxu0 %v1753
  %2716 = vmatprep.subr.bf16.mxu0 %v1746
  %2717 = vmatpush1.bf16.msra.mxu0 %v1745
  %2718 = vmatprep.subr.bf16.mxu0 %v1866
  %2719 = vmatpush2.bf16.msra.mxu0 %v1865
  %2720 = vmatprep.subr.bf16.mxu0 %v1858
  %2721 = vmatpush2.bf16.msra.mxu0 %v1857
  %2722 = vmatprep.subr.bf16.mxu0 %v1850
  %2723 = vmatpush2.bf16.msra.mxu0 %v1849
  %2724 = vmatprep.subr.bf16.mxu0 %v1842
  %2725 = vmatpush2.bf16.msra.mxu0 %v1841
  %2726 = vmatprep.subr.bf16.mxu0 %v1834
  %2727 = vmatpush2.bf16.msra.mxu0 %v1833
  %2728 = vmatprep.subr.bf16.mxu0 %v1826
  %2729 = vmatpush2.bf16.msra.mxu0 %v1825
  %2730 = vmatprep.subr.bf16.mxu0 %v1818
  %2731 = vmatpush2.bf16.msra.mxu0 %v1817
  %2732 = vmatprep.subr.bf16.mxu0 %v1810
  %2733 = vmatpush2.bf16.msra.mxu0 %v1809
  %2734 = vmatprep.mubr.bf16.mxu0 %v2701
  %2735 = vmatmul.mubr.bf16.gmra.mxu0 %v2700
  %v2736 = vpop.f32.mrf.mxu0
  %v2737 = vadd.f32 0.0, %v2736
  %v2738 = vpop.f32.mrf.mxu0
  %v2739 = vadd.f32 0.0, %v2738
  %v2740 = vpop.f32.mrf.mxu0
  %v2741 = vpop.f32.mrf.mxu0
  %2742 = vdwg.mxu0
  %2743 = vmatprep.subr.bf16.mxu0 %v1804
  %2744 = vmatpush1.bf16.msra.mxu0 %v1803
  %2745 = vmatprep.subr.bf16.mxu0 %v1796
  %2746 = vmatpush1.bf16.msra.mxu0 %v1795
  %2747 = vmatprep.subr.bf16.mxu0 %v1788
  %2748 = vmatpush1.bf16.msra.mxu0 %v1787
  %2749 = vmatprep.subr.bf16.mxu0 %v1780
  %2750 = vmatpush1.bf16.msra.mxu0 %v1779
  %2751 = vmatprep.subr.bf16.mxu0 %v1772
  %2752 = vmatpush1.bf16.msra.mxu0 %v1771
  %2753 = vmatprep.subr.bf16.mxu0 %v1764
  %2754 = vmatpush1.bf16.msra.mxu0 %v1763
  %2755 = vmatprep.subr.bf16.mxu0 %v1756
  %2756 = vmatpush1.bf16.msra.mxu0 %v1755
  %2757 = vmatprep.subr.bf16.mxu0 %v1748
  %2758 = vmatpush1.bf16.msra.mxu0 %v1747
  %2759 = vmatprep.subr.bf16.mxu0 %v1868
  %2760 = vmatpush2.bf16.msra.mxu0 %v1867
  %2761 = vmatprep.subr.bf16.mxu0 %v1860
  %2762 = vmatpush2.bf16.msra.mxu0 %v1859
  %2763 = vmatprep.subr.bf16.mxu0 %v1852
  %2764 = vmatpush2.bf16.msra.mxu0 %v1851
  %2765 = vmatprep.subr.bf16.mxu0 %v1844
  %2766 = vmatpush2.bf16.msra.mxu0 %v1843
  %2767 = vmatprep.subr.bf16.mxu0 %v1836
  %2768 = vmatpush2.bf16.msra.mxu0 %v1835
  %2769 = vmatprep.subr.bf16.mxu0 %v1828
  %2770 = vmatpush2.bf16.msra.mxu0 %v1827
  %2771 = vmatprep.subr.bf16.mxu0 %v1820
  %2772 = vmatpush2.bf16.msra.mxu0 %v1819
  %2773 = vmatprep.subr.bf16.mxu0 %v1812
  %2774 = vmatpush2.bf16.msra.mxu0 %v1811
  %2775 = vmatprep.mubr.bf16.mxu0 %v2701
  %2776 = vmatmul.mubr.bf16.gmra.mxu0 %v2700
  %v2777 = vpop.f32.mrf.mxu0
  %v2778 = vadd.f32 0.0, %v2777
  %v2779 = vpop.f32.mrf.mxu0
  %v2780 = vadd.f32 0.0, %v2779
  %v2781 = vpop.f32.mrf.mxu0
  %v2782 = vpop.f32.mrf.mxu0
  %2783 = vdwg.mxu0
  %2784 = vmatprep.subr.bf16.mxu0 %v1806
  %2785 = vmatpush1.bf16.msra.mxu0 %v1805
  %2786 = vmatprep.subr.bf16.mxu0 %v1798
  %2787 = vmatpush1.bf16.msra.mxu0 %v1797
  %2788 = vmatprep.subr.bf16.mxu0 %v1790
  %2789 = vmatpush1.bf16.msra.mxu0 %v1789
  %2790 = vmatprep.subr.bf16.mxu0 %v1782
  %2791 = vmatpush1.bf16.msra.mxu0 %v1781
  %2792 = vmatprep.subr.bf16.mxu0 %v1774
  %2793 = vmatpush1.bf16.msra.mxu0 %v1773
  %2794 = vmatprep.subr.bf16.mxu0 %v1766
  %2795 = vmatpush1.bf16.msra.mxu0 %v1765
  %2796 = vmatprep.subr.bf16.mxu0 %v1758
  %2797 = vmatpush1.bf16.msra.mxu0 %v1757
  %2798 = vmatprep.subr.bf16.mxu0 %v1750
  %2799 = vmatpush1.bf16.msra.mxu0 %v1749
  %2800 = vmatprep.subr.bf16.mxu0 %v1870
  %2801 = vmatpush2.bf16.msra.mxu0 %v1869
  %2802 = vmatprep.subr.bf16.mxu0 %v1862
  %2803 = vmatpush2.bf16.msra.mxu0 %v1861
  %2804 = vmatprep.subr.bf16.mxu0 %v1854
  %2805 = vmatpush2.bf16.msra.mxu0 %v1853
  %2806 = vmatprep.subr.bf16.mxu0 %v1846
  %2807 = vmatpush2.bf16.msra.mxu0 %v1845
  %2808 = vmatprep.subr.bf16.mxu0 %v1838
  %2809 = vmatpush2.bf16.msra.mxu0 %v1837
  %2810 = vmatprep.subr.bf16.mxu0 %v1830
  %2811 = vmatpush2.bf16.msra.mxu0 %v1829
  %2812 = vmatprep.subr.bf16.mxu0 %v1822
  %2813 = vmatpush2.bf16.msra.mxu0 %v1821
  %2814 = vmatprep.subr.bf16.mxu0 %v1814
  %2815 = vmatpush2.bf16.msra.mxu0 %v1813
  %2816 = vmatprep.mubr.bf16.mxu0 %v2701
  %2817 = vmatmul.mubr.bf16.gmra.mxu0 %v2700
  %v2818 = vpop.f32.mrf.mxu0
  %v2819 = vadd.f32 0.0, %v2818
  %v2820 = vpop.f32.mrf.mxu0
  %v2821 = vadd.f32 0.0, %v2820
  %v2822 = vpop.f32.mrf.mxu0
  %v2823 = vpop.f32.mrf.mxu0
  %2824 = vdwg.mxu0
  %2825 = vmatprep.subr.bf16.mxu0 %v1808
  %2826 = vmatpush1.bf16.msra.mxu0 %v1807
  %2827 = vmatprep.subr.bf16.mxu0 %v1800
  %2828 = vmatpush1.bf16.msra.mxu0 %v1799
  %2829 = vmatprep.subr.bf16.mxu0 %v1792
  %2830 = vmatpush1.bf16.msra.mxu0 %v1791
  %2831 = vmatprep.subr.bf16.mxu0 %v1784
  %2832 = vmatpush1.bf16.msra.mxu0 %v1783
  %2833 = vmatprep.subr.bf16.mxu0 %v1776
  %2834 = vmatpush1.bf16.msra.mxu0 %v1775
  %2835 = vmatprep.subr.bf16.mxu0 %v1768
  %2836 = vmatpush1.bf16.msra.mxu0 %v1767
  %2837 = vmatprep.subr.bf16.mxu0 %v1760
  %2838 = vmatpush1.bf16.msra.mxu0 %v1759
  %2839 = vmatprep.subr.bf16.mxu0 %v1752
  %2840 = vmatpush1.bf16.msra.mxu0 %v1751
  %2841 = vmatprep.subr.bf16.mxu0 %v1872
  %2842 = vmatpush2.bf16.msra.mxu0 %v1871
  %2843 = vmatprep.subr.bf16.mxu0 %v1864
  %2844 = vmatpush2.bf16.msra.mxu0 %v1863
  %2845 = vmatprep.subr.bf16.mxu0 %v1856
  %2846 = vmatpush2.bf16.msra.mxu0 %v1855
  %2847 = vmatprep.subr.bf16.mxu0 %v1848
  %2848 = vmatpush2.bf16.msra.mxu0 %v1847
  %2849 = vmatprep.subr.bf16.mxu0 %v1840
  %2850 = vmatpush2.bf16.msra.mxu0 %v1839
  %2851 = vmatprep.subr.bf16.mxu0 %v1832
  %2852 = vmatpush2.bf16.msra.mxu0 %v1831
  %2853 = vmatprep.subr.bf16.mxu0 %v1824
  %2854 = vmatpush2.bf16.msra.mxu0 %v1823
  %2855 = vmatprep.subr.bf16.mxu0 %v1816
  %2856 = vmatpush2.bf16.msra.mxu0 %v1815
  %2857 = vmatprep.mubr.bf16.mxu0 %v2701
  %2858 = vmatmul.mubr.bf16.gmra.mxu0 %v2700
  %v2859 = vpop.f32.mrf.mxu0
  %v2860 = vadd.f32 0.0, %v2859
  %v2861 = vpop.f32.mrf.mxu0
  %v2862 = vadd.f32 0.0, %v2861
  %v2863 = vpop.f32.mrf.mxu0
  %v2864 = vpop.f32.mrf.mxu0
  %2865 = vdwg.mxu0
  %v2866 = vadd.f32 %v2692, %v2737
  %v2867 = vadd.f32 %v2693, %v2739
  %v2868 = vadd.f32 %v2694, %v2778
  %v2869 = vadd.f32 %v2695, %v2780
  %v2870 = vadd.f32 %v2696, %v2819
  %v2871 = vadd.f32 %v2697, %v2821
  %v2872 = vadd.f32 %v2698, %v2860
  %v2873 = vadd.f32 %v2699, %v2862
  %v2874 = vxor.u32 %v2866, 2147483648
  %v2875 = vxor.u32 %v2867, 2147483648
  %v2876 = vmul.f32 %v2874, 1.442695
  %v2877 = vpow.pop %v2876
  %v2878 = vmul.f32 %v2875, 1.442695
  %v2879 = vpow.pop %v2878
  %v2880 = vadd.f32 %v2877, 1.0
  %v2881 = vadd.f32 %v2879, 1.0
  %v2882 = vrcp.pop %v2880
  %v2883 = vmul.f32 1.0, %v2882
  %v2884 = vrcp.pop %v2881
  %v2885 = vmul.f32 1.0, %v2884
  %v2886 = vxor.u32 %v2868, 2147483648
  %v2887 = vxor.u32 %v2869, 2147483648
  %v2888 = vmul.f32 %v2886, 1.442695
  %v2889 = vpow.pop %v2888
  %v2890 = vmul.f32 %v2887, 1.442695
  %v2891 = vpow.pop %v2890
  %v2892 = vadd.f32 %v2889, 1.0
  %v2893 = vadd.f32 %v2891, 1.0
  %v2894 = vrcp.pop %v2892
  %v2895 = vmul.f32 1.0, %v2894
  %v2896 = vrcp.pop %v2893
  %v2897 = vmul.f32 1.0, %v2896
  %v2898 = vtanh.pop %v2870
  %v2899 = vtanh.pop %v2871
  %v2900 = vxor.u32 %v2872, 2147483648
  %v2901 = vxor.u32 %v2873, 2147483648
  %v2902 = vmul.f32 %v2900, 1.442695
  %v2903 = vpow.pop %v2902
  %v2904 = vmul.f32 %v2901, 1.442695
  %v2905 = vpow.pop %v2904
  %v2906 = vadd.f32 %v2903, 1.0
  %v2907 = vadd.f32 %v2905, 1.0
  %v2908 = vrcp.pop %v2906
  %v2909 = vmul.f32 1.0, %v2908
  %v2910 = vrcp.pop %v2907
  %v2911 = vmul.f32 1.0, %v2910
  %v2912 = vmul.f32 %v2895, %v2682
  %v2913 = vmul.f32 %v2897, %v2683
  %v2914 = vmul.f32 %v2883, %v2898
  %v2915 = vmul.f32 %v2885, %v2899
  %v2916 = vadd.f32 %v2912, %v2914
  %v2917 = vadd.f32 %v2913, %v2915
  %v2918 = vtanh.pop %v2916
  %v2919 = vtanh.pop %v2917
  %v2920 = vmul.f32 %v2909, %v2918
  %v2921 = vmul.f32 %v2911, %v2919
  %s2922 = scalar_lea.vmem [#allocation3], 48
  %2923 = vst [vmem:[%s2922] sm:$0xff] %v2920
  %2924 = vst [vmem:[%s2922 + $0x8] sm:$0xff] %v2921
  %s2925 = scalar_lea.vmem [#allocation2], 256
  %v2926 = vld [vmem:[%s2925] sm:$0xff]
  %v2927 = vld [vmem:[%s2925 + $0x8] sm:$0xff]
  %v2928 = vld [vmem:[%s2925 + $0x10] sm:$0xff]
  %v2929 = vld [vmem:[%s2925 + $0x18] sm:$0xff]
  %v2930 = vld [vmem:[%s2925 + $0x20] sm:$0xff]
  %v2931 = vld [vmem:[%s2925 + $0x28] sm:$0xff]
  %v2932 = vld [vmem:[%s2925 + $0x30] sm:$0xff]
  %v2933 = vld [vmem:[%s2925 + $0x38] sm:$0xff]
  %v2934 = vpack.c.bf16 %v2920, %v2920
  %v2935 = vpack.c.bf16 %v2921, %v2921
  %2936 = vmatprep.subr.bf16.mxu0 %v1802
  %2937 = vmatpush1.bf16.msra.mxu0 %v1801
  %2938 = vmatprep.subr.bf16.mxu0 %v1794
  %2939 = vmatpush1.bf16.msra.mxu0 %v1793
  %2940 = vmatprep.subr.bf16.mxu0 %v1786
  %2941 = vmatpush1.bf16.msra.mxu0 %v1785
  %2942 = vmatprep.subr.bf16.mxu0 %v1778
  %2943 = vmatpush1.bf16.msra.mxu0 %v1777
  %2944 = vmatprep.subr.bf16.mxu0 %v1770
  %2945 = vmatpush1.bf16.msra.mxu0 %v1769
  %2946 = vmatprep.subr.bf16.mxu0 %v1762
  %2947 = vmatpush1.bf16.msra.mxu0 %v1761
  %2948 = vmatprep.subr.bf16.mxu0 %v1754
  %2949 = vmatpush1.bf16.msra.mxu0 %v1753
  %2950 = vmatprep.subr.bf16.mxu0 %v1746
  %2951 = vmatpush1.bf16.msra.mxu0 %v1745
  %2952 = vmatprep.subr.bf16.mxu0 %v1866
  %2953 = vmatpush2.bf16.msra.mxu0 %v1865
  %2954 = vmatprep.subr.bf16.mxu0 %v1858
  %2955 = vmatpush2.bf16.msra.mxu0 %v1857
  %2956 = vmatprep.subr.bf16.mxu0 %v1850
  %2957 = vmatpush2.bf16.msra.mxu0 %v1849
  %2958 = vmatprep.subr.bf16.mxu0 %v1842
  %2959 = vmatpush2.bf16.msra.mxu0 %v1841
  %2960 = vmatprep.subr.bf16.mxu0 %v1834
  %2961 = vmatpush2.bf16.msra.mxu0 %v1833
  %2962 = vmatprep.subr.bf16.mxu0 %v1826
  %2963 = vmatpush2.bf16.msra.mxu0 %v1825
  %2964 = vmatprep.subr.bf16.mxu0 %v1818
  %2965 = vmatpush2.bf16.msra.mxu0 %v1817
  %2966 = vmatprep.subr.bf16.mxu0 %v1810
  %2967 = vmatpush2.bf16.msra.mxu0 %v1809
  %2968 = vmatprep.mubr.bf16.mxu0 %v2935
  %2969 = vmatmul.mubr.bf16.gmra.mxu0 %v2934
  %v2970 = vpop.f32.mrf.mxu0
  %v2971 = vadd.f32 0.0, %v2970
  %v2972 = vpop.f32.mrf.mxu0
  %v2973 = vadd.f32 0.0, %v2972
  %v2974 = vpop.f32.mrf.mxu0
  %v2975 = vpop.f32.mrf.mxu0
  %2976 = vdwg.mxu0
  %2977 = vmatprep.subr.bf16.mxu0 %v1804
  %2978 = vmatpush1.bf16.msra.mxu0 %v1803
  %2979 = vmatprep.subr.bf16.mxu0 %v1796
  %2980 = vmatpush1.bf16.msra.mxu0 %v1795
  %2981 = vmatprep.subr.bf16.mxu0 %v1788
  %2982 = vmatpush1.bf16.msra.mxu0 %v1787
  %2983 = vmatprep.subr.bf16.mxu0 %v1780
  %2984 = vmatpush1.bf16.msra.mxu0 %v1779
  %2985 = vmatprep.subr.bf16.mxu0 %v1772
  %2986 = vmatpush1.bf16.msra.mxu0 %v1771
  %2987 = vmatprep.subr.bf16.mxu0 %v1764
  %2988 = vmatpush1.bf16.msra.mxu0 %v1763
  %2989 = vmatprep.subr.bf16.mxu0 %v1756
  %2990 = vmatpush1.bf16.msra.mxu0 %v1755
  %2991 = vmatprep.subr.bf16.mxu0 %v1748
  %2992 = vmatpush1.bf16.msra.mxu0 %v1747
  %2993 = vmatprep.subr.bf16.mxu0 %v1868
  %2994 = vmatpush2.bf16.msra.mxu0 %v1867
  %2995 = vmatprep.subr.bf16.mxu0 %v1860
  %2996 = vmatpush2.bf16.msra.mxu0 %v1859
  %2997 = vmatprep.subr.bf16.mxu0 %v1852
  %2998 = vmatpush2.bf16.msra.mxu0 %v1851
  %2999 = vmatprep.subr.bf16.mxu0 %v1844
  %3000 = vmatpush2.bf16.msra.mxu0 %v1843
  %3001 = vmatprep.subr.bf16.mxu0 %v1836
  %3002 = vmatpush2.bf16.msra.mxu0 %v1835
  %3003 = vmatprep.subr.bf16.mxu0 %v1828
  %3004 = vmatpush2.bf16.msra.mxu0 %v1827
  %3005 = vmatprep.subr.bf16.mxu0 %v1820
  %3006 = vmatpush2.bf16.msra.mxu0 %v1819
  %3007 = vmatprep.subr.bf16.mxu0 %v1812
  %3008 = vmatpush2.bf16.msra.mxu0 %v1811
  %3009 = vmatprep.mubr.bf16.mxu0 %v2935
  %3010 = vmatmul.mubr.bf16.gmra.mxu0 %v2934
  %v3011 = vpop.f32.mrf.mxu0
  %v3012 = vadd.f32 0.0, %v3011
  %v3013 = vpop.f32.mrf.mxu0
  %v3014 = vadd.f32 0.0, %v3013
  %v3015 = vpop.f32.mrf.mxu0
  %v3016 = vpop.f32.mrf.mxu0
  %3017 = vdwg.mxu0
  %3018 = vmatprep.subr.bf16.mxu0 %v1806
  %3019 = vmatpush1.bf16.msra.mxu0 %v1805
  %3020 = vmatprep.subr.bf16.mxu0 %v1798
  %3021 = vmatpush1.bf16.msra.mxu0 %v1797
  %3022 = vmatprep.subr.bf16.mxu0 %v1790
  %3023 = vmatpush1.bf16.msra.mxu0 %v1789
  %3024 = vmatprep.subr.bf16.mxu0 %v1782
  %3025 = vmatpush1.bf16.msra.mxu0 %v1781
  %3026 = vmatprep.subr.bf16.mxu0 %v1774
  %3027 = vmatpush1.bf16.msra.mxu0 %v1773
  %3028 = vmatprep.subr.bf16.mxu0 %v1766
  %3029 = vmatpush1.bf16.msra.mxu0 %v1765
  %3030 = vmatprep.subr.bf16.mxu0 %v1758
  %3031 = vmatpush1.bf16.msra.mxu0 %v1757
  %3032 = vmatprep.subr.bf16.mxu0 %v1750
  %3033 = vmatpush1.bf16.msra.mxu0 %v1749
  %3034 = vmatprep.subr.bf16.mxu0 %v1870
  %3035 = vmatpush2.bf16.msra.mxu0 %v1869
  %3036 = vmatprep.subr.bf16.mxu0 %v1862
  %3037 = vmatpush2.bf16.msra.mxu0 %v1861
  %3038 = vmatprep.subr.bf16.mxu0 %v1854
  %3039 = vmatpush2.bf16.msra.mxu0 %v1853
  %3040 = vmatprep.subr.bf16.mxu0 %v1846
  %3041 = vmatpush2.bf16.msra.mxu0 %v1845
  %3042 = vmatprep.subr.bf16.mxu0 %v1838
  %3043 = vmatpush2.bf16.msra.mxu0 %v1837
  %3044 = vmatprep.subr.bf16.mxu0 %v1830
  %3045 = vmatpush2.bf16.msra.mxu0 %v1829
  %3046 = vmatprep.subr.bf16.mxu0 %v1822
  %3047 = vmatpush2.bf16.msra.mxu0 %v1821
  %3048 = vmatprep.subr.bf16.mxu0 %v1814
  %3049 = vmatpush2.bf16.msra.mxu0 %v1813
  %3050 = vmatprep.mubr.bf16.mxu0 %v2935
  %3051 = vmatmul.mubr.bf16.gmra.mxu0 %v2934
  %v3052 = vpop.f32.mrf.mxu0
  %v3053 = vadd.f32 0.0, %v3052
  %v3054 = vpop.f32.mrf.mxu0
  %v3055 = vadd.f32 0.0, %v3054
  %v3056 = vpop.f32.mrf.mxu0
  %v3057 = vpop.f32.mrf.mxu0
  %3058 = vdwg.mxu0
  %3059 = vmatprep.subr.bf16.mxu0 %v1808
  %3060 = vmatpush1.bf16.msra.mxu0 %v1807
  %3061 = vmatprep.subr.bf16.mxu0 %v1800
  %3062 = vmatpush1.bf16.msra.mxu0 %v1799
  %3063 = vmatprep.subr.bf16.mxu0 %v1792
  %3064 = vmatpush1.bf16.msra.mxu0 %v1791
  %3065 = vmatprep.subr.bf16.mxu0 %v1784
  %3066 = vmatpush1.bf16.msra.mxu0 %v1783
  %3067 = vmatprep.subr.bf16.mxu0 %v1776
  %3068 = vmatpush1.bf16.msra.mxu0 %v1775
  %3069 = vmatprep.subr.bf16.mxu0 %v1768
  %3070 = vmatpush1.bf16.msra.mxu0 %v1767
  %3071 = vmatprep.subr.bf16.mxu0 %v1760
  %3072 = vmatpush1.bf16.msra.mxu0 %v1759
  %3073 = vmatprep.subr.bf16.mxu0 %v1752
  %3074 = vmatpush1.bf16.msra.mxu0 %v1751
  %3075 = vmatprep.subr.bf16.mxu0 %v1872
  %3076 = vmatpush2.bf16.msra.mxu0 %v1871
  %3077 = vmatprep.subr.bf16.mxu0 %v1864
  %3078 = vmatpush2.bf16.msra.mxu0 %v1863
  %3079 = vmatprep.subr.bf16.mxu0 %v1856
  %3080 = vmatpush2.bf16.msra.mxu0 %v1855
  %3081 = vmatprep.subr.bf16.mxu0 %v1848
  %3082 = vmatpush2.bf16.msra.mxu0 %v1847
  %3083 = vmatprep.subr.bf16.mxu0 %v1840
  %3084 = vmatpush2.bf16.msra.mxu0 %v1839
  %3085 = vmatprep.subr.bf16.mxu0 %v1832
  %3086 = vmatpush2.bf16.msra.mxu0 %v1831
  %3087 = vmatprep.subr.bf16.mxu0 %v1824
  %3088 = vmatpush2.bf16.msra.mxu0 %v1823
  %3089 = vmatprep.subr.bf16.mxu0 %v1816
  %3090 = vmatpush2.bf16.msra.mxu0 %v1815
  %3091 = vmatprep.mubr.bf16.mxu0 %v2935
  %3092 = vmatmul.mubr.bf16.gmra.mxu0 %v2934
  %v3093 = vpop.f32.mrf.mxu0
  %v3094 = vadd.f32 0.0, %v3093
  %v3095 = vpop.f32.mrf.mxu0
  %v3096 = vadd.f32 0.0, %v3095
  %v3097 = vpop.f32.mrf.mxu0
  %v3098 = vpop.f32.mrf.mxu0
  %3099 = vdwg.mxu0
  %v3100 = vadd.f32 %v2926, %v2971
  %v3101 = vadd.f32 %v2927, %v2973
  %v3102 = vadd.f32 %v2928, %v3012
  %v3103 = vadd.f32 %v2929, %v3014
  %v3104 = vadd.f32 %v2930, %v3053
  %v3105 = vadd.f32 %v2931, %v3055
  %v3106 = vadd.f32 %v2932, %v3094
  %v3107 = vadd.f32 %v2933, %v3096
  %v3108 = vxor.u32 %v3100, 2147483648
  %v3109 = vxor.u32 %v3101, 2147483648
  %v3110 = vmul.f32 %v3108, 1.442695
  %v3111 = vpow.pop %v3110
  %v3112 = vmul.f32 %v3109, 1.442695
  %v3113 = vpow.pop %v3112
  %v3114 = vadd.f32 %v3111, 1.0
  %v3115 = vadd.f32 %v3113, 1.0
  %v3116 = vrcp.pop %v3114
  %v3117 = vmul.f32 1.0, %v3116
  %v3118 = vrcp.pop %v3115
  %v3119 = vmul.f32 1.0, %v3118
  %v3120 = vxor.u32 %v3102, 2147483648
  %v3121 = vxor.u32 %v3103, 2147483648
  %v3122 = vmul.f32 %v3120, 1.442695
  %v3123 = vpow.pop %v3122
  %v3124 = vmul.f32 %v3121, 1.442695
  %v3125 = vpow.pop %v3124
  %v3126 = vadd.f32 %v3123, 1.0
  %v3127 = vadd.f32 %v3125, 1.0
  %v3128 = vrcp.pop %v3126
  %v3129 = vmul.f32 1.0, %v3128
  %v3130 = vrcp.pop %v3127
  %v3131 = vmul.f32 1.0, %v3130
  %v3132 = vtanh.pop %v3104
  %v3133 = vtanh.pop %v3105
  %v3134 = vxor.u32 %v3106, 2147483648
  %v3135 = vxor.u32 %v3107, 2147483648
  %v3136 = vmul.f32 %v3134, 1.442695
  %v3137 = vpow.pop %v3136
  %v3138 = vmul.f32 %v3135, 1.442695
  %v3139 = vpow.pop %v3138
  %v3140 = vadd.f32 %v3137, 1.0
  %v3141 = vadd.f32 %v3139, 1.0
  %v3142 = vrcp.pop %v3140
  %v3143 = vmul.f32 1.0, %v3142
  %v3144 = vrcp.pop %v3141
  %v3145 = vmul.f32 1.0, %v3144
  %v3146 = vmul.f32 %v3129, %v2916
  %v3147 = vmul.f32 %v3131, %v2917
  %v3148 = vmul.f32 %v3117, %v3132
  %v3149 = vmul.f32 %v3119, %v3133
  %v3150 = vadd.f32 %v3146, %v3148
  %v3151 = vadd.f32 %v3147, %v3149
  %v3152 = vtanh.pop %v3150
  %v3153 = vtanh.pop %v3151
  %v3154 = vmul.f32 %v3143, %v3152
  %v3155 = vmul.f32 %v3145, %v3153
  %s3156 = scalar_lea.vmem [#allocation3], 64
  %3157 = vst [vmem:[%s3156] sm:$0xff] %v3154
  %3158 = vst [vmem:[%s3156 + $0x8] sm:$0xff] %v3155
  %s3159 = scalar_lea.vmem [#allocation2], 320
  %v3160 = vld [vmem:[%s3159] sm:$0xff]
  %v3161 = vld [vmem:[%s3159 + $0x8] sm:$0xff]
  %v3162 = vld [vmem:[%s3159 + $0x10] sm:$0xff]
  %v3163 = vld [vmem:[%s3159 + $0x18] sm:$0xff]
  %v3164 = vld [vmem:[%s3159 + $0x20] sm:$0xff]
  %v3165 = vld [vmem:[%s3159 + $0x28] sm:$0xff]
  %v3166 = vld [vmem:[%s3159 + $0x30] sm:$0xff]
  %v3167 = vld [vmem:[%s3159 + $0x38] sm:$0xff]
  %v3168 = vpack.c.bf16 %v3154, %v3154
  %v3169 = vpack.c.bf16 %v3155, %v3155
  %3170 = vmatprep.subr.bf16.mxu0 %v1802
  %3171 = vmatpush1.bf16.msra.mxu0 %v1801
  %3172 = vmatprep.subr.bf16.mxu0 %v1794
  %3173 = vmatpush1.bf16.msra.mxu0 %v1793
  %3174 = vmatprep.subr.bf16.mxu0 %v1786
  %3175 = vmatpush1.bf16.msra.mxu0 %v1785
  %3176 = vmatprep.subr.bf16.mxu0 %v1778
  %3177 = vmatpush1.bf16.msra.mxu0 %v1777
  %3178 = vmatprep.subr.bf16.mxu0 %v1770
  %3179 = vmatpush1.bf16.msra.mxu0 %v1769
  %3180 = vmatprep.subr.bf16.mxu0 %v1762
  %3181 = vmatpush1.bf16.msra.mxu0 %v1761
  %3182 = vmatprep.subr.bf16.mxu0 %v1754
  %3183 = vmatpush1.bf16.msra.mxu0 %v1753
  %3184 = vmatprep.subr.bf16.mxu0 %v1746
  %3185 = vmatpush1.bf16.msra.mxu0 %v1745
  %3186 = vmatprep.subr.bf16.mxu0 %v1866
  %3187 = vmatpush2.bf16.msra.mxu0 %v1865
  %3188 = vmatprep.subr.bf16.mxu0 %v1858
  %3189 = vmatpush2.bf16.msra.mxu0 %v1857
  %3190 = vmatprep.subr.bf16.mxu0 %v1850
  %3191 = vmatpush2.bf16.msra.mxu0 %v1849
  %3192 = vmatprep.subr.bf16.mxu0 %v1842
  %3193 = vmatpush2.bf16.msra.mxu0 %v1841
  %3194 = vmatprep.subr.bf16.mxu0 %v1834
  %3195 = vmatpush2.bf16.msra.mxu0 %v1833
  %3196 = vmatprep.subr.bf16.mxu0 %v1826
  %3197 = vmatpush2.bf16.msra.mxu0 %v1825
  %3198 = vmatprep.subr.bf16.mxu0 %v1818
  %3199 = vmatpush2.bf16.msra.mxu0 %v1817
  %3200 = vmatprep.subr.bf16.mxu0 %v1810
  %3201 = vmatpush2.bf16.msra.mxu0 %v1809
  %3202 = vmatprep.mubr.bf16.mxu0 %v3169
  %3203 = vmatmul.mubr.bf16.gmra.mxu0 %v3168
  %v3204 = vpop.f32.mrf.mxu0
  %v3205 = vadd.f32 0.0, %v3204
  %v3206 = vpop.f32.mrf.mxu0
  %v3207 = vadd.f32 0.0, %v3206
  %v3208 = vpop.f32.mrf.mxu0
  %v3209 = vpop.f32.mrf.mxu0
  %3210 = vdwg.mxu0
  %3211 = vmatprep.subr.bf16.mxu0 %v1804
  %3212 = vmatpush1.bf16.msra.mxu0 %v1803
  %3213 = vmatprep.subr.bf16.mxu0 %v1796
  %3214 = vmatpush1.bf16.msra.mxu0 %v1795
  %3215 = vmatprep.subr.bf16.mxu0 %v1788
  %3216 = vmatpush1.bf16.msra.mxu0 %v1787
  %3217 = vmatprep.subr.bf16.mxu0 %v1780
  %3218 = vmatpush1.bf16.msra.mxu0 %v1779
  %3219 = vmatprep.subr.bf16.mxu0 %v1772
  %3220 = vmatpush1.bf16.msra.mxu0 %v1771
  %3221 = vmatprep.subr.bf16.mxu0 %v1764
  %3222 = vmatpush1.bf16.msra.mxu0 %v1763
  %3223 = vmatprep.subr.bf16.mxu0 %v1756
  %3224 = vmatpush1.bf16.msra.mxu0 %v1755
  %3225 = vmatprep.subr.bf16.mxu0 %v1748
  %3226 = vmatpush1.bf16.msra.mxu0 %v1747
  %3227 = vmatprep.subr.bf16.mxu0 %v1868
  %3228 = vmatpush2.bf16.msra.mxu0 %v1867
  %3229 = vmatprep.subr.bf16.mxu0 %v1860
  %3230 = vmatpush2.bf16.msra.mxu0 %v1859
  %3231 = vmatprep.subr.bf16.mxu0 %v1852
  %3232 = vmatpush2.bf16.msra.mxu0 %v1851
  %3233 = vmatprep.subr.bf16.mxu0 %v1844
  %3234 = vmatpush2.bf16.msra.mxu0 %v1843
  %3235 = vmatprep.subr.bf16.mxu0 %v1836
  %3236 = vmatpush2.bf16.msra.mxu0 %v1835
  %3237 = vmatprep.subr.bf16.mxu0 %v1828
  %3238 = vmatpush2.bf16.msra.mxu0 %v1827
  %3239 = vmatprep.subr.bf16.mxu0 %v1820
  %3240 = vmatpush2.bf16.msra.mxu0 %v1819
  %3241 = vmatprep.subr.bf16.mxu0 %v1812
  %3242 = vmatpush2.bf16.msra.mxu0 %v1811
  %3243 = vmatprep.mubr.bf16.mxu0 %v3169
  %3244 = vmatmul.mubr.bf16.gmra.mxu0 %v3168
  %v3245 = vpop.f32.mrf.mxu0
  %v3246 = vadd.f32 0.0, %v3245
  %v3247 = vpop.f32.mrf.mxu0
  %v3248 = vadd.f32 0.0, %v3247
  %v3249 = vpop.f32.mrf.mxu0
  %v3250 = vpop.f32.mrf.mxu0
  %3251 = vdwg.mxu0
  %3252 = vmatprep.subr.bf16.mxu0 %v1806
  %3253 = vmatpush1.bf16.msra.mxu0 %v1805
  %3254 = vmatprep.subr.bf16.mxu0 %v1798
  %3255 = vmatpush1.bf16.msra.mxu0 %v1797
  %3256 = vmatprep.subr.bf16.mxu0 %v1790
  %3257 = vmatpush1.bf16.msra.mxu0 %v1789
  %3258 = vmatprep.subr.bf16.mxu0 %v1782
  %3259 = vmatpush1.bf16.msra.mxu0 %v1781
  %3260 = vmatprep.subr.bf16.mxu0 %v1774
  %3261 = vmatpush1.bf16.msra.mxu0 %v1773
  %3262 = vmatprep.subr.bf16.mxu0 %v1766
  %3263 = vmatpush1.bf16.msra.mxu0 %v1765
  %3264 = vmatprep.subr.bf16.mxu0 %v1758
  %3265 = vmatpush1.bf16.msra.mxu0 %v1757
  %3266 = vmatprep.subr.bf16.mxu0 %v1750
  %3267 = vmatpush1.bf16.msra.mxu0 %v1749
  %3268 = vmatprep.subr.bf16.mxu0 %v1870
  %3269 = vmatpush2.bf16.msra.mxu0 %v1869
  %3270 = vmatprep.subr.bf16.mxu0 %v1862
  %3271 = vmatpush2.bf16.msra.mxu0 %v1861
  %3272 = vmatprep.subr.bf16.mxu0 %v1854
  %3273 = vmatpush2.bf16.msra.mxu0 %v1853
  %3274 = vmatprep.subr.bf16.mxu0 %v1846
  %3275 = vmatpush2.bf16.msra.mxu0 %v1845
  %3276 = vmatprep.subr.bf16.mxu0 %v1838
  %3277 = vmatpush2.bf16.msra.mxu0 %v1837
  %3278 = vmatprep.subr.bf16.mxu0 %v1830
  %3279 = vmatpush2.bf16.msra.mxu0 %v1829
  %3280 = vmatprep.subr.bf16.mxu0 %v1822
  %3281 = vmatpush2.bf16.msra.mxu0 %v1821
  %3282 = vmatprep.subr.bf16.mxu0 %v1814
  %3283 = vmatpush2.bf16.msra.mxu0 %v1813
  %3284 = vmatprep.mubr.bf16.mxu0 %v3169
  %3285 = vmatmul.mubr.bf16.gmra.mxu0 %v3168
  %v3286 = vpop.f32.mrf.mxu0
  %v3287 = vadd.f32 0.0, %v3286
  %v3288 = vpop.f32.mrf.mxu0
  %v3289 = vadd.f32 0.0, %v3288
  %v3290 = vpop.f32.mrf.mxu0
  %v3291 = vpop.f32.mrf.mxu0
  %3292 = vdwg.mxu0
  %3293 = vmatprep.subr.bf16.mxu0 %v1808
  %3294 = vmatpush1.bf16.msra.mxu0 %v1807
  %3295 = vmatprep.subr.bf16.mxu0 %v1800
  %3296 = vmatpush1.bf16.msra.mxu0 %v1799
  %3297 = vmatprep.subr.bf16.mxu0 %v1792
  %3298 = vmatpush1.bf16.msra.mxu0 %v1791
  %3299 = vmatprep.subr.bf16.mxu0 %v1784
  %3300 = vmatpush1.bf16.msra.mxu0 %v1783
  %3301 = vmatprep.subr.bf16.mxu0 %v1776
  %3302 = vmatpush1.bf16.msra.mxu0 %v1775
  %3303 = vmatprep.subr.bf16.mxu0 %v1768
  %3304 = vmatpush1.bf16.msra.mxu0 %v1767
  %3305 = vmatprep.subr.bf16.mxu0 %v1760
  %3306 = vmatpush1.bf16.msra.mxu0 %v1759
  %3307 = vmatprep.subr.bf16.mxu0 %v1752
  %3308 = vmatpush1.bf16.msra.mxu0 %v1751
  %3309 = vmatprep.subr.bf16.mxu0 %v1872
  %3310 = vmatpush2.bf16.msra.mxu0 %v1871
  %3311 = vmatprep.subr.bf16.mxu0 %v1864
  %3312 = vmatpush2.bf16.msra.mxu0 %v1863
  %3313 = vmatprep.subr.bf16.mxu0 %v1856
  %3314 = vmatpush2.bf16.msra.mxu0 %v1855
  %3315 = vmatprep.subr.bf16.mxu0 %v1848
  %3316 = vmatpush2.bf16.msra.mxu0 %v1847
  %3317 = vmatprep.subr.bf16.mxu0 %v1840
  %3318 = vmatpush2.bf16.msra.mxu0 %v1839
  %3319 = vmatprep.subr.bf16.mxu0 %v1832
  %3320 = vmatpush2.bf16.msra.mxu0 %v1831
  %3321 = vmatprep.subr.bf16.mxu0 %v1824
  %3322 = vmatpush2.bf16.msra.mxu0 %v1823
  %3323 = vmatprep.subr.bf16.mxu0 %v1816
  %3324 = vmatpush2.bf16.msra.mxu0 %v1815
  %3325 = vmatprep.mubr.bf16.mxu0 %v3169
  %3326 = vmatmul.mubr.bf16.gmra.mxu0 %v3168
  %v3327 = vpop.f32.mrf.mxu0
  %v3328 = vadd.f32 0.0, %v3327
  %v3329 = vpop.f32.mrf.mxu0
  %v3330 = vadd.f32 0.0, %v3329
  %v3331 = vpop.f32.mrf.mxu0
  %v3332 = vpop.f32.mrf.mxu0
  %3333 = vdwg.mxu0
  %v3334 = vadd.f32 %v3160, %v3205
  %v3335 = vadd.f32 %v3161, %v3207
  %v3336 = vadd.f32 %v3162, %v3246
  %v3337 = vadd.f32 %v3163, %v3248
  %v3338 = vadd.f32 %v3164, %v3287
  %v3339 = vadd.f32 %v3165, %v3289
  %v3340 = vadd.f32 %v3166, %v3328
  %v3341 = vadd.f32 %v3167, %v3330
  %v3342 = vxor.u32 %v3334, 2147483648
  %v3343 = vxor.u32 %v3335, 2147483648
  %v3344 = vmul.f32 %v3342, 1.442695
  %v3345 = vpow.pop %v3344
  %v3346 = vmul.f32 %v3343, 1.442695
  %v3347 = vpow.pop %v3346
  %v3348 = vadd.f32 %v3345, 1.0
  %v3349 = vadd.f32 %v3347, 1.0
  %v3350 = vrcp.pop %v3348
  %v3351 = vmul.f32 1.0, %v3350
  %v3352 = vrcp.pop %v3349
  %v3353 = vmul.f32 1.0, %v3352
  %v3354 = vxor.u32 %v3336, 2147483648
  %v3355 = vxor.u32 %v3337, 2147483648
  %v3356 = vmul.f32 %v3354, 1.442695
  %v3357 = vpow.pop %v3356
  %v3358 = vmul.f32 %v3355, 1.442695
  %v3359 = vpow.pop %v3358
  %v3360 = vadd.f32 %v3357, 1.0
  %v3361 = vadd.f32 %v3359, 1.0
  %v3362 = vrcp.pop %v3360
  %v3363 = vmul.f32 1.0, %v3362
  %v3364 = vrcp.pop %v3361
  %v3365 = vmul.f32 1.0, %v3364
  %v3366 = vtanh.pop %v3338
  %v3367 = vtanh.pop %v3339
  %v3368 = vxor.u32 %v3340, 2147483648
  %v3369 = vxor.u32 %v3341, 2147483648
  %v3370 = vmul.f32 %v3368, 1.442695
  %v3371 = vpow.pop %v3370
  %v3372 = vmul.f32 %v3369, 1.442695
  %v3373 = vpow.pop %v3372
  %v3374 = vadd.f32 %v3371, 1.0
  %v3375 = vadd.f32 %v3373, 1.0
  %v3376 = vrcp.pop %v3374
  %v3377 = vmul.f32 1.0, %v3376
  %v3378 = vrcp.pop %v3375
  %v3379 = vmul.f32 1.0, %v3378
  %v3380 = vmul.f32 %v3363, %v3150
  %v3381 = vmul.f32 %v3365, %v3151
  %v3382 = vmul.f32 %v3351, %v3366
  %v3383 = vmul.f32 %v3353, %v3367
  %v3384 = vadd.f32 %v3380, %v3382
  %v3385 = vadd.f32 %v3381, %v3383
  %v3386 = vtanh.pop %v3384
  %v3387 = vtanh.pop %v3385
  %v3388 = vmul.f32 %v3377, %v3386
  %v3389 = vmul.f32 %v3379, %v3387
  %s3390 = scalar_lea.vmem [#allocation3], 80
  %3391 = vst [vmem:[%s3390] sm:$0xff] %v3388
  %3392 = vst [vmem:[%s3390 + $0x8] sm:$0xff] %v3389
  %s3393 = scalar_lea.vmem [#allocation2], 384
  %v3394 = vld [vmem:[%s3393] sm:$0xff]
  %v3395 = vld [vmem:[%s3393 + $0x8] sm:$0xff]
  %v3396 = vld [vmem:[%s3393 + $0x10] sm:$0xff]
  %v3397 = vld [vmem:[%s3393 + $0x18] sm:$0xff]
  %v3398 = vld [vmem:[%s3393 + $0x20] sm:$0xff]
  %v3399 = vld [vmem:[%s3393 + $0x28] sm:$0xff]
  %v3400 = vld [vmem:[%s3393 + $0x30] sm:$0xff]
  %v3401 = vld [vmem:[%s3393 + $0x38] sm:$0xff]
  %v3402 = vpack.c.bf16 %v3388, %v3388
  %v3403 = vpack.c.bf16 %v3389, %v3389
  %3404 = vmatprep.subr.bf16.mxu0 %v1802
  %3405 = vmatpush1.bf16.msra.mxu0 %v1801
  %3406 = vmatprep.subr.bf16.mxu0 %v1794
  %3407 = vmatpush1.bf16.msra.mxu0 %v1793
  %3408 = vmatprep.subr.bf16.mxu0 %v1786
  %3409 = vmatpush1.bf16.msra.mxu0 %v1785
  %3410 = vmatprep.subr.bf16.mxu0 %v1778
  %3411 = vmatpush1.bf16.msra.mxu0 %v1777
  %3412 = vmatprep.subr.bf16.mxu0 %v1770
  %3413 = vmatpush1.bf16.msra.mxu0 %v1769
  %3414 = vmatprep.subr.bf16.mxu0 %v1762
  %3415 = vmatpush1.bf16.msra.mxu0 %v1761
  %3416 = vmatprep.subr.bf16.mxu0 %v1754
  %3417 = vmatpush1.bf16.msra.mxu0 %v1753
  %3418 = vmatprep.subr.bf16.mxu0 %v1746
  %3419 = vmatpush1.bf16.msra.mxu0 %v1745
  %3420 = vmatprep.subr.bf16.mxu0 %v1866
  %3421 = vmatpush2.bf16.msra.mxu0 %v1865
  %3422 = vmatprep.subr.bf16.mxu0 %v1858
  %3423 = vmatpush2.bf16.msra.mxu0 %v1857
  %3424 = vmatprep.subr.bf16.mxu0 %v1850
  %3425 = vmatpush2.bf16.msra.mxu0 %v1849
  %3426 = vmatprep.subr.bf16.mxu0 %v1842
  %3427 = vmatpush2.bf16.msra.mxu0 %v1841
  %3428 = vmatprep.subr.bf16.mxu0 %v1834
  %3429 = vmatpush2.bf16.msra.mxu0 %v1833
  %3430 = vmatprep.subr.bf16.mxu0 %v1826
  %3431 = vmatpush2.bf16.msra.mxu0 %v1825
  %3432 = vmatprep.subr.bf16.mxu0 %v1818
  %3433 = vmatpush2.bf16.msra.mxu0 %v1817
  %3434 = vmatprep.subr.bf16.mxu0 %v1810
  %3435 = vmatpush2.bf16.msra.mxu0 %v1809
  %3436 = vmatprep.mubr.bf16.mxu0 %v3403
  %3437 = vmatmul.mubr.bf16.gmra.mxu0 %v3402
  %v3438 = vpop.f32.mrf.mxu0
  %v3439 = vadd.f32 0.0, %v3438
  %v3440 = vpop.f32.mrf.mxu0
  %v3441 = vadd.f32 0.0, %v3440
  %v3442 = vpop.f32.mrf.mxu0
  %v3443 = vpop.f32.mrf.mxu0
  %3444 = vdwg.mxu0
  %3445 = vmatprep.subr.bf16.mxu0 %v1804
  %3446 = vmatpush1.bf16.msra.mxu0 %v1803
  %3447 = vmatprep.subr.bf16.mxu0 %v1796
  %3448 = vmatpush1.bf16.msra.mxu0 %v1795
  %3449 = vmatprep.subr.bf16.mxu0 %v1788
  %3450 = vmatpush1.bf16.msra.mxu0 %v1787
  %3451 = vmatprep.subr.bf16.mxu0 %v1780
  %3452 = vmatpush1.bf16.msra.mxu0 %v1779
  %3453 = vmatprep.subr.bf16.mxu0 %v1772
  %3454 = vmatpush1.bf16.msra.mxu0 %v1771
  %3455 = vmatprep.subr.bf16.mxu0 %v1764
  %3456 = vmatpush1.bf16.msra.mxu0 %v1763
  %3457 = vmatprep.subr.bf16.mxu0 %v1756
  %3458 = vmatpush1.bf16.msra.mxu0 %v1755
  %3459 = vmatprep.subr.bf16.mxu0 %v1748
  %3460 = vmatpush1.bf16.msra.mxu0 %v1747
  %3461 = vmatprep.subr.bf16.mxu0 %v1868
  %3462 = vmatpush2.bf16.msra.mxu0 %v1867
  %3463 = vmatprep.subr.bf16.mxu0 %v1860
  %3464 = vmatpush2.bf16.msra.mxu0 %v1859
  %3465 = vmatprep.subr.bf16.mxu0 %v1852
  %3466 = vmatpush2.bf16.msra.mxu0 %v1851
  %3467 = vmatprep.subr.bf16.mxu0 %v1844
  %3468 = vmatpush2.bf16.msra.mxu0 %v1843
  %3469 = vmatprep.subr.bf16.mxu0 %v1836
  %3470 = vmatpush2.bf16.msra.mxu0 %v1835
  %3471 = vmatprep.subr.bf16.mxu0 %v1828
  %3472 = vmatpush2.bf16.msra.mxu0 %v1827
  %3473 = vmatprep.subr.bf16.mxu0 %v1820
  %3474 = vmatpush2.bf16.msra.mxu0 %v1819
  %3475 = vmatprep.subr.bf16.mxu0 %v1812
  %3476 = vmatpush2.bf16.msra.mxu0 %v1811
  %3477 = vmatprep.mubr.bf16.mxu0 %v3403
  %3478 = vmatmul.mubr.bf16.gmra.mxu0 %v3402
  %v3479 = vpop.f32.mrf.mxu0
  %v3480 = vadd.f32 0.0, %v3479
  %v3481 = vpop.f32.mrf.mxu0
  %v3482 = vadd.f32 0.0, %v3481
  %v3483 = vpop.f32.mrf.mxu0
  %v3484 = vpop.f32.mrf.mxu0
  %3485 = vdwg.mxu0
  %3486 = vmatprep.subr.bf16.mxu0 %v1806
  %3487 = vmatpush1.bf16.msra.mxu0 %v1805
  %3488 = vmatprep.subr.bf16.mxu0 %v1798
  %3489 = vmatpush1.bf16.msra.mxu0 %v1797
  %3490 = vmatprep.subr.bf16.mxu0 %v1790
  %3491 = vmatpush1.bf16.msra.mxu0 %v1789
  %3492 = vmatprep.subr.bf16.mxu0 %v1782
  %3493 = vmatpush1.bf16.msra.mxu0 %v1781
  %3494 = vmatprep.subr.bf16.mxu0 %v1774
  %3495 = vmatpush1.bf16.msra.mxu0 %v1773
  %3496 = vmatprep.subr.bf16.mxu0 %v1766
  %3497 = vmatpush1.bf16.msra.mxu0 %v1765
  %3498 = vmatprep.subr.bf16.mxu0 %v1758
  %3499 = vmatpush1.bf16.msra.mxu0 %v1757
  %3500 = vmatprep.subr.bf16.mxu0 %v1750
  %3501 = vmatpush1.bf16.msra.mxu0 %v1749
  %3502 = vmatprep.subr.bf16.mxu0 %v1870
  %3503 = vmatpush2.bf16.msra.mxu0 %v1869
  %3504 = vmatprep.subr.bf16.mxu0 %v1862
  %3505 = vmatpush2.bf16.msra.mxu0 %v1861
  %3506 = vmatprep.subr.bf16.mxu0 %v1854
  %3507 = vmatpush2.bf16.msra.mxu0 %v1853
  %3508 = vmatprep.subr.bf16.mxu0 %v1846
  %3509 = vmatpush2.bf16.msra.mxu0 %v1845
  %3510 = vmatprep.subr.bf16.mxu0 %v1838
  %3511 = vmatpush2.bf16.msra.mxu0 %v1837
  %3512 = vmatprep.subr.bf16.mxu0 %v1830
  %3513 = vmatpush2.bf16.msra.mxu0 %v1829
  %3514 = vmatprep.subr.bf16.mxu0 %v1822
  %3515 = vmatpush2.bf16.msra.mxu0 %v1821
  %3516 = vmatprep.subr.bf16.mxu0 %v1814
  %3517 = vmatpush2.bf16.msra.mxu0 %v1813
  %3518 = vmatprep.mubr.bf16.mxu0 %v3403
  %3519 = vmatmul.mubr.bf16.gmra.mxu0 %v3402
  %v3520 = vpop.f32.mrf.mxu0
  %v3521 = vadd.f32 0.0, %v3520
  %v3522 = vpop.f32.mrf.mxu0
  %v3523 = vadd.f32 0.0, %v3522
  %v3524 = vpop.f32.mrf.mxu0
  %v3525 = vpop.f32.mrf.mxu0
  %3526 = vdwg.mxu0
  %3527 = vmatprep.subr.bf16.mxu0 %v1808
  %3528 = vmatpush1.bf16.msra.mxu0 %v1807
  %3529 = vmatprep.subr.bf16.mxu0 %v1800
  %3530 = vmatpush1.bf16.msra.mxu0 %v1799
  %3531 = vmatprep.subr.bf16.mxu0 %v1792
  %3532 = vmatpush1.bf16.msra.mxu0 %v1791
  %3533 = vmatprep.subr.bf16.mxu0 %v1784
  %3534 = vmatpush1.bf16.msra.mxu0 %v1783
  %3535 = vmatprep.subr.bf16.mxu0 %v1776
  %3536 = vmatpush1.bf16.msra.mxu0 %v1775
  %3537 = vmatprep.subr.bf16.mxu0 %v1768
  %3538 = vmatpush1.bf16.msra.mxu0 %v1767
  %3539 = vmatprep.subr.bf16.mxu0 %v1760
  %3540 = vmatpush1.bf16.msra.mxu0 %v1759
  %3541 = vmatprep.subr.bf16.mxu0 %v1752
  %3542 = vmatpush1.bf16.msra.mxu0 %v1751
  %3543 = vmatprep.subr.bf16.mxu0 %v1872
  %3544 = vmatpush2.bf16.msra.mxu0 %v1871
  %3545 = vmatprep.subr.bf16.mxu0 %v1864
  %3546 = vmatpush2.bf16.msra.mxu0 %v1863
  %3547 = vmatprep.subr.bf16.mxu0 %v1856
  %3548 = vmatpush2.bf16.msra.mxu0 %v1855
  %3549 = vmatprep.subr.bf16.mxu0 %v1848
  %3550 = vmatpush2.bf16.msra.mxu0 %v1847
  %3551 = vmatprep.subr.bf16.mxu0 %v1840
  %3552 = vmatpush2.bf16.msra.mxu0 %v1839
  %3553 = vmatprep.subr.bf16.mxu0 %v1832
  %3554 = vmatpush2.bf16.msra.mxu0 %v1831
  %3555 = vmatprep.subr.bf16.mxu0 %v1824
  %3556 = vmatpush2.bf16.msra.mxu0 %v1823
  %3557 = vmatprep.subr.bf16.mxu0 %v1816
  %3558 = vmatpush2.bf16.msra.mxu0 %v1815
  %3559 = vmatprep.mubr.bf16.mxu0 %v3403
  %3560 = vmatmul.mubr.bf16.gmra.mxu0 %v3402
  %v3561 = vpop.f32.mrf.mxu0
  %v3562 = vadd.f32 0.0, %v3561
  %v3563 = vpop.f32.mrf.mxu0
  %v3564 = vadd.f32 0.0, %v3563
  %v3565 = vpop.f32.mrf.mxu0
  %v3566 = vpop.f32.mrf.mxu0
  %3567 = vdwg.mxu0
  %v3568 = vadd.f32 %v3394, %v3439
  %v3569 = vadd.f32 %v3395, %v3441
  %v3570 = vadd.f32 %v3396, %v3480
  %v3571 = vadd.f32 %v3397, %v3482
  %v3572 = vadd.f32 %v3398, %v3521
  %v3573 = vadd.f32 %v3399, %v3523
  %v3574 = vadd.f32 %v3400, %v3562
  %v3575 = vadd.f32 %v3401, %v3564
  %v3576 = vxor.u32 %v3568, 2147483648
  %v3577 = vxor.u32 %v3569, 2147483648
  %v3578 = vmul.f32 %v3576, 1.442695
  %v3579 = vpow.pop %v3578
  %v3580 = vmul.f32 %v3577, 1.442695
  %v3581 = vpow.pop %v3580
  %v3582 = vadd.f32 %v3579, 1.0
  %v3583 = vadd.f32 %v3581, 1.0
  %v3584 = vrcp.pop %v3582
  %v3585 = vmul.f32 1.0, %v3584
  %v3586 = vrcp.pop %v3583
  %v3587 = vmul.f32 1.0, %v3586
  %v3588 = vxor.u32 %v3570, 2147483648
  %v3589 = vxor.u32 %v3571, 2147483648
  %v3590 = vmul.f32 %v3588, 1.442695
  %v3591 = vpow.pop %v3590
  %v3592 = vmul.f32 %v3589, 1.442695
  %v3593 = vpow.pop %v3592
  %v3594 = vadd.f32 %v3591, 1.0
  %v3595 = vadd.f32 %v3593, 1.0
  %v3596 = vrcp.pop %v3594
  %v3597 = vmul.f32 1.0, %v3596
  %v3598 = vrcp.pop %v3595
  %v3599 = vmul.f32 1.0, %v3598
  %v3600 = vtanh.pop %v3572
  %v3601 = vtanh.pop %v3573
  %v3602 = vxor.u32 %v3574, 2147483648
  %v3603 = vxor.u32 %v3575, 2147483648
  %v3604 = vmul.f32 %v3602, 1.442695
  %v3605 = vpow.pop %v3604
  %v3606 = vmul.f32 %v3603, 1.442695
  %v3607 = vpow.pop %v3606
  %v3608 = vadd.f32 %v3605, 1.0
  %v3609 = vadd.f32 %v3607, 1.0
  %v3610 = vrcp.pop %v3608
  %v3611 = vmul.f32 1.0, %v3610
  %v3612 = vrcp.pop %v3609
  %v3613 = vmul.f32 1.0, %v3612
  %v3614 = vmul.f32 %v3597, %v3384
  %v3615 = vmul.f32 %v3599, %v3385
  %v3616 = vmul.f32 %v3585, %v3600
  %v3617 = vmul.f32 %v3587, %v3601
  %v3618 = vadd.f32 %v3614, %v3616
  %v3619 = vadd.f32 %v3615, %v3617
  %v3620 = vtanh.pop %v3618
  %v3621 = vtanh.pop %v3619
  %v3622 = vmul.f32 %v3611, %v3620
  %v3623 = vmul.f32 %v3613, %v3621
  %s3624 = scalar_lea.vmem [#allocation3], 96
  %3625 = vst [vmem:[%s3624] sm:$0xff] %v3622
  %3626 = vst [vmem:[%s3624 + $0x8] sm:$0xff] %v3623
  %s3627 = scalar_lea.vmem [#allocation2], 448
  %v3628 = vld [vmem:[%s3627] sm:$0xff]
  %v3629 = vld [vmem:[%s3627 + $0x8] sm:$0xff]
  %v3630 = vld [vmem:[%s3627 + $0x10] sm:$0xff]
  %v3631 = vld [vmem:[%s3627 + $0x18] sm:$0xff]
  %v3632 = vld [vmem:[%s3627 + $0x20] sm:$0xff]
  %v3633 = vld [vmem:[%s3627 + $0x28] sm:$0xff]
  %v3634 = vld [vmem:[%s3627 + $0x30] sm:$0xff]
  %v3635 = vld [vmem:[%s3627 + $0x38] sm:$0xff]
  %v3636 = vpack.c.bf16 %v3622, %v3622
  %v3637 = vpack.c.bf16 %v3623, %v3623
  %3638 = vmatprep.subr.bf16.mxu0 %v1802
  %3639 = vmatpush1.bf16.msra.mxu0 %v1801
  %3640 = vmatprep.subr.bf16.mxu0 %v1794
  %3641 = vmatpush1.bf16.msra.mxu0 %v1793
  %3642 = vmatprep.subr.bf16.mxu0 %v1786
  %3643 = vmatpush1.bf16.msra.mxu0 %v1785
  %3644 = vmatprep.subr.bf16.mxu0 %v1778
  %3645 = vmatpush1.bf16.msra.mxu0 %v1777
  %3646 = vmatprep.subr.bf16.mxu0 %v1770
  %3647 = vmatpush1.bf16.msra.mxu0 %v1769
  %3648 = vmatprep.subr.bf16.mxu0 %v1762
  %3649 = vmatpush1.bf16.msra.mxu0 %v1761
  %3650 = vmatprep.subr.bf16.mxu0 %v1754
  %3651 = vmatpush1.bf16.msra.mxu0 %v1753
  %3652 = vmatprep.subr.bf16.mxu0 %v1746
  %3653 = vmatpush1.bf16.msra.mxu0 %v1745
  %3654 = vmatprep.subr.bf16.mxu0 %v1866
  %3655 = vmatpush2.bf16.msra.mxu0 %v1865
  %3656 = vmatprep.subr.bf16.mxu0 %v1858
  %3657 = vmatpush2.bf16.msra.mxu0 %v1857
  %3658 = vmatprep.subr.bf16.mxu0 %v1850
  %3659 = vmatpush2.bf16.msra.mxu0 %v1849
  %3660 = vmatprep.subr.bf16.mxu0 %v1842
  %3661 = vmatpush2.bf16.msra.mxu0 %v1841
  %3662 = vmatprep.subr.bf16.mxu0 %v1834
  %3663 = vmatpush2.bf16.msra.mxu0 %v1833
  %3664 = vmatprep.subr.bf16.mxu0 %v1826
  %3665 = vmatpush2.bf16.msra.mxu0 %v1825
  %3666 = vmatprep.subr.bf16.mxu0 %v1818
  %3667 = vmatpush2.bf16.msra.mxu0 %v1817
  %3668 = vmatprep.subr.bf16.mxu0 %v1810
  %3669 = vmatpush2.bf16.msra.mxu0 %v1809
  %3670 = vmatprep.mubr.bf16.mxu0 %v3637
  %3671 = vmatmul.mubr.bf16.gmra.mxu0 %v3636
  %v3672 = vpop.f32.mrf.mxu0
  %v3673 = vadd.f32 0.0, %v3672
  %v3674 = vpop.f32.mrf.mxu0
  %v3675 = vadd.f32 0.0, %v3674
  %v3676 = vpop.f32.mrf.mxu0
  %v3677 = vpop.f32.mrf.mxu0
  %3678 = vdwg.mxu0
  %3679 = vmatprep.subr.bf16.mxu0 %v1804
  %3680 = vmatpush1.bf16.msra.mxu0 %v1803
  %3681 = vmatprep.subr.bf16.mxu0 %v1796
  %3682 = vmatpush1.bf16.msra.mxu0 %v1795
  %3683 = vmatprep.subr.bf16.mxu0 %v1788
  %3684 = vmatpush1.bf16.msra.mxu0 %v1787
  %3685 = vmatprep.subr.bf16.mxu0 %v1780
  %3686 = vmatpush1.bf16.msra.mxu0 %v1779
  %3687 = vmatprep.subr.bf16.mxu0 %v1772
  %3688 = vmatpush1.bf16.msra.mxu0 %v1771
  %3689 = vmatprep.subr.bf16.mxu0 %v1764
  %3690 = vmatpush1.bf16.msra.mxu0 %v1763
  %3691 = vmatprep.subr.bf16.mxu0 %v1756
  %3692 = vmatpush1.bf16.msra.mxu0 %v1755
  %3693 = vmatprep.subr.bf16.mxu0 %v1748
  %3694 = vmatpush1.bf16.msra.mxu0 %v1747
  %3695 = vmatprep.subr.bf16.mxu0 %v1868
  %3696 = vmatpush2.bf16.msra.mxu0 %v1867
  %3697 = vmatprep.subr.bf16.mxu0 %v1860
  %3698 = vmatpush2.bf16.msra.mxu0 %v1859
  %3699 = vmatprep.subr.bf16.mxu0 %v1852
  %3700 = vmatpush2.bf16.msra.mxu0 %v1851
  %3701 = vmatprep.subr.bf16.mxu0 %v1844
  %3702 = vmatpush2.bf16.msra.mxu0 %v1843
  %3703 = vmatprep.subr.bf16.mxu0 %v1836
  %3704 = vmatpush2.bf16.msra.mxu0 %v1835
  %3705 = vmatprep.subr.bf16.mxu0 %v1828
  %3706 = vmatpush2.bf16.msra.mxu0 %v1827
  %3707 = vmatprep.subr.bf16.mxu0 %v1820
  %3708 = vmatpush2.bf16.msra.mxu0 %v1819
  %3709 = vmatprep.subr.bf16.mxu0 %v1812
  %3710 = vmatpush2.bf16.msra.mxu0 %v1811
  %3711 = vmatprep.mubr.bf16.mxu0 %v3637
  %3712 = vmatmul.mubr.bf16.gmra.mxu0 %v3636
  %v3713 = vpop.f32.mrf.mxu0
  %v3714 = vadd.f32 0.0, %v3713
  %v3715 = vpop.f32.mrf.mxu0
  %v3716 = vadd.f32 0.0, %v3715
  %v3717 = vpop.f32.mrf.mxu0
  %v3718 = vpop.f32.mrf.mxu0
  %3719 = vdwg.mxu0
  %3720 = vmatprep.subr.bf16.mxu0 %v1806
  %3721 = vmatpush1.bf16.msra.mxu0 %v1805
  %3722 = vmatprep.subr.bf16.mxu0 %v1798
  %3723 = vmatpush1.bf16.msra.mxu0 %v1797
  %3724 = vmatprep.subr.bf16.mxu0 %v1790
  %3725 = vmatpush1.bf16.msra.mxu0 %v1789
  %3726 = vmatprep.subr.bf16.mxu0 %v1782
  %3727 = vmatpush1.bf16.msra.mxu0 %v1781
  %3728 = vmatprep.subr.bf16.mxu0 %v1774
  %3729 = vmatpush1.bf16.msra.mxu0 %v1773
  %3730 = vmatprep.subr.bf16.mxu0 %v1766
  %3731 = vmatpush1.bf16.msra.mxu0 %v1765
  %3732 = vmatprep.subr.bf16.mxu0 %v1758
  %3733 = vmatpush1.bf16.msra.mxu0 %v1757
  %3734 = vmatprep.subr.bf16.mxu0 %v1750
  %3735 = vmatpush1.bf16.msra.mxu0 %v1749
  %3736 = vmatprep.subr.bf16.mxu0 %v1870
  %3737 = vmatpush2.bf16.msra.mxu0 %v1869
  %3738 = vmatprep.subr.bf16.mxu0 %v1862
  %3739 = vmatpush2.bf16.msra.mxu0 %v1861
  %3740 = vmatprep.subr.bf16.mxu0 %v1854
  %3741 = vmatpush2.bf16.msra.mxu0 %v1853
  %3742 = vmatprep.subr.bf16.mxu0 %v1846
  %3743 = vmatpush2.bf16.msra.mxu0 %v1845
  %3744 = vmatprep.subr.bf16.mxu0 %v1838
  %3745 = vmatpush2.bf16.msra.mxu0 %v1837
  %3746 = vmatprep.subr.bf16.mxu0 %v1830
  %3747 = vmatpush2.bf16.msra.mxu0 %v1829
  %3748 = vmatprep.subr.bf16.mxu0 %v1822
  %3749 = vmatpush2.bf16.msra.mxu0 %v1821
  %3750 = vmatprep.subr.bf16.mxu0 %v1814
  %3751 = vmatpush2.bf16.msra.mxu0 %v1813
  %3752 = vmatprep.mubr.bf16.mxu0 %v3637
  %3753 = vmatmul.mubr.bf16.gmra.mxu0 %v3636
  %v3754 = vpop.f32.mrf.mxu0
  %v3755 = vadd.f32 0.0, %v3754
  %v3756 = vpop.f32.mrf.mxu0
  %v3757 = vadd.f32 0.0, %v3756
  %v3758 = vpop.f32.mrf.mxu0
  %v3759 = vpop.f32.mrf.mxu0
  %3760 = vdwg.mxu0
  %3761 = vmatprep.subr.bf16.mxu0 %v1808
  %3762 = vmatpush1.bf16.msra.mxu0 %v1807
  %3763 = vmatprep.subr.bf16.mxu0 %v1800
  %3764 = vmatpush1.bf16.msra.mxu0 %v1799
  %3765 = vmatprep.subr.bf16.mxu0 %v1792
  %3766 = vmatpush1.bf16.msra.mxu0 %v1791
  %3767 = vmatprep.subr.bf16.mxu0 %v1784
  %3768 = vmatpush1.bf16.msra.mxu0 %v1783
  %3769 = vmatprep.subr.bf16.mxu0 %v1776
  %3770 = vmatpush1.bf16.msra.mxu0 %v1775
  %3771 = vmatprep.subr.bf16.mxu0 %v1768
  %3772 = vmatpush1.bf16.msra.mxu0 %v1767
  %3773 = vmatprep.subr.bf16.mxu0 %v1760
  %3774 = vmatpush1.bf16.msra.mxu0 %v1759
  %3775 = vmatprep.subr.bf16.mxu0 %v1752
  %3776 = vmatpush1.bf16.msra.mxu0 %v1751
  %3777 = vmatprep.subr.bf16.mxu0 %v1872
  %3778 = vmatpush2.bf16.msra.mxu0 %v1871
  %3779 = vmatprep.subr.bf16.mxu0 %v1864
  %3780 = vmatpush2.bf16.msra.mxu0 %v1863
  %3781 = vmatprep.subr.bf16.mxu0 %v1856
  %3782 = vmatpush2.bf16.msra.mxu0 %v1855
  %3783 = vmatprep.subr.bf16.mxu0 %v1848
  %3784 = vmatpush2.bf16.msra.mxu0 %v1847
  %3785 = vmatprep.subr.bf16.mxu0 %v1840
  %3786 = vmatpush2.bf16.msra.mxu0 %v1839
  %3787 = vmatprep.subr.bf16.mxu0 %v1832
  %3788 = vmatpush2.bf16.msra.mxu0 %v1831
  %3789 = vmatprep.subr.bf16.mxu0 %v1824
  %3790 = vmatpush2.bf16.msra.mxu0 %v1823
  %3791 = vmatprep.subr.bf16.mxu0 %v1816
  %3792 = vmatpush2.bf16.msra.mxu0 %v1815
  %3793 = vmatprep.mubr.bf16.mxu0 %v3637
  %3794 = vmatmul.mubr.bf16.gmra.mxu0 %v3636
  %v3795 = vpop.f32.mrf.mxu0
  %v3796 = vadd.f32 0.0, %v3795
  %v3797 = vpop.f32.mrf.mxu0
  %v3798 = vadd.f32 0.0, %v3797
  %v3799 = vpop.f32.mrf.mxu0
  %v3800 = vpop.f32.mrf.mxu0
  %3801 = vdwg.mxu0
  %v3802 = vadd.f32 %v3628, %v3673
  %v3803 = vadd.f32 %v3629, %v3675
  %v3804 = vadd.f32 %v3630, %v3714
  %v3805 = vadd.f32 %v3631, %v3716
  %v3806 = vadd.f32 %v3632, %v3755
  %v3807 = vadd.f32 %v3633, %v3757
  %v3808 = vadd.f32 %v3634, %v3796
  %v3809 = vadd.f32 %v3635, %v3798
  %v3810 = vxor.u32 %v3802, 2147483648
  %v3811 = vxor.u32 %v3803, 2147483648
  %v3812 = vmul.f32 %v3810, 1.442695
  %v3813 = vpow.pop %v3812
  %v3814 = vmul.f32 %v3811, 1.442695
  %v3815 = vpow.pop %v3814
  %v3816 = vadd.f32 %v3813, 1.0
  %v3817 = vadd.f32 %v3815, 1.0
  %v3818 = vrcp.pop %v3816
  %v3819 = vmul.f32 1.0, %v3818
  %v3820 = vrcp.pop %v3817
  %v3821 = vmul.f32 1.0, %v3820
  %v3822 = vxor.u32 %v3804, 2147483648
  %v3823 = vxor.u32 %v3805, 2147483648
  %v3824 = vmul.f32 %v3822, 1.442695
  %v3825 = vpow.pop %v3824
  %v3826 = vmul.f32 %v3823, 1.442695
  %v3827 = vpow.pop %v3826
  %v3828 = vadd.f32 %v3825, 1.0
  %v3829 = vadd.f32 %v3827, 1.0
  %v3830 = vrcp.pop %v3828
  %v3831 = vmul.f32 1.0, %v3830
  %v3832 = vrcp.pop %v3829
  %v3833 = vmul.f32 1.0, %v3832
  %v3834 = vtanh.pop %v3806
  %v3835 = vtanh.pop %v3807
  %v3836 = vxor.u32 %v3808, 2147483648
  %v3837 = vxor.u32 %v3809, 2147483648
  %v3838 = vmul.f32 %v3836, 1.442695
  %v3839 = vpow.pop %v3838
  %v3840 = vmul.f32 %v3837, 1.442695
  %v3841 = vpow.pop %v3840
  %v3842 = vadd.f32 %v3839, 1.0
  %v3843 = vadd.f32 %v3841, 1.0
  %v3844 = vrcp.pop %v3842
  %v3845 = vmul.f32 1.0, %v3844
  %v3846 = vrcp.pop %v3843
  %v3847 = vmul.f32 1.0, %v3846
  %v3848 = vmul.f32 %v3831, %v3618
  %v3849 = vmul.f32 %v3833, %v3619
  %v3850 = vmul.f32 %v3819, %v3834
  %v3851 = vmul.f32 %v3821, %v3835
  %v3852 = vadd.f32 %v3848, %v3850
  %v3853 = vadd.f32 %v3849, %v3851
  %v3854 = vtanh.pop %v3852
  %v3855 = vtanh.pop %v3853
  %v3856 = vmul.f32 %v3845, %v3854
  %v3857 = vmul.f32 %v3847, %v3855
  %s3858 = scalar_lea.vmem [#allocation3], 112
  %3859 = vst [vmem:[%s3858] sm:$0xff] %v3856
  %3860 = vst [vmem:[%s3858 + $0x8] sm:$0xff] %v3857
  %v3861 = vld [vmem:[#allocation3] sm:$0xff]
  %v3862 = vld [vmem:[#allocation3 + $0x8] sm:$0xff]
  %v3863 = vld [vmem:[#allocation3 + $0x10] sm:$0xff]
  %v3864 = vld [vmem:[#allocation3 + $0x18] sm:$0xff]
  %v3865 = vld [vmem:[#allocation3 + $0x20] sm:$0xff]
  %v3866 = vld [vmem:[#allocation3 + $0x28] sm:$0xff]
  %v3867 = vld [vmem:[#allocation3 + $0x30] sm:$0xff]
  %v3868 = vld [vmem:[#allocation3 + $0x38] sm:$0xff]
  %v3869 = vld [vmem:[#allocation3 + $0x40] sm:$0xff]
  %v3870 = vld [vmem:[#allocation3 + $0x48] sm:$0xff]
  %v3871 = vld [vmem:[#allocation3 + $0x50] sm:$0xff]
  %v3872 = vld [vmem:[#allocation3 + $0x58] sm:$0xff]
  %v3873 = vld [vmem:[#allocation3 + $0x60] sm:$0xff]
  %v3874 = vld [vmem:[#allocation3 + $0x68] sm:$0xff]
  %v3875 = vld [vmem:[#allocation3 + $0x70] sm:$0xff]
  %v3876 = vld [vmem:[#allocation3 + $0x78] sm:$0xff]
  %v3877 = vld [vmem:[%s6] sm:$0xff]
  %v3878 = vld [vmem:[%s6 + $0x8] sm:$0xff]
  %v3879 = vld [vmem:[%s6 + $0x10] sm:$0xff]
  %v3880 = vld [vmem:[%s6 + $0x18] sm:$0xff]
  %v3881 = vld [vmem:[%s6 + $0x20] sm:$0xff]
  %v3882 = vld [vmem:[%s6 + $0x28] sm:$0xff]
  %v3883 = vld [vmem:[%s6 + $0x30] sm:$0xff]
  %v3884 = vld [vmem:[%s6 + $0x38] sm:$0xff]
  %v3885 = vld [vmem:[%s6 + $0x40] sm:$0xff]
  %v3886 = vld [vmem:[%s6 + $0x48] sm:$0xff]
  %v3887 = vld [vmem:[%s6 + $0x50] sm:$0xff]
  %v3888 = vld [vmem:[%s6 + $0x58] sm:$0xff]
  %v3889 = vld [vmem:[%s6 + $0x60] sm:$0xff]
  %v3890 = vld [vmem:[%s6 + $0x68] sm:$0xff]
  %v3891 = vld [vmem:[%s6 + $0x70] sm:$0xff]
  %v3892 = vld [vmem:[%s6 + $0x78] sm:$0xff]
  %v3893 = vld [vmem:[%s6 + $0x80] sm:$0xff]
  %v3894 = vld [vmem:[%s6 + $0x88] sm:$0xff]
  %v3895 = vld [vmem:[%s6 + $0x90] sm:$0xff]
  %v3896 = vld [vmem:[%s6 + $0x98] sm:$0xff]
  %v3897 = vld [vmem:[%s6 + $0xa0] sm:$0xff]
  %v3898 = vld [vmem:[%s6 + $0xa8] sm:$0xff]
  %v3899 = vld [vmem:[%s6 + $0xb0] sm:$0xff]
  %v3900 = vld [vmem:[%s6 + $0xb8] sm:$0xff]
  %v3901 = vld [vmem:[%s6 + $0xc0] sm:$0xff]
  %v3902 = vld [vmem:[%s6 + $0xc8] sm:$0xff]
  %v3903 = vld [vmem:[%s6 + $0xd0] sm:$0xff]
  %v3904 = vld [vmem:[%s6 + $0xd8] sm:$0xff]
  %v3905 = vld [vmem:[%s6 + $0xe0] sm:$0xff]
  %v3906 = vld [vmem:[%s6 + $0xe8] sm:$0xff]
  %v3907 = vld [vmem:[%s6 + $0xf0] sm:$0xff]
  %v3908 = vld [vmem:[%s6 + $0xf8] sm:$0xff]
  %v3909 = vld [vmem:[%s7] sm:$0x1]
  %v3911 = vlaneseq
  %v3912 = vshrl.u32 %v3911, 7
  %v3913 = vsub.s32 0, %v3912
  %v3914 = vrot.slane %v3909, %v3913
  %3916 = vmatprep.subr.mxu0 0.0
  %3917 = vmatpush1.msra.mxu0 %v3892
  %3918 = vmatprep.subr.mxu0 0.0
  %3919 = vmatpush1.msra.mxu0 %v3891
  %3920 = vmatprep.subr.mxu0 0.0
  %3921 = vmatpush1.msra.mxu0 %v3890
  %3922 = vmatprep.subr.mxu0 0.0
  %3923 = vmatpush1.msra.mxu0 %v3889
  %3924 = vmatprep.subr.mxu0 0.0
  %3925 = vmatpush1.msra.mxu0 %v3888
  %3926 = vmatprep.subr.mxu0 0.0
  %3927 = vmatpush1.msra.mxu0 %v3887
  %3928 = vmatprep.subr.mxu0 0.0
  %3929 = vmatpush1.msra.mxu0 %v3886
  %3930 = vmatprep.subr.mxu0 0.0
  %3931 = vmatpush1.msra.mxu0 %v3885
  %3932 = vmatprep.subr.mxu0 0.0
  %3933 = vmatpush1.msra.mxu0 %v3884
  %3934 = vmatprep.subr.mxu0 0.0
  %3935 = vmatpush1.msra.mxu0 %v3883
  %3936 = vmatprep.subr.mxu0 0.0
  %3937 = vmatpush1.msra.mxu0 %v3882
  %3938 = vmatprep.subr.mxu0 0.0
  %3939 = vmatpush1.msra.mxu0 %v3881
  %3940 = vmatprep.subr.mxu0 0.0
  %3941 = vmatpush1.msra.mxu0 %v3880
  %3942 = vmatprep.subr.mxu0 0.0
  %3943 = vmatpush1.msra.mxu0 %v3879
  %3944 = vmatprep.subr.mxu0 0.0
  %3945 = vmatpush1.msra.mxu0 %v3878
  %3946 = vmatprep.subr.mxu0 0.0
  %3947 = vmatpush1.msra.mxu0 %v3877
  %3948 = vmatprep.subr.mxu0 0.0
  %3949 = vmatpush2.msra.mxu0 %v3908
  %3950 = vmatprep.subr.mxu0 0.0
  %3951 = vmatpush2.msra.mxu0 %v3907
  %3952 = vmatprep.subr.mxu0 0.0
  %3953 = vmatpush2.msra.mxu0 %v3906
  %3954 = vmatprep.subr.mxu0 0.0
  %3955 = vmatpush2.msra.mxu0 %v3905
  %3956 = vmatprep.subr.mxu0 0.0
  %3957 = vmatpush2.msra.mxu0 %v3904
  %3958 = vmatprep.subr.mxu0 0.0
  %3959 = vmatpush2.msra.mxu0 %v3903
  %3960 = vmatprep.subr.mxu0 0.0
  %3961 = vmatpush2.msra.mxu0 %v3902
  %3962 = vmatprep.subr.mxu0 0.0
  %3963 = vmatpush2.msra.mxu0 %v3901
  %3964 = vmatprep.subr.mxu0 0.0
  %3965 = vmatpush2.msra.mxu0 %v3900
  %3966 = vmatprep.subr.mxu0 0.0
  %3967 = vmatpush2.msra.mxu0 %v3899
  %3968 = vmatprep.subr.mxu0 0.0
  %3969 = vmatpush2.msra.mxu0 %v3898
  %3970 = vmatprep.subr.mxu0 0.0
  %3971 = vmatpush2.msra.mxu0 %v3897
  %3972 = vmatprep.subr.mxu0 0.0
  %3973 = vmatpush2.msra.mxu0 %v3896
  %3974 = vmatprep.subr.mxu0 0.0
  %3975 = vmatpush2.msra.mxu0 %v3895
  %3976 = vmatprep.subr.mxu0 0.0
  %3977 = vmatpush2.msra.mxu0 %v3894
  %3978 = vmatprep.subr.mxu0 0.0
  %3979 = vmatpush2.msra.mxu0 %v3893
  %3980 = vmatprep.mubr.f32.mxu0 %v3862
  %3981 = vmatmul.mubr.f32.gmra.mxu0 %v3861
  %v3982 = vpop.f32.mrf.mxu0
  %v3983 = vadd.f32 %v3914, %v3982
  %v3984 = vpop.f32.mrf.mxu0
  %3985 = vmatprep.mubr.f32.mxu0 %v3864
  %3986 = vmatmul.mubr.f32.gmra.mxu0 %v3863
  %v3987 = vpop.f32.mrf.mxu0
  %v3988 = vadd.f32 %v3914, %v3987
  %v3989 = vpop.f32.mrf.mxu0
  %3990 = vmatprep.mubr.f32.mxu0 %v3866
  %3991 = vmatmul.mubr.f32.gmra.mxu0 %v3865
  %v3992 = vpop.f32.mrf.mxu0
  %v3993 = vadd.f32 %v3914, %v3992
  %v3994 = vpop.f32.mrf.mxu0
  %3995 = vmatprep.mubr.f32.mxu0 %v3868
  %3996 = vmatmul.mubr.f32.gmra.mxu0 %v3867
  %v3997 = vpop.f32.mrf.mxu0
  %v3998 = vadd.f32 %v3914, %v3997
  %v3999 = vpop.f32.mrf.mxu0
  %4000 = vmatprep.mubr.f32.mxu0 %v3870
  %4001 = vmatmul.mubr.f32.gmra.mxu0 %v3869
  %v4002 = vpop.f32.mrf.mxu0
  %v4003 = vadd.f32 %v3914, %v4002
  %v4004 = vpop.f32.mrf.mxu0
  %4005 = vmatprep.mubr.f32.mxu0 %v3872
  %4006 = vmatmul.mubr.f32.gmra.mxu0 %v3871
  %v4007 = vpop.f32.mrf.mxu0
  %v4008 = vadd.f32 %v3914, %v4007
  %v4009 = vpop.f32.mrf.mxu0
  %4010 = vmatprep.mubr.f32.mxu0 %v3874
  %4011 = vmatmul.mubr.f32.gmra.mxu0 %v3873
  %v4012 = vpop.f32.mrf.mxu0
  %v4013 = vadd.f32 %v3914, %v4012
  %v4014 = vpop.f32.mrf.mxu0
  %4015 = vmatprep.mubr.f32.mxu0 %v3876
  %4016 = vmatmul.mubr.f32.gmra.mxu0 %v3875
  %v4017 = vpop.f32.mrf.mxu0
  %v4018 = vadd.f32 %v3914, %v4017
  %v4019 = vpop.f32.mrf.mxu0
  %4020 = vdwg.mxu0
  %v4021 = vlaneseq
  %v4022 = vshrl.u32 %v4021, 7
  %vm4023 = vcmp.lt.s32.totalorder %v4022, 2
  %v4024 = vsel %vm4023, %v3983, -1e+30
  %v4025 = vsel %vm4023, %v3988, -1e+30
  %v4026 = vsel %vm4023, %v3993, -1e+30
  %v4027 = vsel %vm4023, %v3998, -1e+30
  %v4028 = vsel %vm4023, %v4003, -1e+30
  %v4029 = vsel %vm4023, %v4008, -1e+30
  %v4030 = vsel %vm4023, %v4013, -1e+30
  %v4031 = vsel %vm4023, %v4018, -1e+30
  %v4032 = vrot.slane %v4024, 4
  %v4033 = vmax.f32 %v4024, %v4032
  %v4034 = vrot.slane %v4033, 2
  %v4035 = vmax.f32 %v4033, %v4034
  %v4036 = vrot.slane %v4035, 1
  %v4037 = vmax.f32 %v4035, %v4036
  %v4038 = vrot.slane %v4025, 4
  %v4039 = vmax.f32 %v4025, %v4038
  %v4040 = vrot.slane %v4039, 2
  %v4041 = vmax.f32 %v4039, %v4040
  %v4042 = vrot.slane %v4041, 1
  %v4043 = vmax.f32 %v4041, %v4042
  %v4044 = vrot.slane %v4026, 4
  %v4045 = vmax.f32 %v4026, %v4044
  %v4046 = vrot.slane %v4045, 2
  %v4047 = vmax.f32 %v4045, %v4046
  %v4048 = vrot.slane %v4047, 1
  %v4049 = vmax.f32 %v4047, %v4048
  %v4050 = vrot.slane %v4027, 4
  %v4051 = vmax.f32 %v4027, %v4050
  %v4052 = vrot.slane %v4051, 2
  %v4053 = vmax.f32 %v4051, %v4052
  %v4054 = vrot.slane %v4053, 1
  %v4055 = vmax.f32 %v4053, %v4054
  %v4056 = vrot.slane %v4028, 4
  %v4057 = vmax.f32 %v4028, %v4056
  %v4058 = vrot.slane %v4057, 2
  %v4059 = vmax.f32 %v4057, %v4058
  %v4060 = vrot.slane %v4059, 1
  %v4061 = vmax.f32 %v4059, %v4060
  %v4062 = vrot.slane %v4029, 4
  %v4063 = vmax.f32 %v4029, %v4062
  %v4064 = vrot.slane %v4063, 2
  %v4065 = vmax.f32 %v4063, %v4064
  %v4066 = vrot.slane %v4065, 1
  %v4067 = vmax.f32 %v4065, %v4066
  %v4068 = vrot.slane %v4030, 4
  %v4069 = vmax.f32 %v4030, %v4068
  %v4070 = vrot.slane %v4069, 2
  %v4071 = vmax.f32 %v4069, %v4070
  %v4072 = vrot.slane %v4071, 1
  %v4073 = vmax.f32 %v4071, %v4072
  %v4074 = vrot.slane %v4031, 4
  %v4075 = vmax.f32 %v4031, %v4074
  %v4076 = vrot.slane %v4075, 2
  %v4077 = vmax.f32 %v4075, %v4076
  %v4078 = vrot.slane %v4077, 1
  %v4079 = vmax.f32 %v4077, %v4078
  %v4080 = vsub.f32 %v4024, %v4037
  %v4081 = vsub.f32 %v4025, %v4043
  %v4082 = vsub.f32 %v4026, %v4049
  %v4083 = vsub.f32 %v4027, %v4055
  %v4084 = vsub.f32 %v4028, %v4061
  %v4085 = vsub.f32 %v4029, %v4067
  %v4086 = vsub.f32 %v4030, %v4073
  %v4087 = vsub.f32 %v4031, %v4079
  %v4088 = vmul.f32 %v4080, 1.442695
  %v4089 = vpow.pop %v4088
  %v4090 = vmul.f32 %v4081, 1.442695
  %v4091 = vpow.pop %v4090
  %v4092 = vmul.f32 %v4082, 1.442695
  %v4093 = vpow.pop %v4092
  %v4094 = vmul.f32 %v4083, 1.442695
  %v4095 = vpow.pop %v4094
  %v4096 = vmul.f32 %v4084, 1.442695
  %v4097 = vpow.pop %v4096
  %v4098 = vmul.f32 %v4085, 1.442695
  %v4099 = vpow.pop %v4098
  %v4100 = vmul.f32 %v4086, 1.442695
  %v4101 = vpow.pop %v4100
  %v4102 = vmul.f32 %v4087, 1.442695
  %v4103 = vpow.pop %v4102
  %v4104 = vsel %vm4023, %v4089, 0.0
  %v4105 = vsel %vm4023, %v4091, 0.0
  %v4106 = vsel %vm4023, %v4093, 0.0
  %v4107 = vsel %vm4023, %v4095, 0.0
  %v4108 = vsel %vm4023, %v4097, 0.0
  %v4109 = vsel %vm4023, %v4099, 0.0
  %v4110 = vsel %vm4023, %v4101, 0.0
  %v4111 = vsel %vm4023, %v4103, 0.0
  %v4112 = vrot.slane %v4104, 4
  %v4113 = vadd.f32 %v4104, %v4112
  %v4114 = vrot.slane %v4113, 2
  %v4115 = vadd.f32 %v4113, %v4114
  %v4116 = vrot.slane %v4115, 1
  %v4117 = vadd.f32 %v4115, %v4116
  %v4118 = vrot.slane %v4105, 4
  %v4119 = vadd.f32 %v4105, %v4118
  %v4120 = vrot.slane %v4119, 2
  %v4121 = vadd.f32 %v4119, %v4120
  %v4122 = vrot.slane %v4121, 1
  %v4123 = vadd.f32 %v4121, %v4122
  %v4124 = vrot.slane %v4106, 4
  %v4125 = vadd.f32 %v4106, %v4124
  %v4126 = vrot.slane %v4125, 2
  %v4127 = vadd.f32 %v4125, %v4126
  %v4128 = vrot.slane %v4127, 1
  %v4129 = vadd.f32 %v4127, %v4128
  %v4130 = vrot.slane %v4107, 4
  %v4131 = vadd.f32 %v4107, %v4130
  %v4132 = vrot.slane %v4131, 2
  %v4133 = vadd.f32 %v4131, %v4132
  %v4134 = vrot.slane %v4133, 1
  %v4135 = vadd.f32 %v4133, %v4134
  %v4136 = vrot.slane %v4108, 4
  %v4137 = vadd.f32 %v4108, %v4136
  %v4138 = vrot.slane %v4137, 2
  %v4139 = vadd.f32 %v4137, %v4138
  %v4140 = vrot.slane %v4139, 1
  %v4141 = vadd.f32 %v4139, %v4140
  %v4142 = vrot.slane %v4109, 4
  %v4143 = vadd.f32 %v4109, %v4142
  %v4144 = vrot.slane %v4143, 2
  %v4145 = vadd.f32 %v4143, %v4144
  %v4146 = vrot.slane %v4145, 1
  %v4147 = vadd.f32 %v4145, %v4146
  %v4148 = vrot.slane %v4110, 4
  %v4149 = vadd.f32 %v4110, %v4148
  %v4150 = vrot.slane %v4149, 2
  %v4151 = vadd.f32 %v4149, %v4150
  %v4152 = vrot.slane %v4151, 1
  %v4153 = vadd.f32 %v4151, %v4152
  %v4154 = vrot.slane %v4111, 4
  %v4155 = vadd.f32 %v4111, %v4154
  %v4156 = vrot.slane %v4155, 2
  %v4157 = vadd.f32 %v4155, %v4156
  %v4158 = vrot.slane %v4157, 1
  %v4159 = vadd.f32 %v4157, %v4158
  %v4160 = vrcp.pop %v4117
  %v4161 = vmul.f32 %v4104, %v4160
  %v4162 = vrcp.pop %v4123
  %v4163 = vmul.f32 %v4105, %v4162
  %v4164 = vrcp.pop %v4129
  %v4165 = vmul.f32 %v4106, %v4164
  %v4166 = vrcp.pop %v4135
  %v4167 = vmul.f32 %v4107, %v4166
  %v4168 = vrcp.pop %v4141
  %v4169 = vmul.f32 %v4108, %v4168
  %v4170 = vrcp.pop %v4147
  %v4171 = vmul.f32 %v4109, %v4170
  %v4172 = vrcp.pop %v4153
  %v4173 = vmul.f32 %v4110, %v4172
  %v4174 = vrcp.pop %v4159
  %v4175 = vmul.f32 %v4111, %v4174
  %4176 = vst [vmem:[%s8] sm:$0xff] %v4161
  %4177 = vst [vmem:[%s8 + $0x8] sm:$0xff] %v4163
  %4178 = vst [vmem:[%s8 + $0x10] sm:$0xff] %v4165
  %4179 = vst [vmem:[%s8 + $0x18] sm:$0xff] %v4167
  %4180 = vst [vmem:[%s8 + $0x20] sm:$0xff] %v4169
  %4181 = vst [vmem:[%s8 + $0x28] sm:$0xff] %v4171
  %4182 = vst [vmem:[%s8 + $0x30] sm:$0xff] %v4173
  %4183 = vst [vmem:[%s8 + $0x38] sm:$0xff] %v4175
  // Predicated region
  $region34: #{decoder_forward.1} parent=0 // pred_check
    _
  $region35: #{decoder_forward.1} parent=0 // pred_check_branch
    %4185 = sbr.rel (0) target = $region37
  $region36: #{decoder_forward.1} parent=0 // pred_region
    _
  $region37: #{decoder_forward.1} parent=0 // pred_fallthru
    _
  // Predicated region
  $region38: #{decoder_forward.1} parent=0 // pred_check
    _
  $region39: #{decoder_forward.1} parent=0 // pred_check_branch
    %4187 = sbr.rel (0) target = $region41
  $region40: #{decoder_forward.1} parent=0 // pred_region
    _
  $region41: #{decoder_forward.1} parent=0 // pred_fallthru
    _

</llo_original>
